<compile_context>
chip_gen: v7x
topology: tpu7x:2x2x1
jax: 0.10.0
libtpu: 0.0.40
codegen_flags: <defaults>
</compile_context>

<pallas_src>
import math
import functools

import numpy as np
import jax
import jax.numpy as jnp
from jax.experimental import pallas as pl
from jax.experimental.pallas import tpu as pltpu  # noqa: F401  (TPU backend)

# ---- model hyper-parameters (mirrors nn.TransformerEncoderLayer defaults) ----
NUM_LAYERS = 2          # num_layers=2
NUM_HEADS = 2           # nhead=2
FFN_DIM = 2048          # dim_feedforward default
LN_EPS = 1e-5           # LayerNorm default eps


# --------------------------- Pallas kernel ------------------------------------
def _layer_norm(x, w, b):
    m = jnp.mean(x, axis=-1, keepdims=True)
    v = jnp.mean((x - m) ** 2, axis=-1, keepdims=True)
    return (x - m) * jax.lax.rsqrt(v + LN_EPS) * w + b


def ptum_kernel(ids_ref, item_emb_ref, pos_emb_ref, mask_ref,
                wqkv_ref, bqkv_ref, wo_ref, bo_ref, ln1_ref,
                w1_ref, b1_ref, w2_ref, b2_ref, ln2_ref,
                hw_ref, hb_ref, out_ref, *, batch, num_layers, num_heads):
    # Whole forward in one invocation.  N = batch * seq folded into sublanes.
    ids = ids_ref[...]                                   # (N, 1) int32
    N = ids.shape[0]
    V = item_emb_ref.shape[0]
    E = item_emb_ref.shape[1]
    S = N // batch
    dh = E // num_heads

    # --- embedding: one-hot gather on the MXU + positional add -----------------
    onehot = (ids == jax.lax.broadcasted_iota(jnp.int32, (N, V), 1)).astype(jnp.float32)
    x = jnp.dot(onehot, item_emb_ref[...], preferred_element_type=jnp.float32)
    pos = pos_emb_ref[...][0:S]                          # (S, E)
    x = x + jnp.concatenate([pos] * batch, axis=0)       # (N, E)
    # dropout -> identity (eval mode)

    # Block-diagonal additive mask (trace-time constant input): the flat (N, N)
    # attention never mixes rows of different batch elements.
    neg_mask = mask_ref[...]
    dimn = (((1,), (1,)), ((), ()))                      # A @ B.T (contract last dims)

    for l in range(num_layers):
        # ---- multi-head self-attention (post-LN encoder layer) ----
        xb = x.astype(jnp.bfloat16)
        # Fused QKV projection (1/sqrt(dh) already folded into the Q columns).
        qkv = jnp.dot(xb, wqkv_ref[l], preferred_element_type=jnp.float32) + bqkv_ref[l]

        heads = []
        for h in range(num_heads):
            q = qkv[:, h * dh:(h + 1) * dh]
            k = qkv[:, E + h * dh:E + (h + 1) * dh]
            v = qkv[:, 2 * E + h * dh:2 * E + (h + 1) * dh]

            s = jax.lax.dot_general(q, k, dimn,
                                    preferred_element_type=jnp.float32)   # (N, N)
            s = s + neg_mask
            s = s - jnp.max(s, axis=-1, keepdims=True)
            p = jnp.exp(s)
            p = p * pl.reciprocal(jnp.sum(p, axis=-1, keepdims=True), approx=True)
            heads.append(jnp.dot(p, v, preferred_element_type=jnp.float32))  # (N, dh)

        o = jnp.concatenate(heads, axis=-1).astype(jnp.bfloat16)          # (N, E)
        attn = jnp.dot(o, wo_ref[l], preferred_element_type=jnp.float32) + bo_ref[l]
        x = _layer_norm(x + attn, ln1_ref[l, 0], ln1_ref[l, 1])

        # ---- feed-forward (ReLU) ----
        xb = x.astype(jnp.bfloat16)
        h1 = jnp.maximum(
            jnp.dot(xb, w1_ref[l], preferred_element_type=jnp.float32) + b1_ref[l], 0.0)
        ff = (jnp.dot(h1.astype(jnp.bfloat16), w2_ref[l],
                      preferred_element_type=jnp.float32) + b2_ref[l])
        x = _layer_norm(x + ff, ln2_ref[l, 0], ln2_ref[l, 1])

    # ---- fused prediction heads: (N, E) @ (E, 2V) -> 128-lane-dense store ----
    out_ref[...] = (jnp.dot(x.astype(jnp.bfloat16), hw_ref[...],
                            preferred_element_type=jnp.float32) + hb_ref[...])


# --------------------------- Pallas wrapper -----------------------------------
def ptum_pallas(kw, ids_flat, batch):
    N = ids_flat.shape[0]
    S = N // batch
    Vi, E = kw['item_emb'].shape
    V2 = kw['head_b'].shape[-1]
    L = kw['wqkv'].shape[0]
    F = kw['w1T'].shape[-1]
    H = NUM_HEADS
    dh = E // H

    # Trace-time constant block-diagonal mask (numpy -> XLA constant).
    row_b = np.arange(N) // S
    neg_mask = jnp.asarray(
        np.where(row_b[:, None] == row_b[None, :], 0.0, -1e30).astype(np.float32))

    flops = 2 * N * Vi * E                                       # one-hot gather
    flops += L * (2 * N * E * 3 * E + 4 * H * N * N * dh
                  + 2 * N * E * E + 4 * N * E * F)               # attn + ffn
    flops += 2 * N * E * V2                                      # fused heads
    transcendentals = L * H * N * N
    wbytes = sum(int(v.size) * int(v.dtype.itemsize) for v in kw.values())
    bytes_accessed = int(wbytes + N * 4 + N * N * 4 + N * V2 * 4)

    kern = functools.partial(ptum_kernel, batch=batch, num_layers=L, num_heads=H)
    # No grid: single invocation, whole operands resident in VMEM (<1 MiB), so
    # no pipelining / vmem_limit tuning is needed on v5e/v6e/v7x.
    return pl.pallas_call(
        kern,
        out_shape=jax.ShapeDtypeStruct((N, V2), jnp.float32),
        cost_estimate=pl.CostEstimate(flops=int(flops),
                                      transcendentals=int(transcendentals),
                                      bytes_accessed=bytes_accessed),
    )(ids_flat, kw['item_emb'], kw['pos_emb'], neg_mask,
      kw['wqkv'], kw['bqkv'], kw['woT'], kw['bo'], kw['ln1'],
      kw['w1T'], kw['b1'], kw['w2T'], kw['b2'], kw['ln2'],
      kw['head_wT'], kw['head_b'])


# --------------------------- parameters ---------------------------------------
def init_params(key, num_items, embed_dim, max_seq_len,
                num_layers=NUM_LAYERS, ffn_dim=FFN_DIM):
    keys = iter(jax.random.split(key, 32))

    def nrm(shape, scale=0.02):
        return (scale * jax.random.normal(next(keys), shape)).astype(jnp.float32)

    E, F, L = embed_dim, ffn_dim, num_layers
    bf = jnp.bfloat16
    item_emb = nrm((num_items, E)).at[0].set(0.0)        # padding_idx=0
    pos_emb = nrm((max_seq_len + 2, E))

    ln_const = jnp.stack([jnp.ones((L, 1, E), jnp.float32),
                          jnp.zeros((L, 1, E), jnp.float32)], axis=1)  # (L,2,1,E)
    # Matmul weights stored in bf16 (halves weight footprint); biases / LN in f32.
    return dict(
        item_emb=item_emb, pos_emb=pos_emb,
        wqkvT=nrm((L, 3, E, E)).astype(bf), bqkv=nrm((L, 3, 1, E)),
        woT=nrm((L, E, E)).astype(bf), bo=nrm((L, 1, E)),
        ln1=ln_const,
        w1T=nrm((L, E, F)).astype(bf), b1=nrm((L, 1, F)),
        w2T=nrm((L, F, E)).astype(bf), b2=nrm((L, 1, E)),
        ln2=ln_const,
        item_head_wT=nrm((E, num_items)).astype(bf), item_head_b=nrm((1, num_items)),
        next_head_wT=nrm((E, num_items)).astype(bf), next_head_b=nrm((1, num_items)),
    )


def prep_kernel_weights(p):
    """One-time (hoisted) layout prep: QKV fusion + scale fold + fused heads."""
    L, H = NUM_LAYERS, NUM_HEADS
    E = p['wqkvT'].shape[-1]
    dh = E // H
    scale = 1.0 / math.sqrt(dh)          # 0.25 here -> exact in bf16
    bf = jnp.bfloat16

    wq = (p['wqkvT'][:, 0].astype(jnp.float32) * scale).astype(bf)   # fold 1/sqrt(dh)
    bq = p['bqkv'][:, 0] * scale
    wqkv = jnp.concatenate([wq, p['wqkvT'][:, 1], p['wqkvT'][:, 2]], axis=-1)  # (L,E,3E)
    bqkv = jnp.concatenate([bq, p['bqkv'][:, 1], p['bqkv'][:, 2]], axis=-1)    # (L,1,3E)

    head_wT = jnp.concatenate([p['item_head_wT'], p['next_head_wT']], axis=1)  # (E,2V)
    head_b = jnp.concatenate([p['item_head_b'], p['next_head_b']], axis=1)     # (1,2V)

    return dict(item_emb=p['item_emb'], pos_emb=p['pos_emb'],
                wqkv=wqkv, bqkv=bqkv,
                woT=p['woT'], bo=p['bo'], ln1=p['ln1'],
                w1T=p['w1T'], b1=p['b1'], w2T=p['w2T'], b2=p['b2'], ln2=p['ln2'],
                head_wT=head_wT, head_b=head_b)


# --------------------------- forward (matches PTUMModel.forward) --------------
def ptum_forward(kw, input_ids, mask_positions):
    B, S = input_ids.shape
    V = kw['item_emb'].shape[0]
    N = B * S

    # Single kernel launch: embedding + 2 encoder layers + fused heads.
    logits_all = ptum_pallas(kw, input_ids.reshape(N, 1), batch=B)   # (N, 2V)

    last_idx = jnp.arange(B, dtype=jnp.int32) * S + (S - 1)
    next_item_logits = logits_all[last_idx, V:]
    if mask_positions is not None:
        b_idx, p_idx = mask_positions
        masked_item_logits = logits_all[b_idx * S + p_idx, :V]
    else:
        masked_item_logits = None
    return masked_item_logits, next_item_logits


# --------------------------- pure-JAX reference --------------------------------
def transformer_ref(x, p):
    B, S, E = x.shape
    dh = E // NUM_HEADS
    scale = 1.0 / math.sqrt(dh)

    def ln(y, w, b):
        m = y.mean(-1, keepdims=True)
        v = ((y - m) ** 2).mean(-1, keepdims=True)
        return (y - m) / jnp.sqrt(v + LN_EPS) * w + b

    for l in range(NUM_LAYERS):
        q = x @ p['wqkvT'][l, 0] + p['bqkv'][l, 0]
        k = x @ p['wqkvT'][l, 1] + p['bqkv'][l, 1]
        v = x @ p['wqkvT'][l, 2] + p['bqkv'][l, 2]
        qh = q.reshape(B, S, NUM_HEADS, dh).transpose(0, 2, 1, 3)
        kh = k.reshape(B, S, NUM_HEADS, dh).transpose(0, 2, 1, 3)
        vh = v.reshape(B, S, NUM_HEADS, dh).transpose(0, 2, 1, 3)
        s = jnp.einsum('bhqd,bhkd->bhqk', qh * scale, kh)
        a = jax.nn.softmax(s, axis=-1)
        o = jnp.einsum('bhqk,bhkd->bhqd', a, vh).transpose(0, 2, 1, 3).reshape(B, S, E)
        o = o @ p['woT'][l] + p['bo'][l]
        x = ln(x + o, p['ln1'][l, 0], p['ln1'][l, 1])
        h1 = jax.nn.relu(x @ p['w1T'][l] + p['b1'][l])
        ff = h1 @ p['w2T'][l] + p['b2'][l]
        x = ln(x + ff, p['ln2'][l, 0], p['ln2'][l, 1])
    return x


def ptum_forward_ref(params, input_ids, mask_positions):
    B, S = input_ids.shape
    seq_emb = (params['item_emb'][input_ids]
               + params['pos_emb'][jnp.arange(S)][None]).astype(jnp.float32)
    states = transformer_ref(seq_emb, params)
    b_idx, p_idx = mask_positions
    masked = states[b_idx, p_idx] @ params['item_head_wT'] + params['item_head_b']
    nxt = states[:, -1] @ params['next_head_wT'] + params['next_head_b']
    return masked, nxt


# --------------------------- main ----------------------------------------------
if __name__ == "__main__":
    NUM_ITEMS, EMBED_DIM, MAX_SEQ_LEN = 64, 32, 8
    B, S = 2, 8

    key = jax.random.PRNGKey(0)
    pkey, dkey = jax.random.split(key)
    params = init_params(pkey, NUM_ITEMS, EMBED_DIM, MAX_SEQ_LEN)
    kw = prep_kernel_weights(params)          # hoisted: weight prep runs once

    input_ids = jax.random.randint(dkey, (B, S), 0, NUM_ITEMS, dtype=jnp.int32)
    # mask_positions as advanced-index tuple (batch indices, seq indices), K=3
    mask_positions = (jnp.array([0, 1, 1], jnp.int32), jnp.array([2, 5, 7], jnp.int32))

    fwd = jax.jit(ptum_forward)
    masked_logits, next_logits = fwd(kw, input_ids, mask_positions)
    jax.block_until_ready((masked_logits, next_logits))

    assert masked_logits.shape == (3, NUM_ITEMS)
    assert next_logits.shape == (B, NUM_ITEMS)

    # correctness check vs. pure-JAX f32 reference (same bf16-rounded weights;
    # tolerance accounts for bf16 activation casts + approx-reciprocal softmax)
    m_ref, n_ref = ptum_forward_ref(params, input_ids, mask_positions)
    assert jnp.allclose(masked_logits, m_ref, rtol=2e-2, atol=2e-2), \
        float(jnp.max(jnp.abs(masked_logits - m_ref)))
    assert jnp.allclose(next_logits, n_ref, rtol=2e-2, atol=2e-2), \
        float(jnp.max(jnp.abs(next_logits - n_ref)))

    print("KERNEL_OK")
</pallas_src>

<mosaic_0001>
module attributes {stable_mosaic.version = 11 : i64} {
  func.func @ptum_kernel(%arg0: memref<16x1xi32, #tpu.memory_space<vmem>>, %arg1: memref<64x32xf32, #tpu.memory_space<vmem>>, %arg2: memref<10x32xf32, #tpu.memory_space<vmem>>, %arg3: memref<16x16xf32, #tpu.memory_space<vmem>>, %arg4: memref<2x32x96xbf16, #tpu.memory_space<vmem>>, %arg5: memref<2x1x96xf32, #tpu.memory_space<vmem>>, %arg6: memref<2x32x32xbf16, #tpu.memory_space<vmem>>, %arg7: memref<2x1x32xf32, #tpu.memory_space<vmem>>, %arg8: memref<2x2x1x32xf32, #tpu.memory_space<vmem>>, %arg9: memref<2x32x2048xbf16, #tpu.memory_space<vmem>>, %arg10: memref<2x1x2048xf32, #tpu.memory_space<vmem>>, %arg11: memref<2x2048x32xbf16, #tpu.memory_space<vmem>>, %arg12: memref<2x1x32xf32, #tpu.memory_space<vmem>>, %arg13: memref<2x2x1x32xf32, #tpu.memory_space<vmem>>, %arg14: memref<32x128xbf16, #tpu.memory_space<vmem>>, %arg15: memref<1x128xf32, #tpu.memory_space<vmem>>, %arg16: memref<16x128xf32, #tpu.memory_space<vmem>>) attributes {dimension_semantics = [], scalar_prefetch = 0 : i64, scratch_operands = 0 : i64, tpu.core_type = #tpu.core_type<tc>} {
    %c0 = arith.constant 0 : index
    %c0_0 = arith.constant 0 : index
    %0 = vector.load %arg0[%c0, %c0_0] : memref<16x1xi32, #tpu.memory_space<vmem>>, vector<16x1xi32>
    %1 = tpu.iota {dimensions = array<i32: 1>} : vector<16x64xi32>
    %2 = vector.broadcast %0 : vector<16x1xi32> to vector<16x64xi32>
    %3 = arith.cmpi eq, %2, %1 : vector<16x64xi32>
    %4 = arith.extui %3 : vector<16x64xi1> to vector<16x64xi32>
    %5 = arith.sitofp %4 : vector<16x64xi32> to vector<16x64xf32>
    %c0_1 = arith.constant 0 : index
    %c0_2 = arith.constant 0 : index
    %6 = vector.load %arg1[%c0_1, %c0_2] : memref<64x32xf32, #tpu.memory_space<vmem>>, vector<64x32xf32>
    %cst = arith.constant dense<0.000000e+00> : vector<16x32xf32>
    %7 = tpu.matmul %5, %6, %cst {dimension_numbers = #tpu.dot_dimension_numbers<[1], [0], [0], [1], [0, 0, 1, 1], [], []>} : vector<16x64xf32>, vector<64x32xf32>, vector<16x32xf32> -> vector<16x32xf32>
    %c0_3 = arith.constant 0 : index
    %c0_4 = arith.constant 0 : index
    %8 = vector.load %arg2[%c0_3, %c0_4] : memref<10x32xf32, #tpu.memory_space<vmem>>, vector<10x32xf32>
    %9 = vector.extract_strided_slice %8 {offsets = [0, 0], sizes = [8, 32], strides = [1, 1]} : vector<10x32xf32> to vector<8x32xf32>
    %10 = tpu.concatenate %9, %9 in 0 : vector<8x32xf32>, vector<8x32xf32> -> vector<16x32xf32>
    %11 = arith.addf %7, %10 : vector<16x32xf32>
    %c0_5 = arith.constant 0 : index
    %c0_6 = arith.constant 0 : index
    %12 = vector.load %arg3[%c0_5, %c0_6] : memref<16x16xf32, #tpu.memory_space<vmem>>, vector<16x16xf32>
    %13 = arith.truncf %11 : vector<16x32xf32> to vector<16x32xbf16>
    %c0_7 = arith.constant 0 : index
    %c0_8 = arith.constant 0 : index
    %c0_9 = arith.constant 0 : index
    %14 = vector.load %arg4[%c0_7, %c0_8, %c0_9] : memref<2x32x96xbf16, #tpu.memory_space<vmem>>, vector<1x32x96xbf16>
    %15 = vector.shape_cast %14 : vector<1x32x96xbf16> to vector<32x96xbf16>
    %cst_10 = arith.constant dense<0.000000e+00> : vector<16x96xf32>
    %16 = tpu.matmul %13, %15, %cst_10 {dimension_numbers = #tpu.dot_dimension_numbers<[1], [0], [0], [1], [0, 0, 1, 1], [], []>} : vector<16x32xbf16>, vector<32x96xbf16>, vector<16x96xf32> -> vector<16x96xf32>
    %c0_11 = arith.constant 0 : index
    %c0_12 = arith.constant 0 : index
    %c0_13 = arith.constant 0 : index
    %17 = vector.load %arg5[%c0_11, %c0_12, %c0_13] : memref<2x1x96xf32, #tpu.memory_space<vmem>>, vector<1x1x96xf32>
    %18 = vector.shape_cast %17 : vector<1x1x96xf32> to vector<1x96xf32>
    %19 = vector.broadcast %18 : vector<1x96xf32> to vector<16x96xf32>
    %20 = arith.addf %16, %19 : vector<16x96xf32>
    %21 = vector.extract_strided_slice %20 {offsets = [0, 0], sizes = [16, 16], strides = [1, 1]} : vector<16x96xf32> to vector<16x16xf32>
    %22 = vector.extract_strided_slice %20 {offsets = [0, 32], sizes = [16, 16], strides = [1, 1]} : vector<16x96xf32> to vector<16x16xf32>
    %23 = vector.extract_strided_slice %20 {offsets = [0, 64], sizes = [16, 16], strides = [1, 1]} : vector<16x96xf32> to vector<16x16xf32>
    %cst_14 = arith.constant dense<0.000000e+00> : vector<16x16xf32>
    %24 = tpu.matmul %21, %22, %cst_14 {dimension_numbers = #tpu.dot_dimension_numbers<[1], [1], [0], [0], [0, 0, 1, 0], [], []>} : vector<16x16xf32>, vector<16x16xf32>, vector<16x16xf32> -> vector<16x16xf32>
    %25 = arith.addf %24, %12 : vector<16x16xf32>
    %cst_15 = arith.constant dense<0xFF800000> : vector<16xf32>
    %26 = vector.multi_reduction <maximumf>, %25, %cst_15 [1] : vector<16x16xf32> to vector<16xf32>
    %27 = vector.shape_cast %26 : vector<16xf32> to vector<16x1xf32>
    %28 = vector.broadcast %27 : vector<16x1xf32> to vector<16x16xf32>
    %29 = arith.subf %25, %28 : vector<16x16xf32>
    %30 = math.exp %29 : vector<16x16xf32>
    %cst_16 = arith.constant dense<0.000000e+00> : vector<16xf32>
    %31 = vector.multi_reduction <add>, %30, %cst_16 [1] : vector<16x16xf32> to vector<16xf32>
    %32 = vector.shape_cast %31 : vector<16xf32> to vector<16x1xf32>
    %33 = tpu.reciprocal %32 {approx = true} : vector<16x1xf32> -> vector<16x1xf32>
    %34 = vector.broadcast %33 : vector<16x1xf32> to vector<16x16xf32>
    %35 = arith.mulf %30, %34 : vector<16x16xf32>
    %cst_17 = arith.constant dense<0.000000e+00> : vector<16x16xf32>
    %36 = tpu.matmul %35, %23, %cst_17 {dimension_numbers = #tpu.dot_dimension_numbers<[1], [0], [0], [1], [0, 0, 1, 1], [], []>} : vector<16x16xf32>, vector<16x16xf32>, vector<16x16xf32> -> vector<16x16xf32>
    %37 = vector.extract_strided_slice %20 {offsets = [0, 16], sizes = [16, 16], strides = [1, 1]} : vector<16x96xf32> to vector<16x16xf32>
    %38 = vector.extract_strided_slice %20 {offsets = [0, 48], sizes = [16, 16], strides = [1, 1]} : vector<16x96xf32> to vector<16x16xf32>
    %39 = vector.extract_strided_slice %20 {offsets = [0, 80], sizes = [16, 16], strides = [1, 1]} : vector<16x96xf32> to vector<16x16xf32>
    %cst_18 = arith.constant dense<0.000000e+00> : vector<16x16xf32>
    %40 = tpu.matmul %37, %38, %cst_18 {dimension_numbers = #tpu.dot_dimension_numbers<[1], [1], [0], [0], [0, 0, 1, 0], [], []>} : vector<16x16xf32>, vector<16x16xf32>, vector<16x16xf32> -> vector<16x16xf32>
    %41 = arith.addf %40, %12 : vector<16x16xf32>
    %cst_19 = arith.constant dense<0xFF800000> : vector<16xf32>
    %42 = vector.multi_reduction <maximumf>, %41, %cst_19 [1] : vector<16x16xf32> to vector<16xf32>
    %43 = vector.shape_cast %42 : vector<16xf32> to vector<16x1xf32>
    %44 = vector.broadcast %43 : vector<16x1xf32> to vector<16x16xf32>
    %45 = arith.subf %41, %44 : vector<16x16xf32>
    %46 = math.exp %45 : vector<16x16xf32>
    %cst_20 = arith.constant dense<0.000000e+00> : vector<16xf32>
    %47 = vector.multi_reduction <add>, %46, %cst_20 [1] : vector<16x16xf32> to vector<16xf32>
    %48 = vector.shape_cast %47 : vector<16xf32> to vector<16x1xf32>
    %49 = tpu.reciprocal %48 {approx = true} : vector<16x1xf32> -> vector<16x1xf32>
    %50 = vector.broadcast %49 : vector<16x1xf32> to vector<16x16xf32>
    %51 = arith.mulf %46, %50 : vector<16x16xf32>
    %cst_21 = arith.constant dense<0.000000e+00> : vector<16x16xf32>
    %52 = tpu.matmul %51, %39, %cst_21 {dimension_numbers = #tpu.dot_dimension_numbers<[1], [0], [0], [1], [0, 0, 1, 1], [], []>} : vector<16x16xf32>, vector<16x16xf32>, vector<16x16xf32> -> vector<16x16xf32>
    %53 = tpu.concatenate %36, %52 in 1 : vector<16x16xf32>, vector<16x16xf32> -> vector<16x32xf32>
    %54 = arith.truncf %53 : vector<16x32xf32> to vector<16x32xbf16>
    %c0_22 = arith.constant 0 : index
    %c0_23 = arith.constant 0 : index
    %c0_24 = arith.constant 0 : index
    %55 = vector.load %arg6[%c0_22, %c0_23, %c0_24] : memref<2x32x32xbf16, #tpu.memory_space<vmem>>, vector<1x32x32xbf16>
    %56 = vector.shape_cast %55 : vector<1x32x32xbf16> to vector<32x32xbf16>
    %cst_25 = arith.constant dense<0.000000e+00> : vector<16x32xf32>
    %57 = tpu.matmul %54, %56, %cst_25 {dimension_numbers = #tpu.dot_dimension_numbers<[1], [0], [0], [1], [0, 0, 1, 1], [], []>} : vector<16x32xbf16>, vector<32x32xbf16>, vector<16x32xf32> -> vector<16x32xf32>
    %c0_26 = arith.constant 0 : index
    %c0_27 = arith.constant 0 : index
    %c0_28 = arith.constant 0 : index
    %58 = vector.load %arg7[%c0_26, %c0_27, %c0_28] : memref<2x1x32xf32, #tpu.memory_space<vmem>>, vector<1x1x32xf32>
    %59 = vector.shape_cast %58 : vector<1x1x32xf32> to vector<1x32xf32>
    %60 = vector.broadcast %59 : vector<1x32xf32> to vector<16x32xf32>
    %61 = arith.addf %57, %60 : vector<16x32xf32>
    %62 = arith.addf %11, %61 : vector<16x32xf32>
    %c0_29 = arith.constant 0 : index
    %c0_30 = arith.constant 0 : index
    %c0_31 = arith.constant 0 : index
    %c0_32 = arith.constant 0 : index
    %63 = vector.load %arg8[%c0_29, %c0_30, %c0_31, %c0_32] : memref<2x2x1x32xf32, #tpu.memory_space<vmem>>, vector<1x1x1x32xf32>
    %64 = vector.shape_cast %63 : vector<1x1x1x32xf32> to vector<1x32xf32>
    %c0_33 = arith.constant 0 : index
    %c1 = arith.constant 1 : index
    %c0_34 = arith.constant 0 : index
    %c0_35 = arith.constant 0 : index
    %65 = vector.load %arg8[%c0_33, %c1, %c0_34, %c0_35] : memref<2x2x1x32xf32, #tpu.memory_space<vmem>>, vector<1x1x1x32xf32>
    %66 = vector.shape_cast %65 : vector<1x1x1x32xf32> to vector<1x32xf32>
    %cst_36 = arith.constant dense<0.000000e+00> : vector<16xf32>
    %67 = vector.multi_reduction <add>, %62, %cst_36 [1] : vector<16x32xf32> to vector<16xf32>
    %68 = vector.shape_cast %67 : vector<16xf32> to vector<16x1xf32>
    %cst_37 = arith.constant 3.200000e+01 : f32
    %69 = vector.broadcast %cst_37 : f32 to vector<16x1xf32>
    %70 = arith.divf %68, %69 : vector<16x1xf32>
    %71 = vector.broadcast %70 : vector<16x1xf32> to vector<16x32xf32>
    %72 = arith.subf %62, %71 : vector<16x32xf32>
    %73 = arith.mulf %72, %72 : vector<16x32xf32>
    %cst_38 = arith.constant dense<0.000000e+00> : vector<16xf32>
    %74 = vector.multi_reduction <add>, %73, %cst_38 [1] : vector<16x32xf32> to vector<16xf32>
    %75 = vector.shape_cast %74 : vector<16xf32> to vector<16x1xf32>
    %cst_39 = arith.constant 3.200000e+01 : f32
    %76 = vector.broadcast %cst_39 : f32 to vector<16x1xf32>
    %77 = arith.divf %75, %76 : vector<16x1xf32>
    %78 = vector.broadcast %70 : vector<16x1xf32> to vector<16x32xf32>
    %79 = arith.subf %62, %78 : vector<16x32xf32>
    %cst_40 = arith.constant 9.99999974E-6 : f32
    %80 = vector.broadcast %cst_40 : f32 to vector<16x1xf32>
    %81 = arith.addf %77, %80 : vector<16x1xf32>
    %82 = math.rsqrt %81 : vector<16x1xf32>
    %83 = vector.broadcast %82 : vector<16x1xf32> to vector<16x32xf32>
    %84 = arith.mulf %79, %83 : vector<16x32xf32>
    %85 = vector.broadcast %64 : vector<1x32xf32> to vector<16x32xf32>
    %86 = arith.mulf %84, %85 : vector<16x32xf32>
    %87 = vector.broadcast %66 : vector<1x32xf32> to vector<16x32xf32>
    %88 = arith.addf %86, %87 : vector<16x32xf32>
    %89 = arith.truncf %88 : vector<16x32xf32> to vector<16x32xbf16>
    %c0_41 = arith.constant 0 : index
    %c0_42 = arith.constant 0 : index
    %c0_43 = arith.constant 0 : index
    %90 = vector.load %arg9[%c0_41, %c0_42, %c0_43] : memref<2x32x2048xbf16, #tpu.memory_space<vmem>>, vector<1x32x2048xbf16>
    %91 = vector.shape_cast %90 : vector<1x32x2048xbf16> to vector<32x2048xbf16>
    %cst_44 = arith.constant dense<0.000000e+00> : vector<16x2048xf32>
    %92 = tpu.matmul %89, %91, %cst_44 {dimension_numbers = #tpu.dot_dimension_numbers<[1], [0], [0], [1], [0, 0, 1, 1], [], []>} : vector<16x32xbf16>, vector<32x2048xbf16>, vector<16x2048xf32> -> vector<16x2048xf32>
    %c0_45 = arith.constant 0 : index
    %c0_46 = arith.constant 0 : index
    %c0_47 = arith.constant 0 : index
    %93 = vector.load %arg10[%c0_45, %c0_46, %c0_47] : memref<2x1x2048xf32, #tpu.memory_space<vmem>>, vector<1x1x2048xf32>
    %94 = vector.shape_cast %93 : vector<1x1x2048xf32> to vector<1x2048xf32>
    %95 = vector.broadcast %94 : vector<1x2048xf32> to vector<16x2048xf32>
    %96 = arith.addf %92, %95 : vector<16x2048xf32>
    %cst_48 = arith.constant 0.000000e+00 : f32
    %97 = vector.broadcast %cst_48 : f32 to vector<16x2048xf32>
    %98 = arith.maximumf %96, %97 : vector<16x2048xf32>
    %99 = arith.truncf %98 : vector<16x2048xf32> to vector<16x2048xbf16>
    %c0_49 = arith.constant 0 : index
    %c0_50 = arith.constant 0 : index
    %c0_51 = arith.constant 0 : index
    %100 = vector.load %arg11[%c0_49, %c0_50, %c0_51] : memref<2x2048x32xbf16, #tpu.memory_space<vmem>>, vector<1x2048x32xbf16>
    %101 = vector.shape_cast %100 : vector<1x2048x32xbf16> to vector<2048x32xbf16>
    %cst_52 = arith.constant dense<0.000000e+00> : vector<16x32xf32>
    %102 = tpu.matmul %99, %101, %cst_52 {dimension_numbers = #tpu.dot_dimension_numbers<[1], [0], [0], [1], [0, 0, 1, 1], [], []>} : vector<16x2048xbf16>, vector<2048x32xbf16>, vector<16x32xf32> -> vector<16x32xf32>
    %c0_53 = arith.constant 0 : index
    %c0_54 = arith.constant 0 : index
    %c0_55 = arith.constant 0 : index
    %103 = vector.load %arg12[%c0_53, %c0_54, %c0_55] : memref<2x1x32xf32, #tpu.memory_space<vmem>>, vector<1x1x32xf32>
    %104 = vector.shape_cast %103 : vector<1x1x32xf32> to vector<1x32xf32>
    %105 = vector.broadcast %104 : vector<1x32xf32> to vector<16x32xf32>
    %106 = arith.addf %102, %105 : vector<16x32xf32>
    %107 = arith.addf %88, %106 : vector<16x32xf32>
    %c0_56 = arith.constant 0 : index
    %c0_57 = arith.constant 0 : index
    %c0_58 = arith.constant 0 : index
    %c0_59 = arith.constant 0 : index
    %108 = vector.load %arg13[%c0_56, %c0_57, %c0_58, %c0_59] : memref<2x2x1x32xf32, #tpu.memory_space<vmem>>, vector<1x1x1x32xf32>
    %109 = vector.shape_cast %108 : vector<1x1x1x32xf32> to vector<1x32xf32>
    %c0_60 = arith.constant 0 : index
    %c1_61 = arith.constant 1 : index
    %c0_62 = arith.constant 0 : index
    %c0_63 = arith.constant 0 : index
    %110 = vector.load %arg13[%c0_60, %c1_61, %c0_62, %c0_63] : memref<2x2x1x32xf32, #tpu.memory_space<vmem>>, vector<1x1x1x32xf32>
    %111 = vector.shape_cast %110 : vector<1x1x1x32xf32> to vector<1x32xf32>
    %cst_64 = arith.constant dense<0.000000e+00> : vector<16xf32>
    %112 = vector.multi_reduction <add>, %107, %cst_64 [1] : vector<16x32xf32> to vector<16xf32>
    %113 = vector.shape_cast %112 : vector<16xf32> to vector<16x1xf32>
    %cst_65 = arith.constant 3.200000e+01 : f32
    %114 = vector.broadcast %cst_65 : f32 to vector<16x1xf32>
    %115 = arith.divf %113, %114 : vector<16x1xf32>
    %116 = vector.broadcast %115 : vector<16x1xf32> to vector<16x32xf32>
    %117 = arith.subf %107, %116 : vector<16x32xf32>
    %118 = arith.mulf %117, %117 : vector<16x32xf32>
    %cst_66 = arith.constant dense<0.000000e+00> : vector<16xf32>
    %119 = vector.multi_reduction <add>, %118, %cst_66 [1] : vector<16x32xf32> to vector<16xf32>
    %120 = vector.shape_cast %119 : vector<16xf32> to vector<16x1xf32>
    %cst_67 = arith.constant 3.200000e+01 : f32
    %121 = vector.broadcast %cst_67 : f32 to vector<16x1xf32>
    %122 = arith.divf %120, %121 : vector<16x1xf32>
    %123 = vector.broadcast %115 : vector<16x1xf32> to vector<16x32xf32>
    %124 = arith.subf %107, %123 : vector<16x32xf32>
    %cst_68 = arith.constant 9.99999974E-6 : f32
    %125 = vector.broadcast %cst_68 : f32 to vector<16x1xf32>
    %126 = arith.addf %122, %125 : vector<16x1xf32>
    %127 = math.rsqrt %126 : vector<16x1xf32>
    %128 = vector.broadcast %127 : vector<16x1xf32> to vector<16x32xf32>
    %129 = arith.mulf %124, %128 : vector<16x32xf32>
    %130 = vector.broadcast %109 : vector<1x32xf32> to vector<16x32xf32>
    %131 = arith.mulf %129, %130 : vector<16x32xf32>
    %132 = vector.broadcast %111 : vector<1x32xf32> to vector<16x32xf32>
    %133 = arith.addf %131, %132 : vector<16x32xf32>
    %134 = arith.truncf %133 : vector<16x32xf32> to vector<16x32xbf16>
    %c1_69 = arith.constant 1 : index
    %c0_70 = arith.constant 0 : index
    %c0_71 = arith.constant 0 : index
    %135 = vector.load %arg4[%c1_69, %c0_70, %c0_71] : memref<2x32x96xbf16, #tpu.memory_space<vmem>>, vector<1x32x96xbf16>
    %136 = vector.shape_cast %135 : vector<1x32x96xbf16> to vector<32x96xbf16>
    %cst_72 = arith.constant dense<0.000000e+00> : vector<16x96xf32>
    %137 = tpu.matmul %134, %136, %cst_72 {dimension_numbers = #tpu.dot_dimension_numbers<[1], [0], [0], [1], [0, 0, 1, 1], [], []>} : vector<16x32xbf16>, vector<32x96xbf16>, vector<16x96xf32> -> vector<16x96xf32>
    %c1_73 = arith.constant 1 : index
    %c0_74 = arith.constant 0 : index
    %c0_75 = arith.constant 0 : index
    %138 = vector.load %arg5[%c1_73, %c0_74, %c0_75] : memref<2x1x96xf32, #tpu.memory_space<vmem>>, vector<1x1x96xf32>
    %139 = vector.shape_cast %138 : vector<1x1x96xf32> to vector<1x96xf32>
    %140 = vector.broadcast %139 : vector<1x96xf32> to vector<16x96xf32>
    %141 = arith.addf %137, %140 : vector<16x96xf32>
    %142 = vector.extract_strided_slice %141 {offsets = [0, 0], sizes = [16, 16], strides = [1, 1]} : vector<16x96xf32> to vector<16x16xf32>
    %143 = vector.extract_strided_slice %141 {offsets = [0, 32], sizes = [16, 16], strides = [1, 1]} : vector<16x96xf32> to vector<16x16xf32>
    %144 = vector.extract_strided_slice %141 {offsets = [0, 64], sizes = [16, 16], strides = [1, 1]} : vector<16x96xf32> to vector<16x16xf32>
    %cst_76 = arith.constant dense<0.000000e+00> : vector<16x16xf32>
    %145 = tpu.matmul %142, %143, %cst_76 {dimension_numbers = #tpu.dot_dimension_numbers<[1], [1], [0], [0], [0, 0, 1, 0], [], []>} : vector<16x16xf32>, vector<16x16xf32>, vector<16x16xf32> -> vector<16x16xf32>
    %146 = arith.addf %145, %12 : vector<16x16xf32>
    %cst_77 = arith.constant dense<0xFF800000> : vector<16xf32>
    %147 = vector.multi_reduction <maximumf>, %146, %cst_77 [1] : vector<16x16xf32> to vector<16xf32>
    %148 = vector.shape_cast %147 : vector<16xf32> to vector<16x1xf32>
    %149 = vector.broadcast %148 : vector<16x1xf32> to vector<16x16xf32>
    %150 = arith.subf %146, %149 : vector<16x16xf32>
    %151 = math.exp %150 : vector<16x16xf32>
    %cst_78 = arith.constant dense<0.000000e+00> : vector<16xf32>
    %152 = vector.multi_reduction <add>, %151, %cst_78 [1] : vector<16x16xf32> to vector<16xf32>
    %153 = vector.shape_cast %152 : vector<16xf32> to vector<16x1xf32>
    %154 = tpu.reciprocal %153 {approx = true} : vector<16x1xf32> -> vector<16x1xf32>
    %155 = vector.broadcast %154 : vector<16x1xf32> to vector<16x16xf32>
    %156 = arith.mulf %151, %155 : vector<16x16xf32>
    %cst_79 = arith.constant dense<0.000000e+00> : vector<16x16xf32>
    %157 = tpu.matmul %156, %144, %cst_79 {dimension_numbers = #tpu.dot_dimension_numbers<[1], [0], [0], [1], [0, 0, 1, 1], [], []>} : vector<16x16xf32>, vector<16x16xf32>, vector<16x16xf32> -> vector<16x16xf32>
    %158 = vector.extract_strided_slice %141 {offsets = [0, 16], sizes = [16, 16], strides = [1, 1]} : vector<16x96xf32> to vector<16x16xf32>
    %159 = vector.extract_strided_slice %141 {offsets = [0, 48], sizes = [16, 16], strides = [1, 1]} : vector<16x96xf32> to vector<16x16xf32>
    %160 = vector.extract_strided_slice %141 {offsets = [0, 80], sizes = [16, 16], strides = [1, 1]} : vector<16x96xf32> to vector<16x16xf32>
    %cst_80 = arith.constant dense<0.000000e+00> : vector<16x16xf32>
    %161 = tpu.matmul %158, %159, %cst_80 {dimension_numbers = #tpu.dot_dimension_numbers<[1], [1], [0], [0], [0, 0, 1, 0], [], []>} : vector<16x16xf32>, vector<16x16xf32>, vector<16x16xf32> -> vector<16x16xf32>
    %162 = arith.addf %161, %12 : vector<16x16xf32>
    %cst_81 = arith.constant dense<0xFF800000> : vector<16xf32>
    %163 = vector.multi_reduction <maximumf>, %162, %cst_81 [1] : vector<16x16xf32> to vector<16xf32>
    %164 = vector.shape_cast %163 : vector<16xf32> to vector<16x1xf32>
    %165 = vector.broadcast %164 : vector<16x1xf32> to vector<16x16xf32>
    %166 = arith.subf %162, %165 : vector<16x16xf32>
    %167 = math.exp %166 : vector<16x16xf32>
    %cst_82 = arith.constant dense<0.000000e+00> : vector<16xf32>
    %168 = vector.multi_reduction <add>, %167, %cst_82 [1] : vector<16x16xf32> to vector<16xf32>
    %169 = vector.shape_cast %168 : vector<16xf32> to vector<16x1xf32>
    %170 = tpu.reciprocal %169 {approx = true} : vector<16x1xf32> -> vector<16x1xf32>
    %171 = vector.broadcast %170 : vector<16x1xf32> to vector<16x16xf32>
    %172 = arith.mulf %167, %171 : vector<16x16xf32>
    %cst_83 = arith.constant dense<0.000000e+00> : vector<16x16xf32>
    %173 = tpu.matmul %172, %160, %cst_83 {dimension_numbers = #tpu.dot_dimension_numbers<[1], [0], [0], [1], [0, 0, 1, 1], [], []>} : vector<16x16xf32>, vector<16x16xf32>, vector<16x16xf32> -> vector<16x16xf32>
    %174 = tpu.concatenate %157, %173 in 1 : vector<16x16xf32>, vector<16x16xf32> -> vector<16x32xf32>
    %175 = arith.truncf %174 : vector<16x32xf32> to vector<16x32xbf16>
    %c1_84 = arith.constant 1 : index
    %c0_85 = arith.constant 0 : index
    %c0_86 = arith.constant 0 : index
    %176 = vector.load %arg6[%c1_84, %c0_85, %c0_86] : memref<2x32x32xbf16, #tpu.memory_space<vmem>>, vector<1x32x32xbf16>
    %177 = vector.shape_cast %176 : vector<1x32x32xbf16> to vector<32x32xbf16>
    %cst_87 = arith.constant dense<0.000000e+00> : vector<16x32xf32>
    %178 = tpu.matmul %175, %177, %cst_87 {dimension_numbers = #tpu.dot_dimension_numbers<[1], [0], [0], [1], [0, 0, 1, 1], [], []>} : vector<16x32xbf16>, vector<32x32xbf16>, vector<16x32xf32> -> vector<16x32xf32>
    %c1_88 = arith.constant 1 : index
    %c0_89 = arith.constant 0 : index
    %c0_90 = arith.constant 0 : index
    %179 = vector.load %arg7[%c1_88, %c0_89, %c0_90] : memref<2x1x32xf32, #tpu.memory_space<vmem>>, vector<1x1x32xf32>
    %180 = vector.shape_cast %179 : vector<1x1x32xf32> to vector<1x32xf32>
    %181 = vector.broadcast %180 : vector<1x32xf32> to vector<16x32xf32>
    %182 = arith.addf %178, %181 : vector<16x32xf32>
    %183 = arith.addf %133, %182 : vector<16x32xf32>
    %c1_91 = arith.constant 1 : index
    %c0_92 = arith.constant 0 : index
    %c0_93 = arith.constant 0 : index
    %c0_94 = arith.constant 0 : index
    %184 = vector.load %arg8[%c1_91, %c0_92, %c0_93, %c0_94] : memref<2x2x1x32xf32, #tpu.memory_space<vmem>>, vector<1x1x1x32xf32>
    %185 = vector.shape_cast %184 : vector<1x1x1x32xf32> to vector<1x32xf32>
    %c1_95 = arith.constant 1 : index
    %c1_96 = arith.constant 1 : index
    %c0_97 = arith.constant 0 : index
    %c0_98 = arith.constant 0 : index
    %186 = vector.load %arg8[%c1_95, %c1_96, %c0_97, %c0_98] : memref<2x2x1x32xf32, #tpu.memory_space<vmem>>, vector<1x1x1x32xf32>
    %187 = vector.shape_cast %186 : vector<1x1x1x32xf32> to vector<1x32xf32>
    %cst_99 = arith.constant dense<0.000000e+00> : vector<16xf32>
    %188 = vector.multi_reduction <add>, %183, %cst_99 [1] : vector<16x32xf32> to vector<16xf32>
    %189 = vector.shape_cast %188 : vector<16xf32> to vector<16x1xf32>
    %cst_100 = arith.constant 3.200000e+01 : f32
    %190 = vector.broadcast %cst_100 : f32 to vector<16x1xf32>
    %191 = arith.divf %189, %190 : vector<16x1xf32>
    %192 = vector.broadcast %191 : vector<16x1xf32> to vector<16x32xf32>
    %193 = arith.subf %183, %192 : vector<16x32xf32>
    %194 = arith.mulf %193, %193 : vector<16x32xf32>
    %cst_101 = arith.constant dense<0.000000e+00> : vector<16xf32>
    %195 = vector.multi_reduction <add>, %194, %cst_101 [1] : vector<16x32xf32> to vector<16xf32>
    %196 = vector.shape_cast %195 : vector<16xf32> to vector<16x1xf32>
    %cst_102 = arith.constant 3.200000e+01 : f32
    %197 = vector.broadcast %cst_102 : f32 to vector<16x1xf32>
    %198 = arith.divf %196, %197 : vector<16x1xf32>
    %199 = vector.broadcast %191 : vector<16x1xf32> to vector<16x32xf32>
    %200 = arith.subf %183, %199 : vector<16x32xf32>
    %cst_103 = arith.constant 9.99999974E-6 : f32
    %201 = vector.broadcast %cst_103 : f32 to vector<16x1xf32>
    %202 = arith.addf %198, %201 : vector<16x1xf32>
    %203 = math.rsqrt %202 : vector<16x1xf32>
    %204 = vector.broadcast %203 : vector<16x1xf32> to vector<16x32xf32>
    %205 = arith.mulf %200, %204 : vector<16x32xf32>
    %206 = vector.broadcast %185 : vector<1x32xf32> to vector<16x32xf32>
    %207 = arith.mulf %205, %206 : vector<16x32xf32>
    %208 = vector.broadcast %187 : vector<1x32xf32> to vector<16x32xf32>
    %209 = arith.addf %207, %208 : vector<16x32xf32>
    %210 = arith.truncf %209 : vector<16x32xf32> to vector<16x32xbf16>
    %c1_104 = arith.constant 1 : index
    %c0_105 = arith.constant 0 : index
    %c0_106 = arith.constant 0 : index
    %211 = vector.load %arg9[%c1_104, %c0_105, %c0_106] : memref<2x32x2048xbf16, #tpu.memory_space<vmem>>, vector<1x32x2048xbf16>
    %212 = vector.shape_cast %211 : vector<1x32x2048xbf16> to vector<32x2048xbf16>
    %cst_107 = arith.constant dense<0.000000e+00> : vector<16x2048xf32>
    %213 = tpu.matmul %210, %212, %cst_107 {dimension_numbers = #tpu.dot_dimension_numbers<[1], [0], [0], [1], [0, 0, 1, 1], [], []>} : vector<16x32xbf16>, vector<32x2048xbf16>, vector<16x2048xf32> -> vector<16x2048xf32>
    %c1_108 = arith.constant 1 : index
    %c0_109 = arith.constant 0 : index
    %c0_110 = arith.constant 0 : index
    %214 = vector.load %arg10[%c1_108, %c0_109, %c0_110] : memref<2x1x2048xf32, #tpu.memory_space<vmem>>, vector<1x1x2048xf32>
    %215 = vector.shape_cast %214 : vector<1x1x2048xf32> to vector<1x2048xf32>
    %216 = vector.broadcast %215 : vector<1x2048xf32> to vector<16x2048xf32>
    %217 = arith.addf %213, %216 : vector<16x2048xf32>
    %cst_111 = arith.constant 0.000000e+00 : f32
    %218 = vector.broadcast %cst_111 : f32 to vector<16x2048xf32>
    %219 = arith.maximumf %217, %218 : vector<16x2048xf32>
    %220 = arith.truncf %219 : vector<16x2048xf32> to vector<16x2048xbf16>
    %c1_112 = arith.constant 1 : index
    %c0_113 = arith.constant 0 : index
    %c0_114 = arith.constant 0 : index
    %221 = vector.load %arg11[%c1_112, %c0_113, %c0_114] : memref<2x2048x32xbf16, #tpu.memory_space<vmem>>, vector<1x2048x32xbf16>
    %222 = vector.shape_cast %221 : vector<1x2048x32xbf16> to vector<2048x32xbf16>
    %cst_115 = arith.constant dense<0.000000e+00> : vector<16x32xf32>
    %223 = tpu.matmul %220, %222, %cst_115 {dimension_numbers = #tpu.dot_dimension_numbers<[1], [0], [0], [1], [0, 0, 1, 1], [], []>} : vector<16x2048xbf16>, vector<2048x32xbf16>, vector<16x32xf32> -> vector<16x32xf32>
    %c1_116 = arith.constant 1 : index
    %c0_117 = arith.constant 0 : index
    %c0_118 = arith.constant 0 : index
    %224 = vector.load %arg12[%c1_116, %c0_117, %c0_118] : memref<2x1x32xf32, #tpu.memory_space<vmem>>, vector<1x1x32xf32>
    %225 = vector.shape_cast %224 : vector<1x1x32xf32> to vector<1x32xf32>
    %226 = vector.broadcast %225 : vector<1x32xf32> to vector<16x32xf32>
    %227 = arith.addf %223, %226 : vector<16x32xf32>
    %228 = arith.addf %209, %227 : vector<16x32xf32>
    %c1_119 = arith.constant 1 : index
    %c0_120 = arith.constant 0 : index
    %c0_121 = arith.constant 0 : index
    %c0_122 = arith.constant 0 : index
    %229 = vector.load %arg13[%c1_119, %c0_120, %c0_121, %c0_122] : memref<2x2x1x32xf32, #tpu.memory_space<vmem>>, vector<1x1x1x32xf32>
    %230 = vector.shape_cast %229 : vector<1x1x1x32xf32> to vector<1x32xf32>
    %c1_123 = arith.constant 1 : index
    %c1_124 = arith.constant 1 : index
    %c0_125 = arith.constant 0 : index
    %c0_126 = arith.constant 0 : index
    %231 = vector.load %arg13[%c1_123, %c1_124, %c0_125, %c0_126] : memref<2x2x1x32xf32, #tpu.memory_space<vmem>>, vector<1x1x1x32xf32>
    %232 = vector.shape_cast %231 : vector<1x1x1x32xf32> to vector<1x32xf32>
    %cst_127 = arith.constant dense<0.000000e+00> : vector<16xf32>
    %233 = vector.multi_reduction <add>, %228, %cst_127 [1] : vector<16x32xf32> to vector<16xf32>
    %234 = vector.shape_cast %233 : vector<16xf32> to vector<16x1xf32>
    %cst_128 = arith.constant 3.200000e+01 : f32
    %235 = vector.broadcast %cst_128 : f32 to vector<16x1xf32>
    %236 = arith.divf %234, %235 : vector<16x1xf32>
    %237 = vector.broadcast %236 : vector<16x1xf32> to vector<16x32xf32>
    %238 = arith.subf %228, %237 : vector<16x32xf32>
    %239 = arith.mulf %238, %238 : vector<16x32xf32>
    %cst_129 = arith.constant dense<0.000000e+00> : vector<16xf32>
    %240 = vector.multi_reduction <add>, %239, %cst_129 [1] : vector<16x32xf32> to vector<16xf32>
    %241 = vector.shape_cast %240 : vector<16xf32> to vector<16x1xf32>
    %cst_130 = arith.constant 3.200000e+01 : f32
    %242 = vector.broadcast %cst_130 : f32 to vector<16x1xf32>
    %243 = arith.divf %241, %242 : vector<16x1xf32>
    %244 = vector.broadcast %236 : vector<16x1xf32> to vector<16x32xf32>
    %245 = arith.subf %228, %244 : vector<16x32xf32>
    %cst_131 = arith.constant 9.99999974E-6 : f32
    %246 = vector.broadcast %cst_131 : f32 to vector<16x1xf32>
    %247 = arith.addf %243, %246 : vector<16x1xf32>
    %248 = math.rsqrt %247 : vector<16x1xf32>
    %249 = vector.broadcast %248 : vector<16x1xf32> to vector<16x32xf32>
    %250 = arith.mulf %245, %249 : vector<16x32xf32>
    %251 = vector.broadcast %230 : vector<1x32xf32> to vector<16x32xf32>
    %252 = arith.mulf %250, %251 : vector<16x32xf32>
    %253 = vector.broadcast %232 : vector<1x32xf32> to vector<16x32xf32>
    %254 = arith.addf %252, %253 : vector<16x32xf32>
    %255 = arith.truncf %254 : vector<16x32xf32> to vector<16x32xbf16>
    %c0_132 = arith.constant 0 : index
    %c0_133 = arith.constant 0 : index
    %256 = vector.load %arg14[%c0_132, %c0_133] : memref<32x128xbf16, #tpu.memory_space<vmem>>, vector<32x128xbf16>
    %cst_134 = arith.constant dense<0.000000e+00> : vector<16x128xf32>
    %257 = tpu.matmul %255, %256, %cst_134 {dimension_numbers = #tpu.dot_dimension_numbers<[1], [0], [0], [1], [0, 0, 1, 1], [], []>} : vector<16x32xbf16>, vector<32x128xbf16>, vector<16x128xf32> -> vector<16x128xf32>
    %c0_135 = arith.constant 0 : index
    %c0_136 = arith.constant 0 : index
    %258 = vector.load %arg15[%c0_135, %c0_136] : memref<1x128xf32, #tpu.memory_space<vmem>>, vector<1x128xf32>
    %259 = vector.broadcast %258 : vector<1x128xf32> to vector<16x128xf32>
    %260 = arith.addf %257, %259 : vector<16x128xf32>
    %c0_137 = arith.constant 0 : index
    %c0_138 = arith.constant 0 : index
    %261 = vector.load %arg16[%c0_137, %c0_138] : memref<16x128xf32, #tpu.memory_space<vmem>>, vector<16x128xf32>
    tpu.vector_store %arg16[%c0_137, %c0_138], %260 {strides = array<i32>} : memref<16x128xf32, #tpu.memory_space<vmem>>, vector<16x128xf32>,
    return
  }
}

</mosaic_0001>

<llo_original>
// kernel: custom-call
$region0: #{custom-call}
  %s0 = inlined_call_operand.hbm [shape: f32[3,64], index: 0, kind: output, shape index: {}]

// kernel: custom-call.1
$region0: #{custom-call.1}
  %s0 = inlined_call_operand.vmem [shape: f32[2,64], index: 0, kind: output, shape index: {}]

// kernel: ptum_forward.1
$region0: #{ptum_forward.1}
  #allocation0 [shape = 'u32[]', space=smem, size = 0x4, offset = 0x4, fixed_abs, tag = 'smem constant byte address 0x4 - core index']
  #allocation1 [shape = 'u32[144,128]{1,0:T(1,128)}', space=vmem, size = 0x12000, scoped, tag = 'internal scratch']
  %s0 = inlined_call_operand.vmem [shape: s32[16,1], index: 0, kind: input, shape index: {}]
  %s1 = inlined_call_operand.vmem [shape: f32[64,32], index: 1, kind: input, shape index: {}]
  %s2 = inlined_call_operand.vmem [shape: f32[10,32], index: 2, kind: input, shape index: {}]
  %s3 = inlined_call_operand.vmem [shape: f32[16,16], index: 3, kind: input, shape index: {}]
  %s4 = inlined_call_operand.vmem [shape: bf16[2,32,96], index: 4, kind: input, shape index: {}]
  %s5 = inlined_call_operand.vmem [shape: f32[2,1,96], index: 5, kind: input, shape index: {}]
  %s6 = inlined_call_operand.vmem [shape: bf16[2,32,32], index: 6, kind: input, shape index: {}]
  %s7 = inlined_call_operand.vmem [shape: f32[2,1,32], index: 7, kind: input, shape index: {}]
  %s8 = inlined_call_operand.vmem [shape: f32[2,2,1,32], index: 8, kind: input, shape index: {}]
  %s9 = inlined_call_operand.vmem [shape: bf16[2,32,2048], index: 9, kind: input, shape index: {}]
  %s10 = inlined_call_operand.vmem [shape: f32[2,1,2048], index: 10, kind: input, shape index: {}]
  %s11 = inlined_call_operand.vmem [shape: bf16[2,2048,32], index: 11, kind: input, shape index: {}]
  %s12 = inlined_call_operand.vmem [shape: f32[2,1,32], index: 12, kind: input, shape index: {}]
  %s13 = inlined_call_operand.vmem [shape: f32[2,2,1,32], index: 13, kind: input, shape index: {}]
  %s14 = inlined_call_operand.vmem [shape: bf16[32,128], index: 14, kind: input, shape index: {}]
  %s15 = inlined_call_operand.vmem [shape: f32[1,128], index: 15, kind: input, shape index: {}]
  %s16 = inlined_call_operand.vmem [shape: f32[16,128], index: 16, kind: output, shape index: {}]
  %s17 = sld [smem:[#allocation0]]
  $region74: #{ptum_forward.1} parent=0
    _
  %s19 = ssub.s32 1, %s17
  %s20 = scalar_select 0, %s19, %s17
  // Predicated region
  $region2: #{ptum_forward.1} parent=0 // pred_check
    _
  $region3: #{ptum_forward.1} parent=0 // pred_check_branch
    %22 = sbr.rel (0) target = $region5
  $region4: #{ptum_forward.1} parent=0 // pred_region
    _
  $region5: #{ptum_forward.1} parent=0 // pred_fallthru
    _
  // Predicated region
  $region6: #{ptum_forward.1} parent=0 // pred_check
    _
  $region7: #{ptum_forward.1} parent=0 // pred_check_branch
    %24 = sbr.rel (0) target = $region9
  $region8: #{ptum_forward.1} parent=0 // pred_region
    _
  $region9: #{ptum_forward.1} parent=0 // pred_fallthru
    _
  // Predicated region
  $region10: #{ptum_forward.1} parent=0 // pred_check
    _
  $region11: #{ptum_forward.1} parent=0 // pred_check_branch
    %26 = sbr.rel (0) target = $region13
  $region12: #{ptum_forward.1} parent=0 // pred_region
    _
  $region13: #{ptum_forward.1} parent=0 // pred_fallthru
    _
  // Predicated region
  $region14: #{ptum_forward.1} parent=0 // pred_check
    _
  $region15: #{ptum_forward.1} parent=0 // pred_check_branch
    %28 = sbr.rel (0) target = $region17
  $region16: #{ptum_forward.1} parent=0 // pred_region
    _
  $region17: #{ptum_forward.1} parent=0 // pred_fallthru
    _
  // Predicated region
  $region18: #{ptum_forward.1} parent=0 // pred_check
    _
  $region19: #{ptum_forward.1} parent=0 // pred_check_branch
    %30 = sbr.rel (0) target = $region21
  $region20: #{ptum_forward.1} parent=0 // pred_region
    _
  $region21: #{ptum_forward.1} parent=0 // pred_fallthru
    _
  // Predicated region
  $region22: #{ptum_forward.1} parent=0 // pred_check
    _
  $region23: #{ptum_forward.1} parent=0 // pred_check_branch
    %32 = sbr.rel (0) target = $region25
  $region24: #{ptum_forward.1} parent=0 // pred_region
    _
  $region25: #{ptum_forward.1} parent=0 // pred_fallthru
    _
  // Predicated region
  $region26: #{ptum_forward.1} parent=0 // pred_check
    _
  $region27: #{ptum_forward.1} parent=0 // pred_check_branch
    %34 = sbr.rel (0) target = $region29
  $region28: #{ptum_forward.1} parent=0 // pred_region
    _
  $region29: #{ptum_forward.1} parent=0 // pred_fallthru
    _
  // Predicated region
  $region30: #{ptum_forward.1} parent=0 // pred_check
    _
  $region31: #{ptum_forward.1} parent=0 // pred_check_branch
    %36 = sbr.rel (0) target = $region33
  $region32: #{ptum_forward.1} parent=0 // pred_region
    _
  $region33: #{ptum_forward.1} parent=0 // pred_fallthru
    _
  // Predicated region
  $region34: #{ptum_forward.1} parent=0 // pred_check
    _
  $region35: #{ptum_forward.1} parent=0 // pred_check_branch
    %38 = sbr.rel (0) target = $region37
  $region36: #{ptum_forward.1} parent=0 // pred_region
    _
  $region37: #{ptum_forward.1} parent=0 // pred_fallthru
    _
  // Predicated region
  $region38: #{ptum_forward.1} parent=0 // pred_check
    _
  $region39: #{ptum_forward.1} parent=0 // pred_check_branch
    %40 = sbr.rel (0) target = $region41
  $region40: #{ptum_forward.1} parent=0 // pred_region
    _
  $region41: #{ptum_forward.1} parent=0 // pred_fallthru
    _
  // Predicated region
  $region42: #{ptum_forward.1} parent=0 // pred_check
    _
  $region43: #{ptum_forward.1} parent=0 // pred_check_branch
    %42 = sbr.rel (0) target = $region45
  $region44: #{ptum_forward.1} parent=0 // pred_region
    _
  $region45: #{ptum_forward.1} parent=0 // pred_fallthru
    _
  // Predicated region
  $region46: #{ptum_forward.1} parent=0 // pred_check
    _
  $region47: #{ptum_forward.1} parent=0 // pred_check_branch
    %44 = sbr.rel (0) target = $region49
  $region48: #{ptum_forward.1} parent=0 // pred_region
    _
  $region49: #{ptum_forward.1} parent=0 // pred_fallthru
    _
  // Predicated region
  $region50: #{ptum_forward.1} parent=0 // pred_check
    _
  $region51: #{ptum_forward.1} parent=0 // pred_check_branch
    %46 = sbr.rel (0) target = $region53
  $region52: #{ptum_forward.1} parent=0 // pred_region
    _
  $region53: #{ptum_forward.1} parent=0 // pred_fallthru
    _
  // Predicated region
  $region54: #{ptum_forward.1} parent=0 // pred_check
    _
  $region55: #{ptum_forward.1} parent=0 // pred_check_branch
    %48 = sbr.rel (0) target = $region57
  $region56: #{ptum_forward.1} parent=0 // pred_region
    _
  $region57: #{ptum_forward.1} parent=0 // pred_fallthru
    _
  // Predicated region
  $region58: #{ptum_forward.1} parent=0 // pred_check
    _
  $region59: #{ptum_forward.1} parent=0 // pred_check_branch
    %50 = sbr.rel (0) target = $region61
  $region60: #{ptum_forward.1} parent=0 // pred_region
    _
  $region61: #{ptum_forward.1} parent=0 // pred_fallthru
    _
  // Predicated region
  $region62: #{ptum_forward.1} parent=0 // pred_check
    _
  $region63: #{ptum_forward.1} parent=0 // pred_check_branch
    %52 = sbr.rel (0) target = $region65
  $region64: #{ptum_forward.1} parent=0 // pred_region
    _
  $region65: #{ptum_forward.1} parent=0 // pred_fallthru
    _
  %v54 = vld [vmem:[%s0] sm:$0xff]
  %v55 = vld [vmem:[%s0 + $0x8] sm:$0xff]
  %v56 = vlaneseq
  %v57 = vand.u32 %v56, 127
  %58 = vset.pattern.permute.xlu0 0
  %59 = vperm.xlu0 %58, %v54
  %v60 = vpop.permute.xlu0 %59
  %61 = vset.pattern.permute.xlu0 0
  %62 = vperm.xlu0 %61, %v55
  %v63 = vpop.permute.xlu0 %62
  %vm64 = vcmp.eq.s32.totalorder %v60, %v57
  %vm65 = vcmp.eq.s32.totalorder %v63, %v57
  %v66 = vsel %vm64, 1, 0
  %v67 = vsel %vm65, 1, 0
  %v68 = vcvt.s32.f32 %v66
  %v69 = vcvt.s32.f32 %v67
  %v70 = vld [vmem:[%s1] sm:$0xff]
  %v71 = vld [vmem:[%s1 + $0x8] sm:$0xff]
  %v72 = vld [vmem:[%s1 + $0x10] sm:$0xff]
  %v73 = vld [vmem:[%s1 + $0x18] sm:$0xff]
  %v74 = vld [vmem:[%s1 + $0x20] sm:$0xff]
  %v75 = vld [vmem:[%s1 + $0x28] sm:$0xff]
  %v76 = vld [vmem:[%s1 + $0x30] sm:$0xff]
  %v77 = vld [vmem:[%s1 + $0x38] sm:$0xff]
  %v78 = vld [vmem:[%s2] sm:$0xff]
  %vm79 = vcmask 523264
  %v81 = vsel %vm79, %v68, 0
  %v84 = vsel %vm79, %v69, 0
  %86 = vmatprep.subr.mxu0 0.0
  %87 = vmatpush1.msra.mxu0 %v70
  %88 = vmatprep.subr.mxu0 0.0
  %89 = vmatpush1.msra.mxu0 %v71
  %90 = vmatprep.subr.mxu0 0.0
  %91 = vmatpush1.msra.mxu0 %v72
  %92 = vmatprep.subr.mxu0 0.0
  %93 = vmatpush1.msra.mxu0 %v73
  %94 = vmatprep.subr.mxu0 0.0
  %95 = vmatpush1.msra.mxu0 %v74
  %96 = vmatprep.subr.mxu0 0.0
  %97 = vmatpush1.msra.mxu0 %v75
  %98 = vmatprep.subr.mxu0 0.0
  %99 = vmatpush1.msra.mxu0 %v76
  %100 = vmatprep.subr.mxu0 0.0
  %101 = vmatpush1.msra.mxu0 %v77
  %102 = vmatprep.subr.mxu0 0.0
  %103 = vmatpush1.msra.mxu0 0.0
  %104 = vmatprep.subr.mxu0 0.0
  %105 = vmatpush1.msra.mxu0 0.0
  %106 = vmatprep.subr.mxu0 0.0
  %107 = vmatpush1.msra.mxu0 0.0
  %108 = vmatprep.subr.mxu0 0.0
  %109 = vmatpush1.msra.mxu0 0.0
  %110 = vmatprep.subr.mxu0 0.0
  %111 = vmatpush1.msra.mxu0 0.0
  %112 = vmatprep.subr.mxu0 0.0
  %113 = vmatpush1.msra.mxu0 0.0
  %114 = vmatprep.subr.mxu0 0.0
  %115 = vmatpush1.msra.mxu0 0.0
  %116 = vmatprep.subr.mxu0 0.0
  %117 = vmatpush1.msra.mxu0 0.0
  %118 = vmatprep.subr.mxu0 0.0
  %119 = vmatpush1.msra.mxu0 0.0
  %120 = vmatprep.subr.mxu0 0.0
  %121 = vmatpush1.msra.mxu0 0.0
  %122 = vmatprep.subr.mxu0 0.0
  %123 = vmatpush1.msra.mxu0 0.0
  %124 = vmatprep.subr.mxu0 0.0
  %125 = vmatpush1.msra.mxu0 0.0
  %126 = vmatprep.subr.mxu0 0.0
  %127 = vmatpush1.msra.mxu0 0.0
  %128 = vmatprep.subr.mxu0 0.0
  %129 = vmatpush1.msra.mxu0 0.0
  %130 = vmatprep.subr.mxu0 0.0
  %131 = vmatpush1.msra.mxu0 0.0
  %132 = vmatprep.subr.mxu0 0.0
  %133 = vmatpush1.msra.mxu0 0.0
  %134 = vmatprep.subr.mxu0 0.0
  %135 = vmatpush1.msra.mxu0 0.0
  %136 = vmatprep.subr.mxu0 0.0
  %137 = vmatpush1.msra.mxu0 0.0
  %138 = vmatprep.subr.mxu0 0.0
  %139 = vmatpush1.msra.mxu0 0.0
  %140 = vmatprep.subr.mxu0 0.0
  %141 = vmatpush1.msra.mxu0 0.0
  %142 = vmatprep.subr.mxu0 0.0
  %143 = vmatpush1.msra.mxu0 0.0
  %144 = vmatprep.subr.mxu0 0.0
  %145 = vmatpush1.msra.mxu0 0.0
  %146 = vmatprep.subr.mxu0 0.0
  %147 = vmatpush1.msra.mxu0 0.0
  %148 = vmatprep.subr.mxu0 0.0
  %149 = vmatpush1.msra.mxu0 0.0
  %150 = vmatprep.mubr.f32.mxu0 0.0
  %151 = vmatmul.mubr.f32.gmra.mrb[0].mxu0 %v81
  %v152 = vpop.f32.mrb[0].mxu0
  %v153 = vadd.f32 %v78, %v152
  %v154 = vpop.f32.mrb[0].mxu0
  %155 = vmatprep.mubr.f32.mxu0 0.0
  %156 = vmatmul.mubr.f32.gmra.mrb[0].mxu0 %v84
  %v157 = vpop.f32.mrb[0].mxu0
  %v158 = vadd.f32 %v78, %v157
  %v159 = vpop.f32.mrb[0].mxu0
  %160 = vdwg.mxu0
  %v161 = vld [vmem:[%s3] sm:$0xff]
  %v162 = vld [vmem:[%s3 + $0x8] sm:$0xff]
  %v163 = vpack.c.bf16 %v158, %v153
  %v164 = vld [vmem:[%s4] sm:$0xf]
  %v165 = vld [vmem:[%s4 + $0x4] sm:$0xf]
  %v166 = vld [vmem:[%s4 + $0x8] sm:$0xf]
  %v167 = vld [vmem:[%s4 + $0xc] sm:$0xf]
  %v168 = vld [vmem:[%s5] sm:$0x1]
  %v170 = vlaneseq
  %v171 = vshrl.u32 %v170, 7
  %v172 = vsub.s32 0, %v171
  %v173 = vrot.slane %v168, %v172
  %v179 = vunpack.c.l.b16 %v164
  %v180 = vunpack.c.l.b16 %v165
  %v181 = vunpack.c.l.b16 %v166
  %v182 = vunpack.c.l.b16 %v167
  %v183 = vpack.c.b16 %v180, %v179
  %v184 = vpack.c.b16 %v182, %v181
  %vm187 = vcmask 261120
  %v189 = vsel %vm187, %v163, 0
  %191 = vmatprep.subr.bf16.mxu0 0
  %192 = vmatpush1.bf16.msra.mxu0 %v183
  %193 = vmatprep.subr.bf16.mxu0 0
  %194 = vmatpush1.bf16.msra.mxu0 %v184
  %195 = vmatprep.subr.bf16.mxu0 0
  %196 = vmatpush1.bf16.msra.mxu0 0
  %197 = vmatprep.subr.bf16.mxu0 0
  %198 = vmatpush1.bf16.msra.mxu0 0
  %199 = vmatprep.subr.bf16.mxu0 0
  %200 = vmatpush1.bf16.msra.mxu0 0
  %201 = vmatprep.subr.bf16.mxu0 0
  %202 = vmatpush1.bf16.msra.mxu0 0
  %203 = vmatprep.subr.bf16.mxu0 0
  %204 = vmatpush1.bf16.msra.mxu0 0
  %205 = vmatprep.subr.bf16.mxu0 0
  %206 = vmatpush1.bf16.msra.mxu0 0
  %207 = vmatprep.subr.bf16.mxu0 0
  %208 = vmatpush1.bf16.msra.mxu0 0
  %209 = vmatprep.subr.bf16.mxu0 0
  %210 = vmatpush1.bf16.msra.mxu0 0
  %211 = vmatprep.subr.bf16.mxu0 0
  %212 = vmatpush1.bf16.msra.mxu0 0
  %213 = vmatprep.subr.bf16.mxu0 0
  %214 = vmatpush1.bf16.msra.mxu0 0
  %215 = vmatprep.subr.bf16.mxu0 0
  %216 = vmatpush1.bf16.msra.mxu0 0
  %217 = vmatprep.subr.bf16.mxu0 0
  %218 = vmatpush1.bf16.msra.mxu0 0
  %219 = vmatprep.subr.bf16.mxu0 0
  %220 = vmatpush1.bf16.msra.mxu0 0
  %221 = vmatprep.subr.bf16.mxu0 0
  %222 = vmatpush1.bf16.msra.mxu0 0
  %223 = vmatprep.mubr.bf16.mxu0 0
  %224 = vmatmul.mubr.bf16.gmra.mrb[0].mxu0 %v189
  %v225 = vpop.f32.mrb[0].mxu0
  %v226 = vadd.f32 %v173, %v225
  %v227 = vpop.f32.mrb[0].mxu0
  %v228 = vpop.f32.mrb[0].mxu0
  %v229 = vadd.f32 %v173, %v228
  %v230 = vpop.f32.mrb[0].mxu0
  %231 = vdwg.mxu0
  %234 = vrot.lane.b32.xlu0 %v226, 96
  %v235 = vpop.permute.xlu0 %234
  %236 = vrot.lane.b32.xlu0 %v229, 96
  %v237 = vpop.permute.xlu0 %236
  %vm238 = vcmask 130048
  %v239 = vsel %vm238, %v226, 0
  %v241 = vsel %vm238, %v229, 0
  %v243 = vsel %vm238, %v235, 0
  %v245 = vsel %vm238, %v237, 0
  %247 = vmatprep.subr.mxu0 0.0
  %248 = vmatpush1.xpose.msra.mxu0 %v243
  %249 = vmatprep.subr.mxu0 0.0
  %250 = vmatpush1.xpose.msra.mxu0 %v245
  %251 = vmatprep.subr.mxu0 0.0
  %252 = vmatpush1.xpose.msra.mxu0 0.0
  %253 = vmatprep.subr.mxu0 0.0
  %254 = vmatpush1.xpose.msra.mxu0 0.0
  %255 = vmatprep.subr.mxu0 0.0
  %256 = vmatpush1.xpose.msra.mxu0 0.0
  %257 = vmatprep.subr.mxu0 0.0
  %258 = vmatpush1.xpose.msra.mxu0 0.0
  %259 = vmatprep.subr.mxu0 0.0
  %260 = vmatpush1.xpose.msra.mxu0 0.0
  %261 = vmatprep.subr.mxu0 0.0
  %262 = vmatpush1.xpose.msra.mxu0 0.0
  %263 = vmatprep.subr.mxu0 0.0
  %264 = vmatpush1.xpose.msra.mxu0 0.0
  %265 = vmatprep.subr.mxu0 0.0
  %266 = vmatpush1.xpose.msra.mxu0 0.0
  %267 = vmatprep.subr.mxu0 0.0
  %268 = vmatpush1.xpose.msra.mxu0 0.0
  %269 = vmatprep.subr.mxu0 0.0
  %270 = vmatpush1.xpose.msra.mxu0 0.0
  %271 = vmatprep.subr.mxu0 0.0
  %272 = vmatpush1.xpose.msra.mxu0 0.0
  %273 = vmatprep.subr.mxu0 0.0
  %274 = vmatpush1.xpose.msra.mxu0 0.0
  %275 = vmatprep.subr.mxu0 0.0
  %276 = vmatpush1.xpose.msra.mxu0 0.0
  %277 = vmatprep.subr.mxu0 0.0
  %278 = vmatpush1.xpose.msra.mxu0 0.0
  %279 = vmatprep.subr.mxu0 0.0
  %280 = vmatpush1.xpose.msra.mxu0 0.0
  %281 = vmatprep.subr.mxu0 0.0
  %282 = vmatpush1.xpose.msra.mxu0 0.0
  %283 = vmatprep.subr.mxu0 0.0
  %284 = vmatpush1.xpose.msra.mxu0 0.0
  %285 = vmatprep.subr.mxu0 0.0
  %286 = vmatpush1.xpose.msra.mxu0 0.0
  %287 = vmatprep.subr.mxu0 0.0
  %288 = vmatpush1.xpose.msra.mxu0 0.0
  %289 = vmatprep.subr.mxu0 0.0
  %290 = vmatpush1.xpose.msra.mxu0 0.0
  %291 = vmatprep.subr.mxu0 0.0
  %292 = vmatpush1.xpose.msra.mxu0 0.0
  %293 = vmatprep.subr.mxu0 0.0
  %294 = vmatpush1.xpose.msra.mxu0 0.0
  %295 = vmatprep.subr.mxu0 0.0
  %296 = vmatpush1.xpose.msra.mxu0 0.0
  %297 = vmatprep.subr.mxu0 0.0
  %298 = vmatpush1.xpose.msra.mxu0 0.0
  %299 = vmatprep.subr.mxu0 0.0
  %300 = vmatpush1.xpose.msra.mxu0 0.0
  %301 = vmatprep.subr.mxu0 0.0
  %302 = vmatpush1.xpose.msra.mxu0 0.0
  %303 = vmatprep.subr.mxu0 0.0
  %304 = vmatpush1.xpose.msra.mxu0 0.0
  %305 = vmatprep.subr.mxu0 0.0
  %306 = vmatpush1.xpose.msra.mxu0 0.0
  %307 = vmatprep.subr.mxu0 0.0
  %308 = vmatpush1.xpose.msra.mxu0 0.0
  %309 = vmatprep.subr.mxu0 0.0
  %310 = vmatpush1.xpose.msra.mxu0 0.0
  %311 = vmatprep.mubr.f32.mxu0 0.0
  %312 = vmatmul.mubr.f32.gmra.mrb[0].mxu0 %v239
  %v313 = vpop.f32.mrb[0].mxu0
  %v314 = vadd.f32 %v161, %v313
  %v315 = vpop.f32.mrb[0].mxu0
  %316 = vmatprep.mubr.f32.mxu0 0.0
  %317 = vmatmul.mubr.f32.gmra.mrb[0].mxu0 %v241
  %v318 = vpop.f32.mrb[0].mxu0
  %v319 = vadd.f32 %v162, %v318
  %v320 = vpop.f32.mrb[0].mxu0
  %321 = vdwg.mxu0
  %v322 = vsel %vm238, %v314, -inf
  %323 = vmax.xlane.f32.xlu0 %v322
  %v324 = vpop.xlane.xlu0 %323
  %v325 = vsel %vm238, %v319, -inf
  %326 = vmax.xlane.f32.xlu0 %v325
  %v327 = vpop.xlane.xlu0 %326
  %v328 = vsub.f32 %v314, %v324
  %v329 = vsub.f32 %v319, %v327
  %v330 = vmul.f32 %v328, 1.442695
  %v331 = vpow.pop %v330
  %v332 = vmul.f32 %v329, 1.442695
  %v333 = vpow.pop %v332
  %v334 = vsel %vm238, %v331, 0.0
  %335 = vadd.xlane.f32.xlu0 %v334
  %v336 = vpop.xlane.xlu0 %335
  %v337 = vsel %vm238, %v333, 0.0
  %338 = vadd.xlane.f32.xlu0 %v337
  %v339 = vpop.xlane.xlu0 %338
  %v340 = vrcp.pop %v336
  %v341 = vrcp.pop %v339
  %v342 = vmul.f32 %v331, %v340
  %v343 = vmul.f32 %v333, %v341
  %344 = vrot.lane.b32.xlu0 %v226, 64
  %v345 = vpop.permute.xlu0 %344
  %346 = vrot.lane.b32.xlu0 %v229, 64
  %v347 = vpop.permute.xlu0 %346
  %v351 = vsel %vm238, %v342, 0
  %v354 = vsel %vm238, %v343, 0
  %356 = vmatprep.subr.mxu0 0.0
  %357 = vmatpush1.msra.mxu0 %v345
  %358 = vmatprep.subr.mxu0 0.0
  %359 = vmatpush1.msra.mxu0 %v347
  %360 = vmatprep.subr.mxu0 0.0
  %361 = vmatpush1.msra.mxu0 0.0
  %362 = vmatprep.subr.mxu0 0.0
  %363 = vmatpush1.msra.mxu0 0.0
  %364 = vmatprep.subr.mxu0 0.0
  %365 = vmatpush1.msra.mxu0 0.0
  %366 = vmatprep.subr.mxu0 0.0
  %367 = vmatpush1.msra.mxu0 0.0
  %368 = vmatprep.subr.mxu0 0.0
  %369 = vmatpush1.msra.mxu0 0.0
  %370 = vmatprep.subr.mxu0 0.0
  %371 = vmatpush1.msra.mxu0 0.0
  %372 = vmatprep.subr.mxu0 0.0
  %373 = vmatpush1.msra.mxu0 0.0
  %374 = vmatprep.subr.mxu0 0.0
  %375 = vmatpush1.msra.mxu0 0.0
  %376 = vmatprep.subr.mxu0 0.0
  %377 = vmatpush1.msra.mxu0 0.0
  %378 = vmatprep.subr.mxu0 0.0
  %379 = vmatpush1.msra.mxu0 0.0
  %380 = vmatprep.subr.mxu0 0.0
  %381 = vmatpush1.msra.mxu0 0.0
  %382 = vmatprep.subr.mxu0 0.0
  %383 = vmatpush1.msra.mxu0 0.0
  %384 = vmatprep.subr.mxu0 0.0
  %385 = vmatpush1.msra.mxu0 0.0
  %386 = vmatprep.subr.mxu0 0.0
  %387 = vmatpush1.msra.mxu0 0.0
  %388 = vmatprep.subr.mxu0 0.0
  %389 = vmatpush1.msra.mxu0 0.0
  %390 = vmatprep.subr.mxu0 0.0
  %391 = vmatpush1.msra.mxu0 0.0
  %392 = vmatprep.subr.mxu0 0.0
  %393 = vmatpush1.msra.mxu0 0.0
  %394 = vmatprep.subr.mxu0 0.0
  %395 = vmatpush1.msra.mxu0 0.0
  %396 = vmatprep.subr.mxu0 0.0
  %397 = vmatpush1.msra.mxu0 0.0
  %398 = vmatprep.subr.mxu0 0.0
  %399 = vmatpush1.msra.mxu0 0.0
  %400 = vmatprep.subr.mxu0 0.0
  %401 = vmatpush1.msra.mxu0 0.0
  %402 = vmatprep.subr.mxu0 0.0
  %403 = vmatpush1.msra.mxu0 0.0
  %404 = vmatprep.subr.mxu0 0.0
  %405 = vmatpush1.msra.mxu0 0.0
  %406 = vmatprep.subr.mxu0 0.0
  %407 = vmatpush1.msra.mxu0 0.0
  %408 = vmatprep.subr.mxu0 0.0
  %409 = vmatpush1.msra.mxu0 0.0
  %410 = vmatprep.subr.mxu0 0.0
  %411 = vmatpush1.msra.mxu0 0.0
  %412 = vmatprep.subr.mxu0 0.0
  %413 = vmatpush1.msra.mxu0 0.0
  %414 = vmatprep.subr.mxu0 0.0
  %415 = vmatpush1.msra.mxu0 0.0
  %416 = vmatprep.subr.mxu0 0.0
  %417 = vmatpush1.msra.mxu0 0.0
  %418 = vmatprep.subr.mxu0 0.0
  %419 = vmatpush1.msra.mxu0 0.0
  %420 = vmatprep.mubr.f32.mxu0 0.0
  %421 = vmatmul.mubr.f32.gmra.mrb[0].mxu0 %v351
  %v422 = vpop.f32.mrb[0].mxu0
  %v423 = vadd.f32 0.0, %v422
  %v424 = vpop.f32.mrb[0].mxu0
  %425 = vmatprep.mubr.f32.mxu0 0.0
  %426 = vmatmul.mubr.f32.gmra.mrb[0].mxu0 %v354
  %v427 = vpop.f32.mrb[0].mxu0
  %v428 = vadd.f32 0.0, %v427
  %v429 = vpop.f32.mrb[0].mxu0
  %430 = vdwg.mxu0
  %431 = vrot.lane.b32.xlu0 %v226, 112
  %v432 = vpop.permute.xlu0 %431
  %433 = vrot.lane.b32.xlu0 %v229, 112
  %v434 = vpop.permute.xlu0 %433
  %435 = vrot.lane.b32.xlu0 %v226, 80
  %v436 = vpop.permute.xlu0 %435
  %437 = vrot.lane.b32.xlu0 %v229, 80
  %v438 = vpop.permute.xlu0 %437
  %v439 = vsel %vm238, %v432, 0
  %v441 = vsel %vm238, %v434, 0
  %v443 = vsel %vm238, %v436, 0
  %v445 = vsel %vm238, %v438, 0
  %447 = vmatprep.subr.mxu0 0.0
  %448 = vmatpush1.xpose.msra.mxu0 %v443
  %449 = vmatprep.subr.mxu0 0.0
  %450 = vmatpush1.xpose.msra.mxu0 %v445
  %451 = vmatprep.subr.mxu0 0.0
  %452 = vmatpush1.xpose.msra.mxu0 0.0
  %453 = vmatprep.subr.mxu0 0.0
  %454 = vmatpush1.xpose.msra.mxu0 0.0
  %455 = vmatprep.subr.mxu0 0.0
  %456 = vmatpush1.xpose.msra.mxu0 0.0
  %457 = vmatprep.subr.mxu0 0.0
  %458 = vmatpush1.xpose.msra.mxu0 0.0
  %459 = vmatprep.subr.mxu0 0.0
  %460 = vmatpush1.xpose.msra.mxu0 0.0
  %461 = vmatprep.subr.mxu0 0.0
  %462 = vmatpush1.xpose.msra.mxu0 0.0
  %463 = vmatprep.subr.mxu0 0.0
  %464 = vmatpush1.xpose.msra.mxu0 0.0
  %465 = vmatprep.subr.mxu0 0.0
  %466 = vmatpush1.xpose.msra.mxu0 0.0
  %467 = vmatprep.subr.mxu0 0.0
  %468 = vmatpush1.xpose.msra.mxu0 0.0
  %469 = vmatprep.subr.mxu0 0.0
  %470 = vmatpush1.xpose.msra.mxu0 0.0
  %471 = vmatprep.subr.mxu0 0.0
  %472 = vmatpush1.xpose.msra.mxu0 0.0
  %473 = vmatprep.subr.mxu0 0.0
  %474 = vmatpush1.xpose.msra.mxu0 0.0
  %475 = vmatprep.subr.mxu0 0.0
  %476 = vmatpush1.xpose.msra.mxu0 0.0
  %477 = vmatprep.subr.mxu0 0.0
  %478 = vmatpush1.xpose.msra.mxu0 0.0
  %479 = vmatprep.subr.mxu0 0.0
  %480 = vmatpush1.xpose.msra.mxu0 0.0
  %481 = vmatprep.subr.mxu0 0.0
  %482 = vmatpush1.xpose.msra.mxu0 0.0
  %483 = vmatprep.subr.mxu0 0.0
  %484 = vmatpush1.xpose.msra.mxu0 0.0
  %485 = vmatprep.subr.mxu0 0.0
  %486 = vmatpush1.xpose.msra.mxu0 0.0
  %487 = vmatprep.subr.mxu0 0.0
  %488 = vmatpush1.xpose.msra.mxu0 0.0
  %489 = vmatprep.subr.mxu0 0.0
  %490 = vmatpush1.xpose.msra.mxu0 0.0
  %491 = vmatprep.subr.mxu0 0.0
  %492 = vmatpush1.xpose.msra.mxu0 0.0
  %493 = vmatprep.subr.mxu0 0.0
  %494 = vmatpush1.xpose.msra.mxu0 0.0
  %495 = vmatprep.subr.mxu0 0.0
  %496 = vmatpush1.xpose.msra.mxu0 0.0
  %497 = vmatprep.subr.mxu0 0.0
  %498 = vmatpush1.xpose.msra.mxu0 0.0
  %499 = vmatprep.subr.mxu0 0.0
  %500 = vmatpush1.xpose.msra.mxu0 0.0
  %501 = vmatprep.subr.mxu0 0.0
  %502 = vmatpush1.xpose.msra.mxu0 0.0
  %503 = vmatprep.subr.mxu0 0.0
  %504 = vmatpush1.xpose.msra.mxu0 0.0
  %505 = vmatprep.subr.mxu0 0.0
  %506 = vmatpush1.xpose.msra.mxu0 0.0
  %507 = vmatprep.subr.mxu0 0.0
  %508 = vmatpush1.xpose.msra.mxu0 0.0
  %509 = vmatprep.subr.mxu0 0.0
  %510 = vmatpush1.xpose.msra.mxu0 0.0
  %511 = vmatprep.mubr.f32.mxu0 0.0
  %512 = vmatmul.mubr.f32.gmra.mrb[0].mxu0 %v439
  %v513 = vpop.f32.mrb[0].mxu0
  %v514 = vadd.f32 %v161, %v513
  %v515 = vpop.f32.mrb[0].mxu0
  %516 = vmatprep.mubr.f32.mxu0 0.0
  %517 = vmatmul.mubr.f32.gmra.mrb[0].mxu0 %v441
  %v518 = vpop.f32.mrb[0].mxu0
  %v519 = vadd.f32 %v162, %v518
  %v520 = vpop.f32.mrb[0].mxu0
  %521 = vdwg.mxu0
  %v522 = vsel %vm238, %v514, -inf
  %523 = vmax.xlane.f32.xlu0 %v522
  %v524 = vpop.xlane.xlu0 %523
  %v525 = vsel %vm238, %v519, -inf
  %526 = vmax.xlane.f32.xlu0 %v525
  %v527 = vpop.xlane.xlu0 %526
  %v528 = vsub.f32 %v514, %v524
  %v529 = vsub.f32 %v519, %v527
  %v530 = vmul.f32 %v528, 1.442695
  %v531 = vpow.pop %v530
  %v532 = vmul.f32 %v529, 1.442695
  %v533 = vpow.pop %v532
  %v534 = vsel %vm238, %v531, 0.0
  %535 = vadd.xlane.f32.xlu0 %v534
  %v536 = vpop.xlane.xlu0 %535
  %v537 = vsel %vm238, %v533, 0.0
  %538 = vadd.xlane.f32.xlu0 %v537
  %v539 = vpop.xlane.xlu0 %538
  %v540 = vrcp.pop %v536
  %v541 = vrcp.pop %v539
  %v542 = vmul.f32 %v531, %v540
  %v543 = vmul.f32 %v533, %v541
  %544 = vrot.lane.b32.xlu0 %v226, 48
  %v545 = vpop.permute.xlu0 %544
  %546 = vrot.lane.b32.xlu0 %v229, 48
  %v547 = vpop.permute.xlu0 %546
  %v551 = vsel %vm238, %v542, 0
  %v554 = vsel %vm238, %v543, 0
  %556 = vmatprep.subr.mxu0 0.0
  %557 = vmatpush1.msra.mxu0 %v545
  %558 = vmatprep.subr.mxu0 0.0
  %559 = vmatpush1.msra.mxu0 %v547
  %560 = vmatprep.subr.mxu0 0.0
  %561 = vmatpush1.msra.mxu0 0.0
  %562 = vmatprep.subr.mxu0 0.0
  %563 = vmatpush1.msra.mxu0 0.0
  %564 = vmatprep.subr.mxu0 0.0
  %565 = vmatpush1.msra.mxu0 0.0
  %566 = vmatprep.subr.mxu0 0.0
  %567 = vmatpush1.msra.mxu0 0.0
  %568 = vmatprep.subr.mxu0 0.0
  %569 = vmatpush1.msra.mxu0 0.0
  %570 = vmatprep.subr.mxu0 0.0
  %571 = vmatpush1.msra.mxu0 0.0
  %572 = vmatprep.subr.mxu0 0.0
  %573 = vmatpush1.msra.mxu0 0.0
  %574 = vmatprep.subr.mxu0 0.0
  %575 = vmatpush1.msra.mxu0 0.0
  %576 = vmatprep.subr.mxu0 0.0
  %577 = vmatpush1.msra.mxu0 0.0
  %578 = vmatprep.subr.mxu0 0.0
  %579 = vmatpush1.msra.mxu0 0.0
  %580 = vmatprep.subr.mxu0 0.0
  %581 = vmatpush1.msra.mxu0 0.0
  %582 = vmatprep.subr.mxu0 0.0
  %583 = vmatpush1.msra.mxu0 0.0
  %584 = vmatprep.subr.mxu0 0.0
  %585 = vmatpush1.msra.mxu0 0.0
  %586 = vmatprep.subr.mxu0 0.0
  %587 = vmatpush1.msra.mxu0 0.0
  %588 = vmatprep.subr.mxu0 0.0
  %589 = vmatpush1.msra.mxu0 0.0
  %590 = vmatprep.subr.mxu0 0.0
  %591 = vmatpush1.msra.mxu0 0.0
  %592 = vmatprep.subr.mxu0 0.0
  %593 = vmatpush1.msra.mxu0 0.0
  %594 = vmatprep.subr.mxu0 0.0
  %595 = vmatpush1.msra.mxu0 0.0
  %596 = vmatprep.subr.mxu0 0.0
  %597 = vmatpush1.msra.mxu0 0.0
  %598 = vmatprep.subr.mxu0 0.0
  %599 = vmatpush1.msra.mxu0 0.0
  %600 = vmatprep.subr.mxu0 0.0
  %601 = vmatpush1.msra.mxu0 0.0
  %602 = vmatprep.subr.mxu0 0.0
  %603 = vmatpush1.msra.mxu0 0.0
  %604 = vmatprep.subr.mxu0 0.0
  %605 = vmatpush1.msra.mxu0 0.0
  %606 = vmatprep.subr.mxu0 0.0
  %607 = vmatpush1.msra.mxu0 0.0
  %608 = vmatprep.subr.mxu0 0.0
  %609 = vmatpush1.msra.mxu0 0.0
  %610 = vmatprep.subr.mxu0 0.0
  %611 = vmatpush1.msra.mxu0 0.0
  %612 = vmatprep.subr.mxu0 0.0
  %613 = vmatpush1.msra.mxu0 0.0
  %614 = vmatprep.subr.mxu0 0.0
  %615 = vmatpush1.msra.mxu0 0.0
  %616 = vmatprep.subr.mxu0 0.0
  %617 = vmatpush1.msra.mxu0 0.0
  %618 = vmatprep.subr.mxu0 0.0
  %619 = vmatpush1.msra.mxu0 0.0
  %620 = vmatprep.mubr.f32.mxu0 0.0
  %621 = vmatmul.mubr.f32.gmra.mrb[0].mxu0 %v551
  %v622 = vpop.f32.mrb[0].mxu0
  %v623 = vadd.f32 0.0, %v622
  %v624 = vpop.f32.mrb[0].mxu0
  %625 = vmatprep.mubr.f32.mxu0 0.0
  %626 = vmatmul.mubr.f32.gmra.mrb[0].mxu0 %v554
  %v627 = vpop.f32.mrb[0].mxu0
  %v628 = vadd.f32 0.0, %v627
  %v629 = vpop.f32.mrb[0].mxu0
  %630 = vdwg.mxu0
  %633 = vrot.lane.b32.xlu0 %v623, 16
  %v634 = vpop.permute.xlu0 %633
  %635 = vrot.lane.b32.xlu0 %v628, 16
  %v636 = vpop.permute.xlu0 %635
  %v639 = vsel %vm238, %v423, %v634
  %v640 = vsel %vm238, %v428, %v636
  %v641 = vpack.c.bf16 %v640, %v639
  %v642 = vld [vmem:[%s6] sm:$0xf]
  %v643 = vld [vmem:[%s6 + $0x4] sm:$0xf]
  %v644 = vld [vmem:[%s6 + $0x8] sm:$0xf]
  %v645 = vld [vmem:[%s6 + $0xc] sm:$0xf]
  %v646 = vld [vmem:[%s7] sm:$0x1]
  %v648 = vlaneseq
  %v649 = vshrl.u32 %v648, 7
  %v650 = vsub.s32 0, %v649
  %v651 = vrot.slane %v646, %v650
  %v657 = vunpack.c.l.b16 %v642
  %v658 = vunpack.c.l.b16 %v643
  %v659 = vunpack.c.l.b16 %v644
  %v660 = vunpack.c.l.b16 %v645
  %v661 = vpack.c.b16 %v658, %v657
  %v662 = vpack.c.b16 %v660, %v659
  %v666 = vsel %vm187, %v641, 0
  %668 = vmatprep.subr.bf16.mxu0 0
  %669 = vmatpush1.bf16.msra.mxu0 %v661
  %670 = vmatprep.subr.bf16.mxu0 0
  %671 = vmatpush1.bf16.msra.mxu0 %v662
  %672 = vmatprep.subr.bf16.mxu0 0
  %673 = vmatpush1.bf16.msra.mxu0 0
  %674 = vmatprep.subr.bf16.mxu0 0
  %675 = vmatpush1.bf16.msra.mxu0 0
  %676 = vmatprep.subr.bf16.mxu0 0
  %677 = vmatpush1.bf16.msra.mxu0 0
  %678 = vmatprep.subr.bf16.mxu0 0
  %679 = vmatpush1.bf16.msra.mxu0 0
  %680 = vmatprep.subr.bf16.mxu0 0
  %681 = vmatpush1.bf16.msra.mxu0 0
  %682 = vmatprep.subr.bf16.mxu0 0
  %683 = vmatpush1.bf16.msra.mxu0 0
  %684 = vmatprep.subr.bf16.mxu0 0
  %685 = vmatpush1.bf16.msra.mxu0 0
  %686 = vmatprep.subr.bf16.mxu0 0
  %687 = vmatpush1.bf16.msra.mxu0 0
  %688 = vmatprep.subr.bf16.mxu0 0
  %689 = vmatpush1.bf16.msra.mxu0 0
  %690 = vmatprep.subr.bf16.mxu0 0
  %691 = vmatpush1.bf16.msra.mxu0 0
  %692 = vmatprep.subr.bf16.mxu0 0
  %693 = vmatpush1.bf16.msra.mxu0 0
  %694 = vmatprep.subr.bf16.mxu0 0
  %695 = vmatpush1.bf16.msra.mxu0 0
  %696 = vmatprep.subr.bf16.mxu0 0
  %697 = vmatpush1.bf16.msra.mxu0 0
  %698 = vmatprep.subr.bf16.mxu0 0
  %699 = vmatpush1.bf16.msra.mxu0 0
  %700 = vmatprep.mubr.bf16.mxu0 0
  %701 = vmatmul.mubr.bf16.gmra.mrb[0].mxu0 %v666
  %v702 = vpop.f32.mrb[0].mxu0
  %v703 = vadd.f32 %v651, %v702
  %v704 = vpop.f32.mrb[0].mxu0
  %v705 = vpop.f32.mrb[0].mxu0
  %v706 = vadd.f32 %v651, %v705
  %v707 = vpop.f32.mrb[0].mxu0
  %708 = vdwg.mxu0
  %v709 = vadd.f32 %v153, %v703
  %v710 = vadd.f32 %v158, %v706
  %v711 = vld [vmem:[%s8] sm:$0x1]
  %s712 = scalar_lea.vmem %s8, 1
  %v713 = vld [vmem:[%s712] sm:$0x1]
  %v714 = vsel %vm187, %v709, 0.0
  %715 = vadd.xlane.f32.xlu0 %v714
  %v716 = vpop.xlane.xlu0 %715
  %v717 = vsel %vm187, %v710, 0.0
  %718 = vadd.xlane.f32.xlu0 %v717
  %v719 = vpop.xlane.xlu0 %718
  %v720 = vrcp.pop 32.0
  %v721 = vmul.f32 %v716, %v720
  %v722 = vmul.f32 %v719, %v720
  %v723 = vsub.f32 %v709, %v721
  %v724 = vsub.f32 %v710, %v722
  %v725 = vmul.f32 %v723, %v723
  %v726 = vmul.f32 %v724, %v724
  %v727 = vsel %vm187, %v725, 0.0
  %728 = vadd.xlane.f32.xlu0 %v727
  %v729 = vpop.xlane.xlu0 %728
  %v730 = vsel %vm187, %v726, 0.0
  %731 = vadd.xlane.f32.xlu0 %v730
  %v732 = vpop.xlane.xlu0 %731
  %v733 = vmul.f32 %v729, %v720
  %v734 = vmul.f32 %v732, %v720
  %v735 = vadd.f32 %v733, 1e-05
  %v736 = vadd.f32 %v734, 1e-05
  %v737 = vrsqrt.pop %v735
  %v738 = vrsqrt.pop %v736
  %v739 = vmul.f32 %v723, %v737
  %v740 = vmul.f32 %v724, %v738
  %v742 = vlaneseq
  %v743 = vshrl.u32 %v742, 7
  %v744 = vsub.s32 0, %v743
  %v745 = vrot.slane %v711, %v744
  %v747 = vmul.f32 %v739, %v745
  %v748 = vmul.f32 %v740, %v745
  %v750 = vlaneseq
  %v751 = vshrl.u32 %v750, 7
  %v752 = vsub.s32 0, %v751
  %v753 = vrot.slane %v713, %v752
  %v755 = vadd.f32 %v747, %v753
  %v756 = vadd.f32 %v748, %v753
  %v757 = vpack.c.bf16 %v756, %v755
  %v758 = vld [vmem:[%s9] sm:$0xff]
  %v759 = vld [vmem:[%s9 + $0x8] sm:$0xff]
  %v760 = vld [vmem:[%s9 + $0x10] sm:$0xff]
  %v761 = vld [vmem:[%s9 + $0x18] sm:$0xff]
  %v762 = vld [vmem:[%s9 + $0x20] sm:$0xff]
  %v763 = vld [vmem:[%s9 + $0x28] sm:$0xff]
  %v764 = vld [vmem:[%s9 + $0x30] sm:$0xff]
  %v765 = vld [vmem:[%s9 + $0x38] sm:$0xff]
  %v766 = vld [vmem:[%s9 + $0x40] sm:$0xff]
  %v767 = vld [vmem:[%s9 + $0x48] sm:$0xff]
  %v768 = vld [vmem:[%s9 + $0x50] sm:$0xff]
  %v769 = vld [vmem:[%s9 + $0x58] sm:$0xff]
  %v770 = vld [vmem:[%s9 + $0x60] sm:$0xff]
  %v771 = vld [vmem:[%s9 + $0x68] sm:$0xff]
  %v772 = vld [vmem:[%s9 + $0x70] sm:$0xff]
  %v773 = vld [vmem:[%s9 + $0x78] sm:$0xff]
  %v774 = vld [vmem:[%s9 + $0x80] sm:$0xff]
  %v775 = vld [vmem:[%s9 + $0x88] sm:$0xff]
  %v776 = vld [vmem:[%s9 + $0x90] sm:$0xff]
  %v777 = vld [vmem:[%s9 + $0x98] sm:$0xff]
  %v778 = vld [vmem:[%s9 + $0xa0] sm:$0xff]
  %v779 = vld [vmem:[%s9 + $0xa8] sm:$0xff]
  %v780 = vld [vmem:[%s9 + $0xb0] sm:$0xff]
  %v781 = vld [vmem:[%s9 + $0xb8] sm:$0xff]
  %v782 = vld [vmem:[%s9 + $0xc0] sm:$0xff]
  %v783 = vld [vmem:[%s9 + $0xc8] sm:$0xff]
  %v784 = vld [vmem:[%s9 + $0xd0] sm:$0xff]
  %v785 = vld [vmem:[%s9 + $0xd8] sm:$0xff]
  %v786 = vld [vmem:[%s9 + $0xe0] sm:$0xff]
  %v787 = vld [vmem:[%s9 + $0xe8] sm:$0xff]
  %v788 = vld [vmem:[%s9 + $0xf0] sm:$0xff]
  %v789 = vld [vmem:[%s9 + $0xf8] sm:$0xff]
  %v790 = vld [vmem:[%s10] sm:$0xff]
  %v791 = vld [vmem:[%s10 + $0x8] sm:$0xff]
  %v794 = vlaneseq
  %v795 = vshrl.u32 %v794, 7
  %v796 = vsub.s32 0, %v795
  %v797 = vrot.slane %v790, %v796
  %v798 = vlaneseq
  %v799 = vshrl.u32 %v798, 7
  %v800 = vsub.s32 1, %v799
  %v801 = vrot.slane %v790, %v800
  %v802 = vlaneseq
  %v803 = vshrl.u32 %v802, 7
  %v804 = vsub.s32 2, %v803
  %v805 = vrot.slane %v790, %v804
  %v806 = vlaneseq
  %v807 = vshrl.u32 %v806, 7
  %v808 = vsub.s32 3, %v807
  %v809 = vrot.slane %v790, %v808
  %v810 = vlaneseq
  %v811 = vshrl.u32 %v810, 7
  %v812 = vsub.s32 4, %v811
  %v813 = vrot.slane %v790, %v812
  %v814 = vlaneseq
  %v815 = vshrl.u32 %v814, 7
  %v816 = vsub.s32 5, %v815
  %v817 = vrot.slane %v790, %v816
  %v818 = vlaneseq
  %v819 = vshrl.u32 %v818, 7
  %v820 = vsub.s32 6, %v819
  %v821 = vrot.slane %v790, %v820
  %v822 = vlaneseq
  %v823 = vshrl.u32 %v822, 7
  %v824 = vsub.s32 7, %v823
  %v825 = vrot.slane %v790, %v824
  %v826 = vlaneseq
  %v827 = vshrl.u32 %v826, 7
  %v828 = vsub.s32 0, %v827
  %v829 = vrot.slane %v791, %v828
  %v830 = vlaneseq
  %v831 = vshrl.u32 %v830, 7
  %v832 = vsub.s32 1, %v831
  %v833 = vrot.slane %v791, %v832
  %v834 = vlaneseq
  %v835 = vshrl.u32 %v834, 7
  %v836 = vsub.s32 2, %v835
  %v837 = vrot.slane %v791, %v836
  %v838 = vlaneseq
  %v839 = vshrl.u32 %v838, 7
  %v840 = vsub.s32 3, %v839
  %v841 = vrot.slane %v791, %v840
  %v842 = vlaneseq
  %v843 = vshrl.u32 %v842, 7
  %v844 = vsub.s32 4, %v843
  %v845 = vrot.slane %v791, %v844
  %v846 = vlaneseq
  %v847 = vshrl.u32 %v846, 7
  %v848 = vsub.s32 5, %v847
  %v849 = vrot.slane %v791, %v848
  %v850 = vlaneseq
  %v851 = vshrl.u32 %v850, 7
  %v852 = vsub.s32 6, %v851
  %v853 = vrot.slane %v791, %v852
  %v854 = vlaneseq
  %v855 = vshrl.u32 %v854, 7
  %v856 = vsub.s32 7, %v855
  %v857 = vrot.slane %v791, %v856
  %v906 = vunpack.c.l.b16 %v758
  %v907 = vunpack.c.h.b16 %v758
  %v908 = vunpack.c.l.b16 %v759
  %v909 = vunpack.c.h.b16 %v759
  %v910 = vunpack.c.l.b16 %v760
  %v911 = vunpack.c.h.b16 %v760
  %v912 = vunpack.c.l.b16 %v761
  %v913 = vunpack.c.h.b16 %v761
  %v914 = vunpack.c.l.b16 %v762
  %v915 = vunpack.c.h.b16 %v762
  %v916 = vunpack.c.l.b16 %v763
  %v917 = vunpack.c.h.b16 %v763
  %v918 = vunpack.c.l.b16 %v764
  %v919 = vunpack.c.h.b16 %v764
  %v920 = vunpack.c.l.b16 %v765
  %v921 = vunpack.c.h.b16 %v765
  %v922 = vunpack.c.l.b16 %v766
  %v923 = vunpack.c.h.b16 %v766
  %v924 = vunpack.c.l.b16 %v767
  %v925 = vunpack.c.h.b16 %v767
  %v926 = vunpack.c.l.b16 %v768
  %v927 = vunpack.c.h.b16 %v768
  %v928 = vunpack.c.l.b16 %v769
  %v929 = vunpack.c.h.b16 %v769
  %v930 = vunpack.c.l.b16 %v770
  %v931 = vunpack.c.h.b16 %v770
  %v932 = vunpack.c.l.b16 %v771
  %v933 = vunpack.c.h.b16 %v771
  %v934 = vunpack.c.l.b16 %v772
  %v935 = vunpack.c.h.b16 %v772
  %v936 = vunpack.c.l.b16 %v773
  %v937 = vunpack.c.h.b16 %v773
  %v938 = vunpack.c.l.b16 %v774
  %v939 = vunpack.c.h.b16 %v774
  %v940 = vunpack.c.l.b16 %v775
  %v941 = vunpack.c.h.b16 %v775
  %v942 = vunpack.c.l.b16 %v776
  %v943 = vunpack.c.h.b16 %v776
  %v944 = vunpack.c.l.b16 %v777
  %v945 = vunpack.c.h.b16 %v777
  %v946 = vunpack.c.l.b16 %v778
  %v947 = vunpack.c.h.b16 %v778
  %v948 = vunpack.c.l.b16 %v779
  %v949 = vunpack.c.h.b16 %v779
  %v950 = vunpack.c.l.b16 %v780
  %v951 = vunpack.c.h.b16 %v780
  %v952 = vunpack.c.l.b16 %v781
  %v953 = vunpack.c.h.b16 %v781
  %v954 = vunpack.c.l.b16 %v782
  %v955 = vunpack.c.h.b16 %v782
  %v956 = vunpack.c.l.b16 %v783
  %v957 = vunpack.c.h.b16 %v783
  %v958 = vunpack.c.l.b16 %v784
  %v959 = vunpack.c.h.b16 %v784
  %v960 = vunpack.c.l.b16 %v785
  %v961 = vunpack.c.h.b16 %v785
  %v962 = vunpack.c.l.b16 %v786
  %v963 = vunpack.c.h.b16 %v786
  %v964 = vunpack.c.l.b16 %v787
  %v965 = vunpack.c.h.b16 %v787
  %v966 = vunpack.c.l.b16 %v788
  %v967 = vunpack.c.h.b16 %v788
  %v968 = vunpack.c.l.b16 %v789
  %v969 = vunpack.c.h.b16 %v789
  %v970 = vpack.c.b16 %v922, %v906
  %v971 = vpack.c.b16 %v923, %v907
  %v972 = vpack.c.b16 %v924, %v908
  %v973 = vpack.c.b16 %v925, %v909
  %v974 = vpack.c.b16 %v926, %v910
  %v975 = vpack.c.b16 %v927, %v911
  %v976 = vpack.c.b16 %v928, %v912
  %v977 = vpack.c.b16 %v929, %v913
  %v978 = vpack.c.b16 %v930, %v914
  %v979 = vpack.c.b16 %v931, %v915
  %v980 = vpack.c.b16 %v932, %v916
  %v981 = vpack.c.b16 %v933, %v917
  %v982 = vpack.c.b16 %v934, %v918
  %v983 = vpack.c.b16 %v935, %v919
  %v984 = vpack.c.b16 %v936, %v920
  %v985 = vpack.c.b16 %v937, %v921
  %v986 = vpack.c.b16 %v954, %v938
  %v987 = vpack.c.b16 %v955, %v939
  %v988 = vpack.c.b16 %v956, %v940
  %v989 = vpack.c.b16 %v957, %v941
  %v990 = vpack.c.b16 %v958, %v942
  %v991 = vpack.c.b16 %v959, %v943
  %v992 = vpack.c.b16 %v960, %v944
  %v993 = vpack.c.b16 %v961, %v945
  %v994 = vpack.c.b16 %v962, %v946
  %v995 = vpack.c.b16 %v963, %v947
  %v996 = vpack.c.b16 %v964, %v948
  %v997 = vpack.c.b16 %v965, %v949
  %v998 = vpack.c.b16 %v966, %v950
  %v999 = vpack.c.b16 %v967, %v951
  %v1000 = vpack.c.b16 %v968, %v952
  %v1001 = vpack.c.b16 %v969, %v953
  %v1035 = vsel %vm187, %v757, 0
  %1037 = vmatprep.subr.bf16.mxu0 %v971
  %1038 = vmatpush1.bf16.msra.mxu0 %v970
  %1039 = vmatprep.subr.bf16.mxu0 %v987
  %1040 = vmatpush1.bf16.msra.mxu0 %v986
  %1041 = vmatprep.subr.bf16.mxu0 0
  %1042 = vmatpush1.bf16.msra.mxu0 0
  %1043 = vmatprep.subr.bf16.mxu0 0
  %1044 = vmatpush1.bf16.msra.mxu0 0
  %1045 = vmatprep.subr.bf16.mxu0 0
  %1046 = vmatpush1.bf16.msra.mxu0 0
  %1047 = vmatprep.subr.bf16.mxu0 0
  %1048 = vmatpush1.bf16.msra.mxu0 0
  %1049 = vmatprep.subr.bf16.mxu0 0
  %1050 = vmatpush1.bf16.msra.mxu0 0
  %1051 = vmatprep.subr.bf16.mxu0 0
  %1052 = vmatpush1.bf16.msra.mxu0 0
  %1053 = vmatprep.subr.bf16.mxu0 0
  %1054 = vmatpush1.bf16.msra.mxu0 0
  %1055 = vmatprep.subr.bf16.mxu0 0
  %1056 = vmatpush1.bf16.msra.mxu0 0
  %1057 = vmatprep.subr.bf16.mxu0 0
  %1058 = vmatpush1.bf16.msra.mxu0 0
  %1059 = vmatprep.subr.bf16.mxu0 0
  %1060 = vmatpush1.bf16.msra.mxu0 0
  %1061 = vmatprep.subr.bf16.mxu0 0
  %1062 = vmatpush1.bf16.msra.mxu0 0
  %1063 = vmatprep.subr.bf16.mxu0 0
  %1064 = vmatpush1.bf16.msra.mxu0 0
  %1065 = vmatprep.subr.bf16.mxu0 0
  %1066 = vmatpush1.bf16.msra.mxu0 0
  %1067 = vmatprep.subr.bf16.mxu0 0
  %1068 = vmatpush1.bf16.msra.mxu0 0
  %1069 = vmatprep.mubr.bf16.mxu0 0
  %1070 = vmatmul.mubr.bf16.gmra.mrb[0].mxu0 %v1035
  %v1071 = vpop.f32.mrb[0].mxu0
  %v1072 = vadd.f32 %v797, %v1071
  %v1073 = vpop.f32.mrb[0].mxu0
  %v1074 = vadd.f32 %v801, %v1073
  %v1075 = vpop.f32.mrb[0].mxu0
  %v1076 = vadd.f32 %v797, %v1075
  %v1077 = vpop.f32.mrb[0].mxu0
  %v1078 = vadd.f32 %v801, %v1077
  %1079 = vdwg.mxu0
  %1080 = vmatprep.subr.bf16.mxu0 %v973
  %1081 = vmatpush1.bf16.msra.mxu0 %v972
  %1082 = vmatprep.subr.bf16.mxu0 %v989
  %1083 = vmatpush1.bf16.msra.mxu0 %v988
  %1084 = vmatprep.subr.bf16.mxu0 0
  %1085 = vmatpush1.bf16.msra.mxu0 0
  %1086 = vmatprep.subr.bf16.mxu0 0
  %1087 = vmatpush1.bf16.msra.mxu0 0
  %1088 = vmatprep.subr.bf16.mxu0 0
  %1089 = vmatpush1.bf16.msra.mxu0 0
  %1090 = vmatprep.subr.bf16.mxu0 0
  %1091 = vmatpush1.bf16.msra.mxu0 0
  %1092 = vmatprep.subr.bf16.mxu0 0
  %1093 = vmatpush1.bf16.msra.mxu0 0
  %1094 = vmatprep.subr.bf16.mxu0 0
  %1095 = vmatpush1.bf16.msra.mxu0 0
  %1096 = vmatprep.subr.bf16.mxu0 0
  %1097 = vmatpush1.bf16.msra.mxu0 0
  %1098 = vmatprep.subr.bf16.mxu0 0
  %1099 = vmatpush1.bf16.msra.mxu0 0
  %1100 = vmatprep.subr.bf16.mxu0 0
  %1101 = vmatpush1.bf16.msra.mxu0 0
  %1102 = vmatprep.subr.bf16.mxu0 0
  %1103 = vmatpush1.bf16.msra.mxu0 0
  %1104 = vmatprep.subr.bf16.mxu0 0
  %1105 = vmatpush1.bf16.msra.mxu0 0
  %1106 = vmatprep.subr.bf16.mxu0 0
  %1107 = vmatpush1.bf16.msra.mxu0 0
  %1108 = vmatprep.subr.bf16.mxu0 0
  %1109 = vmatpush1.bf16.msra.mxu0 0
  %1110 = vmatprep.subr.bf16.mxu0 0
  %1111 = vmatpush1.bf16.msra.mxu0 0
  %1112 = vmatprep.mubr.bf16.mxu0 0
  %1113 = vmatmul.mubr.bf16.gmra.mrb[0].mxu0 %v1035
  %v1114 = vpop.f32.mrb[0].mxu0
  %v1115 = vadd.f32 %v805, %v1114
  %v1116 = vpop.f32.mrb[0].mxu0
  %v1117 = vadd.f32 %v809, %v1116
  %v1118 = vpop.f32.mrb[0].mxu0
  %v1119 = vadd.f32 %v805, %v1118
  %v1120 = vpop.f32.mrb[0].mxu0
  %v1121 = vadd.f32 %v809, %v1120
  %1122 = vdwg.mxu0
  %1123 = vmatprep.subr.bf16.mxu0 %v975
  %1124 = vmatpush1.bf16.msra.mxu0 %v974
  %1125 = vmatprep.subr.bf16.mxu0 %v991
  %1126 = vmatpush1.bf16.msra.mxu0 %v990
  %1127 = vmatprep.subr.bf16.mxu0 0
  %1128 = vmatpush1.bf16.msra.mxu0 0
  %1129 = vmatprep.subr.bf16.mxu0 0
  %1130 = vmatpush1.bf16.msra.mxu0 0
  %1131 = vmatprep.subr.bf16.mxu0 0
  %1132 = vmatpush1.bf16.msra.mxu0 0
  %1133 = vmatprep.subr.bf16.mxu0 0
  %1134 = vmatpush1.bf16.msra.mxu0 0
  %1135 = vmatprep.subr.bf16.mxu0 0
  %1136 = vmatpush1.bf16.msra.mxu0 0
  %1137 = vmatprep.subr.bf16.mxu0 0
  %1138 = vmatpush1.bf16.msra.mxu0 0
  %1139 = vmatprep.subr.bf16.mxu0 0
  %1140 = vmatpush1.bf16.msra.mxu0 0
  %1141 = vmatprep.subr.bf16.mxu0 0
  %1142 = vmatpush1.bf16.msra.mxu0 0
  %1143 = vmatprep.subr.bf16.mxu0 0
  %1144 = vmatpush1.bf16.msra.mxu0 0
  %1145 = vmatprep.subr.bf16.mxu0 0
  %1146 = vmatpush1.bf16.msra.mxu0 0
  %1147 = vmatprep.subr.bf16.mxu0 0
  %1148 = vmatpush1.bf16.msra.mxu0 0
  %1149 = vmatprep.subr.bf16.mxu0 0
  %1150 = vmatpush1.bf16.msra.mxu0 0
  %1151 = vmatprep.subr.bf16.mxu0 0
  %1152 = vmatpush1.bf16.msra.mxu0 0
  %1153 = vmatprep.subr.bf16.mxu0 0
  %1154 = vmatpush1.bf16.msra.mxu0 0
  %1155 = vmatprep.mubr.bf16.mxu0 0
  %1156 = vmatmul.mubr.bf16.gmra.mrb[0].mxu0 %v1035
  %v1157 = vpop.f32.mrb[0].mxu0
  %v1158 = vadd.f32 %v813, %v1157
  %v1159 = vpop.f32.mrb[0].mxu0
  %v1160 = vadd.f32 %v817, %v1159
  %v1161 = vpop.f32.mrb[0].mxu0
  %v1162 = vadd.f32 %v813, %v1161
  %v1163 = vpop.f32.mrb[0].mxu0
  %v1164 = vadd.f32 %v817, %v1163
  %1165 = vdwg.mxu0
  %1166 = vmatprep.subr.bf16.mxu0 %v977
  %1167 = vmatpush1.bf16.msra.mxu0 %v976
  %1168 = vmatprep.subr.bf16.mxu0 %v993
  %1169 = vmatpush1.bf16.msra.mxu0 %v992
  %1170 = vmatprep.subr.bf16.mxu0 0
  %1171 = vmatpush1.bf16.msra.mxu0 0
  %1172 = vmatprep.subr.bf16.mxu0 0
  %1173 = vmatpush1.bf16.msra.mxu0 0
  %1174 = vmatprep.subr.bf16.mxu0 0
  %1175 = vmatpush1.bf16.msra.mxu0 0
  %1176 = vmatprep.subr.bf16.mxu0 0
  %1177 = vmatpush1.bf16.msra.mxu0 0
  %1178 = vmatprep.subr.bf16.mxu0 0
  %1179 = vmatpush1.bf16.msra.mxu0 0
  %1180 = vmatprep.subr.bf16.mxu0 0
  %1181 = vmatpush1.bf16.msra.mxu0 0
  %1182 = vmatprep.subr.bf16.mxu0 0
  %1183 = vmatpush1.bf16.msra.mxu0 0
  %1184 = vmatprep.subr.bf16.mxu0 0
  %1185 = vmatpush1.bf16.msra.mxu0 0
  %1186 = vmatprep.subr.bf16.mxu0 0
  %1187 = vmatpush1.bf16.msra.mxu0 0
  %1188 = vmatprep.subr.bf16.mxu0 0
  %1189 = vmatpush1.bf16.msra.mxu0 0
  %1190 = vmatprep.subr.bf16.mxu0 0
  %1191 = vmatpush1.bf16.msra.mxu0 0
  %1192 = vmatprep.subr.bf16.mxu0 0
  %1193 = vmatpush1.bf16.msra.mxu0 0
  %1194 = vmatprep.subr.bf16.mxu0 0
  %1195 = vmatpush1.bf16.msra.mxu0 0
  %1196 = vmatprep.subr.bf16.mxu0 0
  %1197 = vmatpush1.bf16.msra.mxu0 0
  %1198 = vmatprep.mubr.bf16.mxu0 0
  %1199 = vmatmul.mubr.bf16.gmra.mrb[0].mxu0 %v1035
  %v1200 = vpop.f32.mrb[0].mxu0
  %v1201 = vadd.f32 %v821, %v1200
  %v1202 = vpop.f32.mrb[0].mxu0
  %v1203 = vadd.f32 %v825, %v1202
  %v1204 = vpop.f32.mrb[0].mxu0
  %v1205 = vadd.f32 %v821, %v1204
  %v1206 = vpop.f32.mrb[0].mxu0
  %v1207 = vadd.f32 %v825, %v1206
  %1208 = vdwg.mxu0
  %1209 = vmatprep.subr.bf16.mxu0 %v979
  %1210 = vmatpush1.bf16.msra.mxu0 %v978
  %1211 = vmatprep.subr.bf16.mxu0 %v995
  %1212 = vmatpush1.bf16.msra.mxu0 %v994
  %1213 = vmatprep.subr.bf16.mxu0 0
  %1214 = vmatpush1.bf16.msra.mxu0 0
  %1215 = vmatprep.subr.bf16.mxu0 0
  %1216 = vmatpush1.bf16.msra.mxu0 0
  %1217 = vmatprep.subr.bf16.mxu0 0
  %1218 = vmatpush1.bf16.msra.mxu0 0
  %1219 = vmatprep.subr.bf16.mxu0 0
  %1220 = vmatpush1.bf16.msra.mxu0 0
  %1221 = vmatprep.subr.bf16.mxu0 0
  %1222 = vmatpush1.bf16.msra.mxu0 0
  %1223 = vmatprep.subr.bf16.mxu0 0
  %1224 = vmatpush1.bf16.msra.mxu0 0
  %1225 = vmatprep.subr.bf16.mxu0 0
  %1226 = vmatpush1.bf16.msra.mxu0 0
  %1227 = vmatprep.subr.bf16.mxu0 0
  %1228 = vmatpush1.bf16.msra.mxu0 0
  %1229 = vmatprep.subr.bf16.mxu0 0
  %1230 = vmatpush1.bf16.msra.mxu0 0
  %1231 = vmatprep.subr.bf16.mxu0 0
  %1232 = vmatpush1.bf16.msra.mxu0 0
  %1233 = vmatprep.subr.bf16.mxu0 0
  %1234 = vmatpush1.bf16.msra.mxu0 0
  %1235 = vmatprep.subr.bf16.mxu0 0
  %1236 = vmatpush1.bf16.msra.mxu0 0
  %1237 = vmatprep.subr.bf16.mxu0 0
  %1238 = vmatpush1.bf16.msra.mxu0 0
  %1239 = vmatprep.subr.bf16.mxu0 0
  %1240 = vmatpush1.bf16.msra.mxu0 0
  %1241 = vmatprep.mubr.bf16.mxu0 0
  %1242 = vmatmul.mubr.bf16.gmra.mrb[0].mxu0 %v1035
  %v1243 = vpop.f32.mrb[0].mxu0
  %v1244 = vadd.f32 %v829, %v1243
  %v1245 = vpop.f32.mrb[0].mxu0
  %v1246 = vadd.f32 %v833, %v1245
  %v1247 = vpop.f32.mrb[0].mxu0
  %v1248 = vadd.f32 %v829, %v1247
  %v1249 = vpop.f32.mrb[0].mxu0
  %v1250 = vadd.f32 %v833, %v1249
  %1251 = vdwg.mxu0
  %1252 = vmatprep.subr.bf16.mxu0 %v981
  %1253 = vmatpush1.bf16.msra.mxu0 %v980
  %1254 = vmatprep.subr.bf16.mxu0 %v997
  %1255 = vmatpush1.bf16.msra.mxu0 %v996
  %1256 = vmatprep.subr.bf16.mxu0 0
  %1257 = vmatpush1.bf16.msra.mxu0 0
  %1258 = vmatprep.subr.bf16.mxu0 0
  %1259 = vmatpush1.bf16.msra.mxu0 0
  %1260 = vmatprep.subr.bf16.mxu0 0
  %1261 = vmatpush1.bf16.msra.mxu0 0
  %1262 = vmatprep.subr.bf16.mxu0 0
  %1263 = vmatpush1.bf16.msra.mxu0 0
  %1264 = vmatprep.subr.bf16.mxu0 0
  %1265 = vmatpush1.bf16.msra.mxu0 0
  %1266 = vmatprep.subr.bf16.mxu0 0
  %1267 = vmatpush1.bf16.msra.mxu0 0
  %1268 = vmatprep.subr.bf16.mxu0 0
  %1269 = vmatpush1.bf16.msra.mxu0 0
  %1270 = vmatprep.subr.bf16.mxu0 0
  %1271 = vmatpush1.bf16.msra.mxu0 0
  %1272 = vmatprep.subr.bf16.mxu0 0
  %1273 = vmatpush1.bf16.msra.mxu0 0
  %1274 = vmatprep.subr.bf16.mxu0 0
  %1275 = vmatpush1.bf16.msra.mxu0 0
  %1276 = vmatprep.subr.bf16.mxu0 0
  %1277 = vmatpush1.bf16.msra.mxu0 0
  %1278 = vmatprep.subr.bf16.mxu0 0
  %1279 = vmatpush1.bf16.msra.mxu0 0
  %1280 = vmatprep.subr.bf16.mxu0 0
  %1281 = vmatpush1.bf16.msra.mxu0 0
  %1282 = vmatprep.subr.bf16.mxu0 0
  %1283 = vmatpush1.bf16.msra.mxu0 0
  %1284 = vmatprep.mubr.bf16.mxu0 0
  %1285 = vmatmul.mubr.bf16.gmra.mrb[0].mxu0 %v1035
  %v1286 = vpop.f32.mrb[0].mxu0
  %v1287 = vadd.f32 %v837, %v1286
  %v1288 = vpop.f32.mrb[0].mxu0
  %v1289 = vadd.f32 %v841, %v1288
  %v1290 = vpop.f32.mrb[0].mxu0
  %v1291 = vadd.f32 %v837, %v1290
  %v1292 = vpop.f32.mrb[0].mxu0
  %v1293 = vadd.f32 %v841, %v1292
  %1294 = vdwg.mxu0
  %1295 = vmatprep.subr.bf16.mxu0 %v983
  %1296 = vmatpush1.bf16.msra.mxu0 %v982
  %1297 = vmatprep.subr.bf16.mxu0 %v999
  %1298 = vmatpush1.bf16.msra.mxu0 %v998
  %1299 = vmatprep.subr.bf16.mxu0 0
  %1300 = vmatpush1.bf16.msra.mxu0 0
  %1301 = vmatprep.subr.bf16.mxu0 0
  %1302 = vmatpush1.bf16.msra.mxu0 0
  %1303 = vmatprep.subr.bf16.mxu0 0
  %1304 = vmatpush1.bf16.msra.mxu0 0
  %1305 = vmatprep.subr.bf16.mxu0 0
  %1306 = vmatpush1.bf16.msra.mxu0 0
  %1307 = vmatprep.subr.bf16.mxu0 0
  %1308 = vmatpush1.bf16.msra.mxu0 0
  %1309 = vmatprep.subr.bf16.mxu0 0
  %1310 = vmatpush1.bf16.msra.mxu0 0
  %1311 = vmatprep.subr.bf16.mxu0 0
  %1312 = vmatpush1.bf16.msra.mxu0 0
  %1313 = vmatprep.subr.bf16.mxu0 0
  %1314 = vmatpush1.bf16.msra.mxu0 0
  %1315 = vmatprep.subr.bf16.mxu0 0
  %1316 = vmatpush1.bf16.msra.mxu0 0
  %1317 = vmatprep.subr.bf16.mxu0 0
  %1318 = vmatpush1.bf16.msra.mxu0 0
  %1319 = vmatprep.subr.bf16.mxu0 0
  %1320 = vmatpush1.bf16.msra.mxu0 0
  %1321 = vmatprep.subr.bf16.mxu0 0
  %1322 = vmatpush1.bf16.msra.mxu0 0
  %1323 = vmatprep.subr.bf16.mxu0 0
  %1324 = vmatpush1.bf16.msra.mxu0 0
  %1325 = vmatprep.subr.bf16.mxu0 0
  %1326 = vmatpush1.bf16.msra.mxu0 0
  %1327 = vmatprep.mubr.bf16.mxu0 0
  %1328 = vmatmul.mubr.bf16.gmra.mrb[0].mxu0 %v1035
  %v1329 = vpop.f32.mrb[0].mxu0
  %v1330 = vadd.f32 %v845, %v1329
  %v1331 = vpop.f32.mrb[0].mxu0
  %v1332 = vadd.f32 %v849, %v1331
  %v1333 = vpop.f32.mrb[0].mxu0
  %v1334 = vadd.f32 %v845, %v1333
  %v1335 = vpop.f32.mrb[0].mxu0
  %v1336 = vadd.f32 %v849, %v1335
  %1337 = vdwg.mxu0
  %1338 = vmatprep.subr.bf16.mxu0 %v985
  %1339 = vmatpush1.bf16.msra.mxu0 %v984
  %1340 = vmatprep.subr.bf16.mxu0 %v1001
  %1341 = vmatpush1.bf16.msra.mxu0 %v1000
  %1342 = vmatprep.subr.bf16.mxu0 0
  %1343 = vmatpush1.bf16.msra.mxu0 0
  %1344 = vmatprep.subr.bf16.mxu0 0
  %1345 = vmatpush1.bf16.msra.mxu0 0
  %1346 = vmatprep.subr.bf16.mxu0 0
  %1347 = vmatpush1.bf16.msra.mxu0 0
  %1348 = vmatprep.subr.bf16.mxu0 0
  %1349 = vmatpush1.bf16.msra.mxu0 0
  %1350 = vmatprep.subr.bf16.mxu0 0
  %1351 = vmatpush1.bf16.msra.mxu0 0
  %1352 = vmatprep.subr.bf16.mxu0 0
  %1353 = vmatpush1.bf16.msra.mxu0 0
  %1354 = vmatprep.subr.bf16.mxu0 0
  %1355 = vmatpush1.bf16.msra.mxu0 0
  %1356 = vmatprep.subr.bf16.mxu0 0
  %1357 = vmatpush1.bf16.msra.mxu0 0
  %1358 = vmatprep.subr.bf16.mxu0 0
  %1359 = vmatpush1.bf16.msra.mxu0 0
  %1360 = vmatprep.subr.bf16.mxu0 0
  %1361 = vmatpush1.bf16.msra.mxu0 0
  %1362 = vmatprep.subr.bf16.mxu0 0
  %1363 = vmatpush1.bf16.msra.mxu0 0
  %1364 = vmatprep.subr.bf16.mxu0 0
  %1365 = vmatpush1.bf16.msra.mxu0 0
  %1366 = vmatprep.subr.bf16.mxu0 0
  %1367 = vmatpush1.bf16.msra.mxu0 0
  %1368 = vmatprep.subr.bf16.mxu0 0
  %1369 = vmatpush1.bf16.msra.mxu0 0
  %1370 = vmatprep.mubr.bf16.mxu0 0
  %1371 = vmatmul.mubr.bf16.gmra.mrb[0].mxu0 %v1035
  %v1372 = vpop.f32.mrb[0].mxu0
  %v1373 = vadd.f32 %v853, %v1372
  %v1374 = vpop.f32.mrb[0].mxu0
  %v1375 = vadd.f32 %v857, %v1374
  %v1376 = vpop.f32.mrb[0].mxu0
  %v1377 = vadd.f32 %v853, %v1376
  %v1378 = vpop.f32.mrb[0].mxu0
  %v1379 = vadd.f32 %v857, %v1378
  %1380 = vdwg.mxu0
  %v1381 = vmax.f32 %v1072, 0.0
  %v1382 = vmax.f32 %v1074, 0.0
  %v1383 = vmax.f32 %v1115, 0.0
  %v1384 = vmax.f32 %v1117, 0.0
  %v1385 = vmax.f32 %v1158, 0.0
  %v1386 = vmax.f32 %v1160, 0.0
  %v1387 = vmax.f32 %v1201, 0.0
  %v1388 = vmax.f32 %v1203, 0.0
  %v1389 = vmax.f32 %v1244, 0.0
  %v1390 = vmax.f32 %v1246, 0.0
  %v1391 = vmax.f32 %v1287, 0.0
  %v1392 = vmax.f32 %v1289, 0.0
  %v1393 = vmax.f32 %v1330, 0.0
  %v1394 = vmax.f32 %v1332, 0.0
  %v1395 = vmax.f32 %v1373, 0.0
  %v1396 = vmax.f32 %v1375, 0.0
  %v1397 = vmax.f32 %v1076, 0.0
  %v1398 = vmax.f32 %v1078, 0.0
  %v1399 = vmax.f32 %v1119, 0.0
  %v1400 = vmax.f32 %v1121, 0.0
  %v1401 = vmax.f32 %v1162, 0.0
  %v1402 = vmax.f32 %v1164, 0.0
  %v1403 = vmax.f32 %v1205, 0.0
  %v1404 = vmax.f32 %v1207, 0.0
  %v1405 = vmax.f32 %v1248, 0.0
  %v1406 = vmax.f32 %v1250, 0.0
  %v1407 = vmax.f32 %v1291, 0.0
  %v1408 = vmax.f32 %v1293, 0.0
  %v1409 = vmax.f32 %v1334, 0.0
  %v1410 = vmax.f32 %v1336, 0.0
  %v1411 = vmax.f32 %v1377, 0.0
  %v1412 = vmax.f32 %v1379, 0.0
  %v1413 = vpack.c.bf16 %v1397, %v1381
  %v1414 = vpack.c.bf16 %v1398, %v1382
  %v1415 = vpack.c.bf16 %v1399, %v1383
  %v1416 = vpack.c.bf16 %v1400, %v1384
  %v1417 = vpack.c.bf16 %v1401, %v1385
  %v1418 = vpack.c.bf16 %v1402, %v1386
  %v1419 = vpack.c.bf16 %v1403, %v1387
  %v1420 = vpack.c.bf16 %v1404, %v1388
  %v1421 = vpack.c.bf16 %v1405, %v1389
  %v1422 = vpack.c.bf16 %v1406, %v1390
  %v1423 = vpack.c.bf16 %v1407, %v1391
  %v1424 = vpack.c.bf16 %v1408, %v1392
  %v1425 = vpack.c.bf16 %v1409, %v1393
  %v1426 = vpack.c.bf16 %v1410, %v1394
  %v1427 = vpack.c.bf16 %v1411, %v1395
  %v1428 = vpack.c.bf16 %v1412, %v1396
  %v1429 = vld [vmem:[%s11] sm:$0xf]
  %v1430 = vld [vmem:[%s11 + $0x4] sm:$0xf]
  %v1431 = vld [vmem:[%s11 + $0x8] sm:$0xf]
  %v1432 = vld [vmem:[%s11 + $0xc] sm:$0xf]
  %v1433 = vld [vmem:[%s11 + $0x10] sm:$0xf]
  %v1434 = vld [vmem:[%s11 + $0x14] sm:$0xf]
  %v1435 = vld [vmem:[%s11 + $0x18] sm:$0xf]
  %v1436 = vld [vmem:[%s11 + $0x1c] sm:$0xf]
  %v1437 = vld [vmem:[%s11 + $0x20] sm:$0xf]
  %v1438 = vld [vmem:[%s11 + $0x24] sm:$0xf]
  %v1439 = vld [vmem:[%s11 + $0x28] sm:$0xf]
  %v1440 = vld [vmem:[%s11 + $0x2c] sm:$0xf]
  %v1441 = vld [vmem:[%s11 + $0x30] sm:$0xf]
  %v1442 = vld [vmem:[%s11 + $0x34] sm:$0xf]
  %v1443 = vld [vmem:[%s11 + $0x38] sm:$0xf]
  %v1444 = vld [vmem:[%s11 + $0x3c] sm:$0xf]
  %v1445 = vld [vmem:[%s11 + $0x40] sm:$0xf]
  %v1446 = vld [vmem:[%s11 + $0x44] sm:$0xf]
  %v1447 = vld [vmem:[%s11 + $0x48] sm:$0xf]
  %v1448 = vld [vmem:[%s11 + $0x4c] sm:$0xf]
  %v1449 = vld [vmem:[%s11 + $0x50] sm:$0xf]
  %v1450 = vld [vmem:[%s11 + $0x54] sm:$0xf]
  %v1451 = vld [vmem:[%s11 + $0x58] sm:$0xf]
  %v1452 = vld [vmem:[%s11 + $0x5c] sm:$0xf]
  %v1453 = vld [vmem:[%s11 + $0x60] sm:$0xf]
  %v1454 = vld [vmem:[%s11 + $0x64] sm:$0xf]
  %v1455 = vld [vmem:[%s11 + $0x68] sm:$0xf]
  %v1456 = vld [vmem:[%s11 + $0x6c] sm:$0xf]
  %v1457 = vld [vmem:[%s11 + $0x70] sm:$0xf]
  %v1458 = vld [vmem:[%s11 + $0x74] sm:$0xf]
  %v1459 = vld [vmem:[%s11 + $0x78] sm:$0xf]
  %v1460 = vld [vmem:[%s11 + $0x7c] sm:$0xf]
  %v1461 = vld [vmem:[%s11 + $0x80] sm:$0xf]
  %v1462 = vld [vmem:[%s11 + $0x84] sm:$0xf]
  %v1463 = vld [vmem:[%s11 + $0x88] sm:$0xf]
  %v1464 = vld [vmem:[%s11 + $0x8c] sm:$0xf]
  %v1465 = vld [vmem:[%s11 + $0x90] sm:$0xf]
  %v1466 = vld [vmem:[%s11 + $0x94] sm:$0xf]
  %v1467 = vld [vmem:[%s11 + $0x98] sm:$0xf]
  %v1468 = vld [vmem:[%s11 + $0x9c] sm:$0xf]
  %v1469 = vld [vmem:[%s11 + $0xa0] sm:$0xf]
  %v1470 = vld [vmem:[%s11 + $0xa4] sm:$0xf]
  %v1471 = vld [vmem:[%s11 + $0xa8] sm:$0xf]
  %v1472 = vld [vmem:[%s11 + $0xac] sm:$0xf]
  %v1473 = vld [vmem:[%s11 + $0xb0] sm:$0xf]
  %v1474 = vld [vmem:[%s11 + $0xb4] sm:$0xf]
  %v1475 = vld [vmem:[%s11 + $0xb8] sm:$0xf]
  %v1476 = vld [vmem:[%s11 + $0xbc] sm:$0xf]
  %v1477 = vld [vmem:[%s11 + $0xc0] sm:$0xf]
  %v1478 = vld [vmem:[%s11 + $0xc4] sm:$0xf]
  %v1479 = vld [vmem:[%s11 + $0xc8] sm:$0xf]
  %v1480 = vld [vmem:[%s11 + $0xcc] sm:$0xf]
  %v1481 = vld [vmem:[%s11 + $0xd0] sm:$0xf]
  %v1482 = vld [vmem:[%s11 + $0xd4] sm:$0xf]
  %v1483 = vld [vmem:[%s11 + $0xd8] sm:$0xf]
  %v1484 = vld [vmem:[%s11 + $0xdc] sm:$0xf]
  %v1485 = vld [vmem:[%s11 + $0xe0] sm:$0xf]
  %v1486 = vld [vmem:[%s11 + $0xe4] sm:$0xf]
  %v1487 = vld [vmem:[%s11 + $0xe8] sm:$0xf]
  %v1488 = vld [vmem:[%s11 + $0xec] sm:$0xf]
  %v1489 = vld [vmem:[%s11 + $0xf0] sm:$0xf]
  %v1490 = vld [vmem:[%s11 + $0xf4] sm:$0xf]
  %v1491 = vld [vmem:[%s11 + $0xf8] sm:$0xf]
  %v1492 = vld [vmem:[%s11 + $0xfc] sm:$0xf]
  %v1493 = vld [vmem:[%s11 + $0x100] sm:$0xf]
  %v1494 = vld [vmem:[%s11 + $0x104] sm:$0xf]
  %v1495 = vld [vmem:[%s11 + $0x108] sm:$0xf]
  %v1496 = vld [vmem:[%s11 + $0x10c] sm:$0xf]
  %v1497 = vld [vmem:[%s11 + $0x110] sm:$0xf]
  %v1498 = vld [vmem:[%s11 + $0x114] sm:$0xf]
  %v1499 = vld [vmem:[%s11 + $0x118] sm:$0xf]
  %v1500 = vld [vmem:[%s11 + $0x11c] sm:$0xf]
  %v1501 = vld [vmem:[%s11 + $0x120] sm:$0xf]
  %v1502 = vld [vmem:[%s11 + $0x124] sm:$0xf]
  %v1503 = vld [vmem:[%s11 + $0x128] sm:$0xf]
  %v1504 = vld [vmem:[%s11 + $0x12c] sm:$0xf]
  %v1505 = vld [vmem:[%s11 + $0x130] sm:$0xf]
  %v1506 = vld [vmem:[%s11 + $0x134] sm:$0xf]
  %v1507 = vld [vmem:[%s11 + $0x138] sm:$0xf]
  %v1508 = vld [vmem:[%s11 + $0x13c] sm:$0xf]
  %v1509 = vld [vmem:[%s11 + $0x140] sm:$0xf]
  %v1510 = vld [vmem:[%s11 + $0x144] sm:$0xf]
  %v1511 = vld [vmem:[%s11 + $0x148] sm:$0xf]
  %v1512 = vld [vmem:[%s11 + $0x14c] sm:$0xf]
  %v1513 = vld [vmem:[%s11 + $0x150] sm:$0xf]
  %v1514 = vld [vmem:[%s11 + $0x154] sm:$0xf]
  %v1515 = vld [vmem:[%s11 + $0x158] sm:$0xf]
  %v1516 = vld [vmem:[%s11 + $0x15c] sm:$0xf]
  %v1517 = vld [vmem:[%s11 + $0x160] sm:$0xf]
  %v1518 = vld [vmem:[%s11 + $0x164] sm:$0xf]
  %v1519 = vld [vmem:[%s11 + $0x168] sm:$0xf]
  %v1520 = vld [vmem:[%s11 + $0x16c] sm:$0xf]
  %v1521 = vld [vmem:[%s11 + $0x170] sm:$0xf]
  %v1522 = vld [vmem:[%s11 + $0x174] sm:$0xf]
  %v1523 = vld [vmem:[%s11 + $0x178] sm:$0xf]
  %v1524 = vld [vmem:[%s11 + $0x17c] sm:$0xf]
  %v1525 = vld [vmem:[%s11 + $0x180] sm:$0xf]
  %v1526 = vld [vmem:[%s11 + $0x184] sm:$0xf]
  %v1527 = vld [vmem:[%s11 + $0x188] sm:$0xf]
  %v1528 = vld [vmem:[%s11 + $0x18c] sm:$0xf]
  %v1529 = vld [vmem:[%s11 + $0x190] sm:$0xf]
  %v1530 = vld [vmem:[%s11 + $0x194] sm:$0xf]
  %v1531 = vld [vmem:[%s11 + $0x198] sm:$0xf]
  %v1532 = vld [vmem:[%s11 + $0x19c] sm:$0xf]
  %v1533 = vld [vmem:[%s11 + $0x1a0] sm:$0xf]
  %v1534 = vld [vmem:[%s11 + $0x1a4] sm:$0xf]
  %v1535 = vld [vmem:[%s11 + $0x1a8] sm:$0xf]
  %v1536 = vld [vmem:[%s11 + $0x1ac] sm:$0xf]
  %v1537 = vld [vmem:[%s11 + $0x1b0] sm:$0xf]
  %v1538 = vld [vmem:[%s11 + $0x1b4] sm:$0xf]
  %v1539 = vld [vmem:[%s11 + $0x1b8] sm:$0xf]
  %v1540 = vld [vmem:[%s11 + $0x1bc] sm:$0xf]
  %v1541 = vld [vmem:[%s11 + $0x1c0] sm:$0xf]
  %v1542 = vld [vmem:[%s11 + $0x1c4] sm:$0xf]
  %v1543 = vld [vmem:[%s11 + $0x1c8] sm:$0xf]
  %v1544 = vld [vmem:[%s11 + $0x1cc] sm:$0xf]
  %v1545 = vld [vmem:[%s11 + $0x1d0] sm:$0xf]
  %v1546 = vld [vmem:[%s11 + $0x1d4] sm:$0xf]
  %v1547 = vld [vmem:[%s11 + $0x1d8] sm:$0xf]
  %v1548 = vld [vmem:[%s11 + $0x1dc] sm:$0xf]
  %v1549 = vld [vmem:[%s11 + $0x1e0] sm:$0xf]
  %v1550 = vld [vmem:[%s11 + $0x1e4] sm:$0xf]
  %v1551 = vld [vmem:[%s11 + $0x1e8] sm:$0xf]
  %v1552 = vld [vmem:[%s11 + $0x1ec] sm:$0xf]
  %v1553 = vld [vmem:[%s11 + $0x1f0] sm:$0xf]
  %v1554 = vld [vmem:[%s11 + $0x1f4] sm:$0xf]
  %v1555 = vld [vmem:[%s11 + $0x1f8] sm:$0xf]
  %v1556 = vld [vmem:[%s11 + $0x1fc] sm:$0xf]
  %v1557 = vld [vmem:[%s11 + $0x200] sm:$0xf]
  %v1558 = vld [vmem:[%s11 + $0x204] sm:$0xf]
  %v1559 = vld [vmem:[%s11 + $0x208] sm:$0xf]
  %v1560 = vld [vmem:[%s11 + $0x20c] sm:$0xf]
  %v1561 = vld [vmem:[%s11 + $0x210] sm:$0xf]
  %v1562 = vld [vmem:[%s11 + $0x214] sm:$0xf]
  %v1563 = vld [vmem:[%s11 + $0x218] sm:$0xf]
  %v1564 = vld [vmem:[%s11 + $0x21c] sm:$0xf]
  %v1565 = vld [vmem:[%s11 + $0x220] sm:$0xf]
  %v1566 = vld [vmem:[%s11 + $0x224] sm:$0xf]
  %v1567 = vld [vmem:[%s11 + $0x228] sm:$0xf]
  %v1568 = vld [vmem:[%s11 + $0x22c] sm:$0xf]
  %v1569 = vld [vmem:[%s11 + $0x230] sm:$0xf]
  %v1570 = vld [vmem:[%s11 + $0x234] sm:$0xf]
  %v1571 = vld [vmem:[%s11 + $0x238] sm:$0xf]
  %v1572 = vld [vmem:[%s11 + $0x23c] sm:$0xf]
  %v1573 = vld [vmem:[%s11 + $0x240] sm:$0xf]
  %v1574 = vld [vmem:[%s11 + $0x244] sm:$0xf]
  %v1575 = vld [vmem:[%s11 + $0x248] sm:$0xf]
  %v1576 = vld [vmem:[%s11 + $0x24c] sm:$0xf]
  %v1577 = vld [vmem:[%s11 + $0x250] sm:$0xf]
  %v1578 = vld [vmem:[%s11 + $0x254] sm:$0xf]
  %v1579 = vld [vmem:[%s11 + $0x258] sm:$0xf]
  %v1580 = vld [vmem:[%s11 + $0x25c] sm:$0xf]
  %v1581 = vld [vmem:[%s11 + $0x260] sm:$0xf]
  %v1582 = vld [vmem:[%s11 + $0x264] sm:$0xf]
  %v1583 = vld [vmem:[%s11 + $0x268] sm:$0xf]
  %v1584 = vld [vmem:[%s11 + $0x26c] sm:$0xf]
  %v1585 = vld [vmem:[%s11 + $0x270] sm:$0xf]
  %v1586 = vld [vmem:[%s11 + $0x274] sm:$0xf]
  %v1587 = vld [vmem:[%s11 + $0x278] sm:$0xf]
  %v1588 = vld [vmem:[%s11 + $0x27c] sm:$0xf]
  %v1589 = vld [vmem:[%s11 + $0x280] sm:$0xf]
  %v1590 = vld [vmem:[%s11 + $0x284] sm:$0xf]
  %v1591 = vld [vmem:[%s11 + $0x288] sm:$0xf]
  %v1592 = vld [vmem:[%s11 + $0x28c] sm:$0xf]
  %v1593 = vld [vmem:[%s11 + $0x290] sm:$0xf]
  %v1594 = vld [vmem:[%s11 + $0x294] sm:$0xf]
  %v1595 = vld [vmem:[%s11 + $0x298] sm:$0xf]
  %v1596 = vld [vmem:[%s11 + $0x29c] sm:$0xf]
  %v1597 = vld [vmem:[%s11 + $0x2a0] sm:$0xf]
  %v1598 = vld [vmem:[%s11 + $0x2a4] sm:$0xf]
  %v1599 = vld [vmem:[%s11 + $0x2a8] sm:$0xf]
  %v1600 = vld [vmem:[%s11 + $0x2ac] sm:$0xf]
  %v1601 = vld [vmem:[%s11 + $0x2b0] sm:$0xf]
  %v1602 = vld [vmem:[%s11 + $0x2b4] sm:$0xf]
  %v1603 = vld [vmem:[%s11 + $0x2b8] sm:$0xf]
  %v1604 = vld [vmem:[%s11 + $0x2bc] sm:$0xf]
  %v1605 = vld [vmem:[%s11 + $0x2c0] sm:$0xf]
  %v1606 = vld [vmem:[%s11 + $0x2c4] sm:$0xf]
  %v1607 = vld [vmem:[%s11 + $0x2c8] sm:$0xf]
  %v1608 = vld [vmem:[%s11 + $0x2cc] sm:$0xf]
  %v1609 = vld [vmem:[%s11 + $0x2d0] sm:$0xf]
  %v1610 = vld [vmem:[%s11 + $0x2d4] sm:$0xf]
  %v1611 = vld [vmem:[%s11 + $0x2d8] sm:$0xf]
  %v1612 = vld [vmem:[%s11 + $0x2dc] sm:$0xf]
  %v1613 = vld [vmem:[%s11 + $0x2e0] sm:$0xf]
  %v1614 = vld [vmem:[%s11 + $0x2e4] sm:$0xf]
  %v1615 = vld [vmem:[%s11 + $0x2e8] sm:$0xf]
  %v1616 = vld [vmem:[%s11 + $0x2ec] sm:$0xf]
  %v1617 = vld [vmem:[%s11 + $0x2f0] sm:$0xf]
  %v1618 = vld [vmem:[%s11 + $0x2f4] sm:$0xf]
  %v1619 = vld [vmem:[%s11 + $0x2f8] sm:$0xf]
  %v1620 = vld [vmem:[%s11 + $0x2fc] sm:$0xf]
  %v1621 = vld [vmem:[%s11 + $0x300] sm:$0xf]
  %v1622 = vld [vmem:[%s11 + $0x304] sm:$0xf]
  %v1623 = vld [vmem:[%s11 + $0x308] sm:$0xf]
  %v1624 = vld [vmem:[%s11 + $0x30c] sm:$0xf]
  %v1625 = vld [vmem:[%s11 + $0x310] sm:$0xf]
  %v1626 = vld [vmem:[%s11 + $0x314] sm:$0xf]
  %v1627 = vld [vmem:[%s11 + $0x318] sm:$0xf]
  %v1628 = vld [vmem:[%s11 + $0x31c] sm:$0xf]
  %v1629 = vld [vmem:[%s11 + $0x320] sm:$0xf]
  %v1630 = vld [vmem:[%s11 + $0x324] sm:$0xf]
  %v1631 = vld [vmem:[%s11 + $0x328] sm:$0xf]
  %v1632 = vld [vmem:[%s11 + $0x32c] sm:$0xf]
  %v1633 = vld [vmem:[%s11 + $0x330] sm:$0xf]
  %v1634 = vld [vmem:[%s11 + $0x334] sm:$0xf]
  %v1635 = vld [vmem:[%s11 + $0x338] sm:$0xf]
  %v1636 = vld [vmem:[%s11 + $0x33c] sm:$0xf]
  %v1637 = vld [vmem:[%s11 + $0x340] sm:$0xf]
  %v1638 = vld [vmem:[%s11 + $0x344] sm:$0xf]
  %v1639 = vld [vmem:[%s11 + $0x348] sm:$0xf]
  %v1640 = vld [vmem:[%s11 + $0x34c] sm:$0xf]
  %v1641 = vld [vmem:[%s11 + $0x350] sm:$0xf]
  %v1642 = vld [vmem:[%s11 + $0x354] sm:$0xf]
  %v1643 = vld [vmem:[%s11 + $0x358] sm:$0xf]
  %v1644 = vld [vmem:[%s11 + $0x35c] sm:$0xf]
  %v1645 = vld [vmem:[%s11 + $0x360] sm:$0xf]
  %v1646 = vld [vmem:[%s11 + $0x364] sm:$0xf]
  %v1647 = vld [vmem:[%s11 + $0x368] sm:$0xf]
  %v1648 = vld [vmem:[%s11 + $0x36c] sm:$0xf]
  %v1649 = vld [vmem:[%s11 + $0x370] sm:$0xf]
  %v1650 = vld [vmem:[%s11 + $0x374] sm:$0xf]
  %v1651 = vld [vmem:[%s11 + $0x378] sm:$0xf]
  %v1652 = vld [vmem:[%s11 + $0x37c] sm:$0xf]
  %v1653 = vld [vmem:[%s11 + $0x380] sm:$0xf]
  %v1654 = vld [vmem:[%s11 + $0x384] sm:$0xf]
  %v1655 = vld [vmem:[%s11 + $0x388] sm:$0xf]
  %v1656 = vld [vmem:[%s11 + $0x38c] sm:$0xf]
  %v1657 = vld [vmem:[%s11 + $0x390] sm:$0xf]
  %v1658 = vld [vmem:[%s11 + $0x394] sm:$0xf]
  %v1659 = vld [vmem:[%s11 + $0x398] sm:$0xf]
  %v1660 = vld [vmem:[%s11 + $0x39c] sm:$0xf]
  %v1661 = vld [vmem:[%s11 + $0x3a0] sm:$0xf]
  %v1662 = vld [vmem:[%s11 + $0x3a4] sm:$0xf]
  %v1663 = vld [vmem:[%s11 + $0x3a8] sm:$0xf]
  %v1664 = vld [vmem:[%s11 + $0x3ac] sm:$0xf]
  %v1665 = vld [vmem:[%s11 + $0x3b0] sm:$0xf]
  %v1666 = vld [vmem:[%s11 + $0x3b4] sm:$0xf]
  %v1667 = vld [vmem:[%s11 + $0x3b8] sm:$0xf]
  %v1668 = vld [vmem:[%s11 + $0x3bc] sm:$0xf]
  %v1669 = vld [vmem:[%s11 + $0x3c0] sm:$0xf]
  %v1670 = vld [vmem:[%s11 + $0x3c4] sm:$0xf]
  %v1671 = vld [vmem:[%s11 + $0x3c8] sm:$0xf]
  %v1672 = vld [vmem:[%s11 + $0x3cc] sm:$0xf]
  %v1673 = vld [vmem:[%s11 + $0x3d0] sm:$0xf]
  %v1674 = vld [vmem:[%s11 + $0x3d4] sm:$0xf]
  %v1675 = vld [vmem:[%s11 + $0x3d8] sm:$0xf]
  %v1676 = vld [vmem:[%s11 + $0x3dc] sm:$0xf]
  %v1677 = vld [vmem:[%s11 + $0x3e0] sm:$0xf]
  %v1678 = vld [vmem:[%s11 + $0x3e4] sm:$0xf]
  %v1679 = vld [vmem:[%s11 + $0x3e8] sm:$0xf]
  %v1680 = vld [vmem:[%s11 + $0x3ec] sm:$0xf]
  %v1681 = vld [vmem:[%s11 + $0x3f0] sm:$0xf]
  %v1682 = vld [vmem:[%s11 + $0x3f4] sm:$0xf]
  %v1683 = vld [vmem:[%s11 + $0x3f8] sm:$0xf]
  %v1684 = vld [vmem:[%s11 + $0x3fc] sm:$0xf]
  %v1685 = vld [vmem:[%s12] sm:$0x1]
  %v1687 = vlaneseq
  %v1688 = vshrl.u32 %v1687, 7
  %v1689 = vsub.s32 0, %v1688
  %v1690 = vrot.slane %v1685, %v1689
  %v1948 = vunpack.c.l.b16 %v1429
  %v1949 = vunpack.c.l.b16 %v1430
  %v1950 = vunpack.c.l.b16 %v1431
  %v1951 = vunpack.c.l.b16 %v1432
  %v1952 = vunpack.c.l.b16 %v1433
  %v1953 = vunpack.c.l.b16 %v1434
  %v1954 = vunpack.c.l.b16 %v1435
  %v1955 = vunpack.c.l.b16 %v1436
  %v1956 = vunpack.c.l.b16 %v1437
  %v1957 = vunpack.c.l.b16 %v1438
  %v1958 = vunpack.c.l.b16 %v1439
  %v1959 = vunpack.c.l.b16 %v1440
  %v1960 = vunpack.c.l.b16 %v1441
  %v1961 = vunpack.c.l.b16 %v1442
  %v1962 = vunpack.c.l.b16 %v1443
  %v1963 = vunpack.c.l.b16 %v1444
  %v1964 = vunpack.c.l.b16 %v1445
  %v1965 = vunpack.c.l.b16 %v1446
  %v1966 = vunpack.c.l.b16 %v1447
  %v1967 = vunpack.c.l.b16 %v1448
  %v1968 = vunpack.c.l.b16 %v1449
  %v1969 = vunpack.c.l.b16 %v1450
  %v1970 = vunpack.c.l.b16 %v1451
  %v1971 = vunpack.c.l.b16 %v1452
  %v1972 = vunpack.c.l.b16 %v1453
  %v1973 = vunpack.c.l.b16 %v1454
  %v1974 = vunpack.c.l.b16 %v1455
  %v1975 = vunpack.c.l.b16 %v1456
  %v1976 = vunpack.c.l.b16 %v1457
  %v1977 = vunpack.c.l.b16 %v1458
  %v1978 = vunpack.c.l.b16 %v1459
  %v1979 = vunpack.c.l.b16 %v1460
  %v1980 = vunpack.c.l.b16 %v1461
  %v1981 = vunpack.c.l.b16 %v1462
  %v1982 = vunpack.c.l.b16 %v1463
  %v1983 = vunpack.c.l.b16 %v1464
  %v1984 = vunpack.c.l.b16 %v1465
  %v1985 = vunpack.c.l.b16 %v1466
  %v1986 = vunpack.c.l.b16 %v1467
  %v1987 = vunpack.c.l.b16 %v1468
  %v1988 = vunpack.c.l.b16 %v1469
  %v1989 = vunpack.c.l.b16 %v1470
  %v1990 = vunpack.c.l.b16 %v1471
  %v1991 = vunpack.c.l.b16 %v1472
  %v1992 = vunpack.c.l.b16 %v1473
  %v1993 = vunpack.c.l.b16 %v1474
  %v1994 = vunpack.c.l.b16 %v1475
  %v1995 = vunpack.c.l.b16 %v1476
  %v1996 = vunpack.c.l.b16 %v1477
  %v1997 = vunpack.c.l.b16 %v1478
  %v1998 = vunpack.c.l.b16 %v1479
  %v1999 = vunpack.c.l.b16 %v1480
  %v2000 = vunpack.c.l.b16 %v1481
  %v2001 = vunpack.c.l.b16 %v1482
  %v2002 = vunpack.c.l.b16 %v1483
  %v2003 = vunpack.c.l.b16 %v1484
  %v2004 = vunpack.c.l.b16 %v1485
  %v2005 = vunpack.c.l.b16 %v1486
  %v2006 = vunpack.c.l.b16 %v1487
  %v2007 = vunpack.c.l.b16 %v1488
  %v2008 = vunpack.c.l.b16 %v1489
  %v2009 = vunpack.c.l.b16 %v1490
  %v2010 = vunpack.c.l.b16 %v1491
  %v2011 = vunpack.c.l.b16 %v1492
  %v2012 = vunpack.c.l.b16 %v1493
  %v2013 = vunpack.c.l.b16 %v1494
  %v2014 = vunpack.c.l.b16 %v1495
  %v2015 = vunpack.c.l.b16 %v1496
  %v2016 = vunpack.c.l.b16 %v1497
  %v2017 = vunpack.c.l.b16 %v1498
  %v2018 = vunpack.c.l.b16 %v1499
  %v2019 = vunpack.c.l.b16 %v1500
  %v2020 = vunpack.c.l.b16 %v1501
  %v2021 = vunpack.c.l.b16 %v1502
  %v2022 = vunpack.c.l.b16 %v1503
  %v2023 = vunpack.c.l.b16 %v1504
  %v2024 = vunpack.c.l.b16 %v1505
  %v2025 = vunpack.c.l.b16 %v1506
  %v2026 = vunpack.c.l.b16 %v1507
  %v2027 = vunpack.c.l.b16 %v1508
  %v2028 = vunpack.c.l.b16 %v1509
  %v2029 = vunpack.c.l.b16 %v1510
  %v2030 = vunpack.c.l.b16 %v1511
  %v2031 = vunpack.c.l.b16 %v1512
  %v2032 = vunpack.c.l.b16 %v1513
  %v2033 = vunpack.c.l.b16 %v1514
  %v2034 = vunpack.c.l.b16 %v1515
  %v2035 = vunpack.c.l.b16 %v1516
  %v2036 = vunpack.c.l.b16 %v1517
  %v2037 = vunpack.c.l.b16 %v1518
  %v2038 = vunpack.c.l.b16 %v1519
  %v2039 = vunpack.c.l.b16 %v1520
  %v2040 = vunpack.c.l.b16 %v1521
  %v2041 = vunpack.c.l.b16 %v1522
  %v2042 = vunpack.c.l.b16 %v1523
  %v2043 = vunpack.c.l.b16 %v1524
  %v2044 = vunpack.c.l.b16 %v1525
  %v2045 = vunpack.c.l.b16 %v1526
  %v2046 = vunpack.c.l.b16 %v1527
  %v2047 = vunpack.c.l.b16 %v1528
  %v2048 = vunpack.c.l.b16 %v1529
  %v2049 = vunpack.c.l.b16 %v1530
  %v2050 = vunpack.c.l.b16 %v1531
  %v2051 = vunpack.c.l.b16 %v1532
  %v2052 = vunpack.c.l.b16 %v1533
  %v2053 = vunpack.c.l.b16 %v1534
  %v2054 = vunpack.c.l.b16 %v1535
  %v2055 = vunpack.c.l.b16 %v1536
  %v2056 = vunpack.c.l.b16 %v1537
  %v2057 = vunpack.c.l.b16 %v1538
  %v2058 = vunpack.c.l.b16 %v1539
  %v2059 = vunpack.c.l.b16 %v1540
  %v2060 = vunpack.c.l.b16 %v1541
  %v2061 = vunpack.c.l.b16 %v1542
  %v2062 = vunpack.c.l.b16 %v1543
  %v2063 = vunpack.c.l.b16 %v1544
  %v2064 = vunpack.c.l.b16 %v1545
  %v2065 = vunpack.c.l.b16 %v1546
  %v2066 = vunpack.c.l.b16 %v1547
  %v2067 = vunpack.c.l.b16 %v1548
  %v2068 = vunpack.c.l.b16 %v1549
  %v2069 = vunpack.c.l.b16 %v1550
  %v2070 = vunpack.c.l.b16 %v1551
  %v2071 = vunpack.c.l.b16 %v1552
  %v2072 = vunpack.c.l.b16 %v1553
  %v2073 = vunpack.c.l.b16 %v1554
  %v2074 = vunpack.c.l.b16 %v1555
  %v2075 = vunpack.c.l.b16 %v1556
  %v2076 = vunpack.c.l.b16 %v1557
  %v2077 = vunpack.c.l.b16 %v1558
  %v2078 = vunpack.c.l.b16 %v1559
  %v2079 = vunpack.c.l.b16 %v1560
  %v2080 = vunpack.c.l.b16 %v1561
  %v2081 = vunpack.c.l.b16 %v1562
  %v2082 = vunpack.c.l.b16 %v1563
  %v2083 = vunpack.c.l.b16 %v1564
  %v2084 = vunpack.c.l.b16 %v1565
  %v2085 = vunpack.c.l.b16 %v1566
  %v2086 = vunpack.c.l.b16 %v1567
  %v2087 = vunpack.c.l.b16 %v1568
  %v2088 = vunpack.c.l.b16 %v1569
  %v2089 = vunpack.c.l.b16 %v1570
  %v2090 = vunpack.c.l.b16 %v1571
  %v2091 = vunpack.c.l.b16 %v1572
  %v2092 = vunpack.c.l.b16 %v1573
  %v2093 = vunpack.c.l.b16 %v1574
  %v2094 = vunpack.c.l.b16 %v1575
  %v2095 = vunpack.c.l.b16 %v1576
  %v2096 = vunpack.c.l.b16 %v1577
  %v2097 = vunpack.c.l.b16 %v1578
  %v2098 = vunpack.c.l.b16 %v1579
  %v2099 = vunpack.c.l.b16 %v1580
  %v2100 = vunpack.c.l.b16 %v1581
  %v2101 = vunpack.c.l.b16 %v1582
  %v2102 = vunpack.c.l.b16 %v1583
  %v2103 = vunpack.c.l.b16 %v1584
  %v2104 = vunpack.c.l.b16 %v1585
  %v2105 = vunpack.c.l.b16 %v1586
  %v2106 = vunpack.c.l.b16 %v1587
  %v2107 = vunpack.c.l.b16 %v1588
  %v2108 = vunpack.c.l.b16 %v1589
  %v2109 = vunpack.c.l.b16 %v1590
  %v2110 = vunpack.c.l.b16 %v1591
  %v2111 = vunpack.c.l.b16 %v1592
  %v2112 = vunpack.c.l.b16 %v1593
  %v2113 = vunpack.c.l.b16 %v1594
  %v2114 = vunpack.c.l.b16 %v1595
  %v2115 = vunpack.c.l.b16 %v1596
  %v2116 = vunpack.c.l.b16 %v1597
  %v2117 = vunpack.c.l.b16 %v1598
  %v2118 = vunpack.c.l.b16 %v1599
  %v2119 = vunpack.c.l.b16 %v1600
  %v2120 = vunpack.c.l.b16 %v1601
  %v2121 = vunpack.c.l.b16 %v1602
  %v2122 = vunpack.c.l.b16 %v1603
  %v2123 = vunpack.c.l.b16 %v1604
  %v2124 = vunpack.c.l.b16 %v1605
  %v2125 = vunpack.c.l.b16 %v1606
  %v2126 = vunpack.c.l.b16 %v1607
  %v2127 = vunpack.c.l.b16 %v1608
  %v2128 = vunpack.c.l.b16 %v1609
  %v2129 = vunpack.c.l.b16 %v1610
  %v2130 = vunpack.c.l.b16 %v1611
  %v2131 = vunpack.c.l.b16 %v1612
  %v2132 = vunpack.c.l.b16 %v1613
  %v2133 = vunpack.c.l.b16 %v1614
  %v2134 = vunpack.c.l.b16 %v1615
  %v2135 = vunpack.c.l.b16 %v1616
  %v2136 = vunpack.c.l.b16 %v1617
  %v2137 = vunpack.c.l.b16 %v1618
  %v2138 = vunpack.c.l.b16 %v1619
  %v2139 = vunpack.c.l.b16 %v1620
  %v2140 = vunpack.c.l.b16 %v1621
  %v2141 = vunpack.c.l.b16 %v1622
  %v2142 = vunpack.c.l.b16 %v1623
  %v2143 = vunpack.c.l.b16 %v1624
  %v2144 = vunpack.c.l.b16 %v1625
  %v2145 = vunpack.c.l.b16 %v1626
  %v2146 = vunpack.c.l.b16 %v1627
  %v2147 = vunpack.c.l.b16 %v1628
  %v2148 = vunpack.c.l.b16 %v1629
  %v2149 = vunpack.c.l.b16 %v1630
  %v2150 = vunpack.c.l.b16 %v1631
  %v2151 = vunpack.c.l.b16 %v1632
  %v2152 = vunpack.c.l.b16 %v1633
  %v2153 = vunpack.c.l.b16 %v1634
  %v2154 = vunpack.c.l.b16 %v1635
  %v2155 = vunpack.c.l.b16 %v1636
  %v2156 = vunpack.c.l.b16 %v1637
  %v2157 = vunpack.c.l.b16 %v1638
  %v2158 = vunpack.c.l.b16 %v1639
  %v2159 = vunpack.c.l.b16 %v1640
  %v2160 = vunpack.c.l.b16 %v1641
  %v2161 = vunpack.c.l.b16 %v1642
  %v2162 = vunpack.c.l.b16 %v1643
  %v2163 = vunpack.c.l.b16 %v1644
  %v2164 = vunpack.c.l.b16 %v1645
  %v2165 = vunpack.c.l.b16 %v1646
  %v2166 = vunpack.c.l.b16 %v1647
  %v2167 = vunpack.c.l.b16 %v1648
  %v2168 = vunpack.c.l.b16 %v1649
  %v2169 = vunpack.c.l.b16 %v1650
  %v2170 = vunpack.c.l.b16 %v1651
  %v2171 = vunpack.c.l.b16 %v1652
  %v2172 = vunpack.c.l.b16 %v1653
  %v2173 = vunpack.c.l.b16 %v1654
  %v2174 = vunpack.c.l.b16 %v1655
  %v2175 = vunpack.c.l.b16 %v1656
  %v2176 = vunpack.c.l.b16 %v1657
  %v2177 = vunpack.c.l.b16 %v1658
  %v2178 = vunpack.c.l.b16 %v1659
  %v2179 = vunpack.c.l.b16 %v1660
  %v2180 = vunpack.c.l.b16 %v1661
  %v2181 = vunpack.c.l.b16 %v1662
  %v2182 = vunpack.c.l.b16 %v1663
  %v2183 = vunpack.c.l.b16 %v1664
  %v2184 = vunpack.c.l.b16 %v1665
  %v2185 = vunpack.c.l.b16 %v1666
  %v2186 = vunpack.c.l.b16 %v1667
  %v2187 = vunpack.c.l.b16 %v1668
  %v2188 = vunpack.c.l.b16 %v1669
  %v2189 = vunpack.c.l.b16 %v1670
  %v2190 = vunpack.c.l.b16 %v1671
  %v2191 = vunpack.c.l.b16 %v1672
  %v2192 = vunpack.c.l.b16 %v1673
  %v2193 = vunpack.c.l.b16 %v1674
  %v2194 = vunpack.c.l.b16 %v1675
  %v2195 = vunpack.c.l.b16 %v1676
  %v2196 = vunpack.c.l.b16 %v1677
  %v2197 = vunpack.c.l.b16 %v1678
  %v2198 = vunpack.c.l.b16 %v1679
  %v2199 = vunpack.c.l.b16 %v1680
  %v2200 = vunpack.c.l.b16 %v1681
  %v2201 = vunpack.c.l.b16 %v1682
  %v2202 = vunpack.c.l.b16 %v1683
  %v2203 = vunpack.c.l.b16 %v1684
  %v2204 = vpack.c.b16 %v1949, %v1948
  %v2205 = vpack.c.b16 %v1951, %v1950
  %v2206 = vpack.c.b16 %v1953, %v1952
  %v2207 = vpack.c.b16 %v1955, %v1954
  %v2208 = vpack.c.b16 %v1957, %v1956
  %v2209 = vpack.c.b16 %v1959, %v1958
  %v2210 = vpack.c.b16 %v1961, %v1960
  %v2211 = vpack.c.b16 %v1963, %v1962
  %v2212 = vpack.c.b16 %v1965, %v1964
  %v2213 = vpack.c.b16 %v1967, %v1966
  %v2214 = vpack.c.b16 %v1969, %v1968
  %v2215 = vpack.c.b16 %v1971, %v1970
  %v2216 = vpack.c.b16 %v1973, %v1972
  %v2217 = vpack.c.b16 %v1975, %v1974
  %v2218 = vpack.c.b16 %v1977, %v1976
  %v2219 = vpack.c.b16 %v1979, %v1978
  %v2220 = vpack.c.b16 %v1981, %v1980
  %v2221 = vpack.c.b16 %v1983, %v1982
  %v2222 = vpack.c.b16 %v1985, %v1984
  %v2223 = vpack.c.b16 %v1987, %v1986
  %v2224 = vpack.c.b16 %v1989, %v1988
  %v2225 = vpack.c.b16 %v1991, %v1990
  %v2226 = vpack.c.b16 %v1993, %v1992
  %v2227 = vpack.c.b16 %v1995, %v1994
  %v2228 = vpack.c.b16 %v1997, %v1996
  %v2229 = vpack.c.b16 %v1999, %v1998
  %v2230 = vpack.c.b16 %v2001, %v2000
  %v2231 = vpack.c.b16 %v2003, %v2002
  %v2232 = vpack.c.b16 %v2005, %v2004
  %v2233 = vpack.c.b16 %v2007, %v2006
  %v2234 = vpack.c.b16 %v2009, %v2008
  %v2235 = vpack.c.b16 %v2011, %v2010
  %v2236 = vpack.c.b16 %v2013, %v2012
  %v2237 = vpack.c.b16 %v2015, %v2014
  %v2238 = vpack.c.b16 %v2017, %v2016
  %v2239 = vpack.c.b16 %v2019, %v2018
  %v2240 = vpack.c.b16 %v2021, %v2020
  %v2241 = vpack.c.b16 %v2023, %v2022
  %v2242 = vpack.c.b16 %v2025, %v2024
  %v2243 = vpack.c.b16 %v2027, %v2026
  %v2244 = vpack.c.b16 %v2029, %v2028
  %v2245 = vpack.c.b16 %v2031, %v2030
  %v2246 = vpack.c.b16 %v2033, %v2032
  %v2247 = vpack.c.b16 %v2035, %v2034
  %v2248 = vpack.c.b16 %v2037, %v2036
  %v2249 = vpack.c.b16 %v2039, %v2038
  %v2250 = vpack.c.b16 %v2041, %v2040
  %v2251 = vpack.c.b16 %v2043, %v2042
  %v2252 = vpack.c.b16 %v2045, %v2044
  %v2253 = vpack.c.b16 %v2047, %v2046
  %v2254 = vpack.c.b16 %v2049, %v2048
  %v2255 = vpack.c.b16 %v2051, %v2050
  %v2256 = vpack.c.b16 %v2053, %v2052
  %v2257 = vpack.c.b16 %v2055, %v2054
  %v2258 = vpack.c.b16 %v2057, %v2056
  %v2259 = vpack.c.b16 %v2059, %v2058
  %v2260 = vpack.c.b16 %v2061, %v2060
  %v2261 = vpack.c.b16 %v2063, %v2062
  %v2262 = vpack.c.b16 %v2065, %v2064
  %v2263 = vpack.c.b16 %v2067, %v2066
  %v2264 = vpack.c.b16 %v2069, %v2068
  %v2265 = vpack.c.b16 %v2071, %v2070
  %v2266 = vpack.c.b16 %v2073, %v2072
  %v2267 = vpack.c.b16 %v2075, %v2074
  %v2268 = vpack.c.b16 %v2077, %v2076
  %v2269 = vpack.c.b16 %v2079, %v2078
  %v2270 = vpack.c.b16 %v2081, %v2080
  %v2271 = vpack.c.b16 %v2083, %v2082
  %v2272 = vpack.c.b16 %v2085, %v2084
  %v2273 = vpack.c.b16 %v2087, %v2086
  %v2274 = vpack.c.b16 %v2089, %v2088
  %v2275 = vpack.c.b16 %v2091, %v2090
  %v2276 = vpack.c.b16 %v2093, %v2092
  %v2277 = vpack.c.b16 %v2095, %v2094
  %v2278 = vpack.c.b16 %v2097, %v2096
  %v2279 = vpack.c.b16 %v2099, %v2098
  %v2280 = vpack.c.b16 %v2101, %v2100
  %v2281 = vpack.c.b16 %v2103, %v2102
  %v2282 = vpack.c.b16 %v2105, %v2104
  %v2283 = vpack.c.b16 %v2107, %v2106
  %v2284 = vpack.c.b16 %v2109, %v2108
  %v2285 = vpack.c.b16 %v2111, %v2110
  %v2286 = vpack.c.b16 %v2113, %v2112
  %v2287 = vpack.c.b16 %v2115, %v2114
  %v2288 = vpack.c.b16 %v2117, %v2116
  %v2289 = vpack.c.b16 %v2119, %v2118
  %v2290 = vpack.c.b16 %v2121, %v2120
  %v2291 = vpack.c.b16 %v2123, %v2122
  %v2292 = vpack.c.b16 %v2125, %v2124
  %v2293 = vpack.c.b16 %v2127, %v2126
  %v2294 = vpack.c.b16 %v2129, %v2128
  %v2295 = vpack.c.b16 %v2131, %v2130
  %v2296 = vpack.c.b16 %v2133, %v2132
  %v2297 = vpack.c.b16 %v2135, %v2134
  %v2298 = vpack.c.b16 %v2137, %v2136
  %v2299 = vpack.c.b16 %v2139, %v2138
  %v2300 = vpack.c.b16 %v2141, %v2140
  %v2301 = vpack.c.b16 %v2143, %v2142
  %v2302 = vpack.c.b16 %v2145, %v2144
  %v2303 = vpack.c.b16 %v2147, %v2146
  %v2304 = vpack.c.b16 %v2149, %v2148
  %v2305 = vpack.c.b16 %v2151, %v2150
  %v2306 = vpack.c.b16 %v2153, %v2152
  %v2307 = vpack.c.b16 %v2155, %v2154
  %v2308 = vpack.c.b16 %v2157, %v2156
  %v2309 = vpack.c.b16 %v2159, %v2158
  %v2310 = vpack.c.b16 %v2161, %v2160
  %v2311 = vpack.c.b16 %v2163, %v2162
  %v2312 = vpack.c.b16 %v2165, %v2164
  %v2313 = vpack.c.b16 %v2167, %v2166
  %v2314 = vpack.c.b16 %v2169, %v2168
  %v2315 = vpack.c.b16 %v2171, %v2170
  %v2316 = vpack.c.b16 %v2173, %v2172
  %v2317 = vpack.c.b16 %v2175, %v2174
  %v2318 = vpack.c.b16 %v2177, %v2176
  %v2319 = vpack.c.b16 %v2179, %v2178
  %v2320 = vpack.c.b16 %v2181, %v2180
  %v2321 = vpack.c.b16 %v2183, %v2182
  %v2322 = vpack.c.b16 %v2185, %v2184
  %v2323 = vpack.c.b16 %v2187, %v2186
  %v2324 = vpack.c.b16 %v2189, %v2188
  %v2325 = vpack.c.b16 %v2191, %v2190
  %v2326 = vpack.c.b16 %v2193, %v2192
  %v2327 = vpack.c.b16 %v2195, %v2194
  %v2328 = vpack.c.b16 %v2197, %v2196
  %v2329 = vpack.c.b16 %v2199, %v2198
  %v2330 = vpack.c.b16 %v2201, %v2200
  %v2331 = vpack.c.b16 %v2203, %v2202
  %2460 = vmatprep.subr.bf16.mxu0 0
  %2461 = vmatpush1.bf16.msra.mxu0 %v2204
  %2462 = vmatprep.subr.bf16.mxu0 0
  %2463 = vmatpush1.bf16.msra.mxu0 %v2205
  %2464 = vmatprep.subr.bf16.mxu0 0
  %2465 = vmatpush1.bf16.msra.mxu0 %v2206
  %2466 = vmatprep.subr.bf16.mxu0 0
  %2467 = vmatpush1.bf16.msra.mxu0 %v2207
  %2468 = vmatprep.subr.bf16.mxu0 0
  %2469 = vmatpush1.bf16.msra.mxu0 %v2208
  %2470 = vmatprep.subr.bf16.mxu0 0
  %2471 = vmatpush1.bf16.msra.mxu0 %v2209
  %2472 = vmatprep.subr.bf16.mxu0 0
  %2473 = vmatpush1.bf16.msra.mxu0 %v2210
  %2474 = vmatprep.subr.bf16.mxu0 0
  %2475 = vmatpush1.bf16.msra.mxu0 %v2211
  %2476 = vmatprep.subr.bf16.mxu0 0
  %2477 = vmatpush1.bf16.msra.mxu0 %v2212
  %2478 = vmatprep.subr.bf16.mxu0 0
  %2479 = vmatpush1.bf16.msra.mxu0 %v2213
  %2480 = vmatprep.subr.bf16.mxu0 0
  %2481 = vmatpush1.bf16.msra.mxu0 %v2214
  %2482 = vmatprep.subr.bf16.mxu0 0
  %2483 = vmatpush1.bf16.msra.mxu0 %v2215
  %2484 = vmatprep.subr.bf16.mxu0 0
  %2485 = vmatpush1.bf16.msra.mxu0 %v2216
  %2486 = vmatprep.subr.bf16.mxu0 0
  %2487 = vmatpush1.bf16.msra.mxu0 %v2217
  %2488 = vmatprep.subr.bf16.mxu0 0
  %2489 = vmatpush1.bf16.msra.mxu0 %v2218
  %2490 = vmatprep.subr.bf16.mxu0 0
  %2491 = vmatpush1.bf16.msra.mxu0 %v2219
  %2492 = vmatprep.mubr.bf16.mxu0 %v1414
  %2493 = vmatmul.mubr.bf16.gmra.mrb[0].mxu0 %v1413
  %v2494 = vpop.f32.mrb[0].mxu0
  %v2495 = vadd.f32 %v1690, %v2494
  %v2496 = vpop.f32.mrb[0].mxu0
  %v2497 = vpop.f32.mrb[0].mxu0
  %v2498 = vadd.f32 %v1690, %v2497
  %v2499 = vpop.f32.mrb[0].mxu0
  %2500 = vdwg.mxu0
  %2501 = vmatprep.subr.bf16.mxu0 0
  %2502 = vmatpush1.bf16.msra.mxu0 %v2220
  %2503 = vmatprep.subr.bf16.mxu0 0
  %2504 = vmatpush1.bf16.msra.mxu0 %v2221
  %2505 = vmatprep.subr.bf16.mxu0 0
  %2506 = vmatpush1.bf16.msra.mxu0 %v2222
  %2507 = vmatprep.subr.bf16.mxu0 0
  %2508 = vmatpush1.bf16.msra.mxu0 %v2223
  %2509 = vmatprep.subr.bf16.mxu0 0
  %2510 = vmatpush1.bf16.msra.mxu0 %v2224
  %2511 = vmatprep.subr.bf16.mxu0 0
  %2512 = vmatpush1.bf16.msra.mxu0 %v2225
  %2513 = vmatprep.subr.bf16.mxu0 0
  %2514 = vmatpush1.bf16.msra.mxu0 %v2226
  %2515 = vmatprep.subr.bf16.mxu0 0
  %2516 = vmatpush1.bf16.msra.mxu0 %v2227
  %2517 = vmatprep.subr.bf16.mxu0 0
  %2518 = vmatpush1.bf16.msra.mxu0 %v2228
  %2519 = vmatprep.subr.bf16.mxu0 0
  %2520 = vmatpush1.bf16.msra.mxu0 %v2229
  %2521 = vmatprep.subr.bf16.mxu0 0
  %2522 = vmatpush1.bf16.msra.mxu0 %v2230
  %2523 = vmatprep.subr.bf16.mxu0 0
  %2524 = vmatpush1.bf16.msra.mxu0 %v2231
  %2525 = vmatprep.subr.bf16.mxu0 0
  %2526 = vmatpush1.bf16.msra.mxu0 %v2232
  %2527 = vmatprep.subr.bf16.mxu0 0
  %2528 = vmatpush1.bf16.msra.mxu0 %v2233
  %2529 = vmatprep.subr.bf16.mxu0 0
  %2530 = vmatpush1.bf16.msra.mxu0 %v2234
  %2531 = vmatprep.subr.bf16.mxu0 0
  %2532 = vmatpush1.bf16.msra.mxu0 %v2235
  %2533 = vmatprep.mubr.bf16.mxu0 %v1416
  %2534 = vmatmul.mubr.bf16.gmra.mrb[0].mxu0 %v1415
  %v2535 = vpop.f32.mrb[0].mxu0
  %v2536 = vadd.f32 %v2495, %v2535
  %v2537 = vpop.f32.mrb[0].mxu0
  %v2538 = vpop.f32.mrb[0].mxu0
  %v2539 = vadd.f32 %v2498, %v2538
  %v2540 = vpop.f32.mrb[0].mxu0
  %2541 = vdwg.mxu0
  %2542 = vmatprep.subr.bf16.mxu0 0
  %2543 = vmatpush1.bf16.msra.mxu0 %v2236
  %2544 = vmatprep.subr.bf16.mxu0 0
  %2545 = vmatpush1.bf16.msra.mxu0 %v2237
  %2546 = vmatprep.subr.bf16.mxu0 0
  %2547 = vmatpush1.bf16.msra.mxu0 %v2238
  %2548 = vmatprep.subr.bf16.mxu0 0
  %2549 = vmatpush1.bf16.msra.mxu0 %v2239
  %2550 = vmatprep.subr.bf16.mxu0 0
  %2551 = vmatpush1.bf16.msra.mxu0 %v2240
  %2552 = vmatprep.subr.bf16.mxu0 0
  %2553 = vmatpush1.bf16.msra.mxu0 %v2241
  %2554 = vmatprep.subr.bf16.mxu0 0
  %2555 = vmatpush1.bf16.msra.mxu0 %v2242
  %2556 = vmatprep.subr.bf16.mxu0 0
  %2557 = vmatpush1.bf16.msra.mxu0 %v2243
  %2558 = vmatprep.subr.bf16.mxu0 0
  %2559 = vmatpush1.bf16.msra.mxu0 %v2244
  %2560 = vmatprep.subr.bf16.mxu0 0
  %2561 = vmatpush1.bf16.msra.mxu0 %v2245
  %2562 = vmatprep.subr.bf16.mxu0 0
  %2563 = vmatpush1.bf16.msra.mxu0 %v2246
  %2564 = vmatprep.subr.bf16.mxu0 0
  %2565 = vmatpush1.bf16.msra.mxu0 %v2247
  %2566 = vmatprep.subr.bf16.mxu0 0
  %2567 = vmatpush1.bf16.msra.mxu0 %v2248
  %2568 = vmatprep.subr.bf16.mxu0 0
  %2569 = vmatpush1.bf16.msra.mxu0 %v2249
  %2570 = vmatprep.subr.bf16.mxu0 0
  %2571 = vmatpush1.bf16.msra.mxu0 %v2250
  %2572 = vmatprep.subr.bf16.mxu0 0
  %2573 = vmatpush1.bf16.msra.mxu0 %v2251
  %2574 = vmatprep.mubr.bf16.mxu0 %v1418
  %2575 = vmatmul.mubr.bf16.gmra.mrb[0].mxu0 %v1417
  %v2576 = vpop.f32.mrb[0].mxu0
  %v2577 = vadd.f32 %v2536, %v2576
  %v2578 = vpop.f32.mrb[0].mxu0
  %v2579 = vpop.f32.mrb[0].mxu0
  %v2580 = vadd.f32 %v2539, %v2579
  %v2581 = vpop.f32.mrb[0].mxu0
  %2582 = vdwg.mxu0
  %2583 = vmatprep.subr.bf16.mxu0 0
  %2584 = vmatpush1.bf16.msra.mxu0 %v2252
  %2585 = vmatprep.subr.bf16.mxu0 0
  %2586 = vmatpush1.bf16.msra.mxu0 %v2253
  %2587 = vmatprep.subr.bf16.mxu0 0
  %2588 = vmatpush1.bf16.msra.mxu0 %v2254
  %2589 = vmatprep.subr.bf16.mxu0 0
  %2590 = vmatpush1.bf16.msra.mxu0 %v2255
  %2591 = vmatprep.subr.bf16.mxu0 0
  %2592 = vmatpush1.bf16.msra.mxu0 %v2256
  %2593 = vmatprep.subr.bf16.mxu0 0
  %2594 = vmatpush1.bf16.msra.mxu0 %v2257
  %2595 = vmatprep.subr.bf16.mxu0 0
  %2596 = vmatpush1.bf16.msra.mxu0 %v2258
  %2597 = vmatprep.subr.bf16.mxu0 0
  %2598 = vmatpush1.bf16.msra.mxu0 %v2259
  %2599 = vmatprep.subr.bf16.mxu0 0
  %2600 = vmatpush1.bf16.msra.mxu0 %v2260
  %2601 = vmatprep.subr.bf16.mxu0 0
  %2602 = vmatpush1.bf16.msra.mxu0 %v2261
  %2603 = vmatprep.subr.bf16.mxu0 0
  %2604 = vmatpush1.bf16.msra.mxu0 %v2262
  %2605 = vmatprep.subr.bf16.mxu0 0
  %2606 = vmatpush1.bf16.msra.mxu0 %v2263
  %2607 = vmatprep.subr.bf16.mxu0 0
  %2608 = vmatpush1.bf16.msra.mxu0 %v2264
  %2609 = vmatprep.subr.bf16.mxu0 0
  %2610 = vmatpush1.bf16.msra.mxu0 %v2265
  %2611 = vmatprep.subr.bf16.mxu0 0
  %2612 = vmatpush1.bf16.msra.mxu0 %v2266
  %2613 = vmatprep.subr.bf16.mxu0 0
  %2614 = vmatpush1.bf16.msra.mxu0 %v2267
  %2615 = vmatprep.mubr.bf16.mxu0 %v1420
  %2616 = vmatmul.mubr.bf16.gmra.mrb[0].mxu0 %v1419
  %v2617 = vpop.f32.mrb[0].mxu0
  %v2618 = vadd.f32 %v2577, %v2617
  %v2619 = vpop.f32.mrb[0].mxu0
  %v2620 = vpop.f32.mrb[0].mxu0
  %v2621 = vadd.f32 %v2580, %v2620
  %v2622 = vpop.f32.mrb[0].mxu0
  %2623 = vdwg.mxu0
  %2624 = vmatprep.subr.bf16.mxu0 0
  %2625 = vmatpush1.bf16.msra.mxu0 %v2268
  %2626 = vmatprep.subr.bf16.mxu0 0
  %2627 = vmatpush1.bf16.msra.mxu0 %v2269
  %2628 = vmatprep.subr.bf16.mxu0 0
  %2629 = vmatpush1.bf16.msra.mxu0 %v2270
  %2630 = vmatprep.subr.bf16.mxu0 0
  %2631 = vmatpush1.bf16.msra.mxu0 %v2271
  %2632 = vmatprep.subr.bf16.mxu0 0
  %2633 = vmatpush1.bf16.msra.mxu0 %v2272
  %2634 = vmatprep.subr.bf16.mxu0 0
  %2635 = vmatpush1.bf16.msra.mxu0 %v2273
  %2636 = vmatprep.subr.bf16.mxu0 0
  %2637 = vmatpush1.bf16.msra.mxu0 %v2274
  %2638 = vmatprep.subr.bf16.mxu0 0
  %2639 = vmatpush1.bf16.msra.mxu0 %v2275
  %2640 = vmatprep.subr.bf16.mxu0 0
  %2641 = vmatpush1.bf16.msra.mxu0 %v2276
  %2642 = vmatprep.subr.bf16.mxu0 0
  %2643 = vmatpush1.bf16.msra.mxu0 %v2277
  %2644 = vmatprep.subr.bf16.mxu0 0
  %2645 = vmatpush1.bf16.msra.mxu0 %v2278
  %2646 = vmatprep.subr.bf16.mxu0 0
  %2647 = vmatpush1.bf16.msra.mxu0 %v2279
  %2648 = vmatprep.subr.bf16.mxu0 0
  %2649 = vmatpush1.bf16.msra.mxu0 %v2280
  %2650 = vmatprep.subr.bf16.mxu0 0
  %2651 = vmatpush1.bf16.msra.mxu0 %v2281
  %2652 = vmatprep.subr.bf16.mxu0 0
  %2653 = vmatpush1.bf16.msra.mxu0 %v2282
  %2654 = vmatprep.subr.bf16.mxu0 0
  %2655 = vmatpush1.bf16.msra.mxu0 %v2283
  %2656 = vmatprep.mubr.bf16.mxu0 %v1422
  %2657 = vmatmul.mubr.bf16.gmra.mrb[0].mxu0 %v1421
  %v2658 = vpop.f32.mrb[0].mxu0
  %v2659 = vadd.f32 %v2618, %v2658
  %v2660 = vpop.f32.mrb[0].mxu0
  %v2661 = vpop.f32.mrb[0].mxu0
  %v2662 = vadd.f32 %v2621, %v2661
  %v2663 = vpop.f32.mrb[0].mxu0
  %2664 = vdwg.mxu0
  %2665 = vmatprep.subr.bf16.mxu0 0
  %2666 = vmatpush1.bf16.msra.mxu0 %v2284
  %2667 = vmatprep.subr.bf16.mxu0 0
  %2668 = vmatpush1.bf16.msra.mxu0 %v2285
  %2669 = vmatprep.subr.bf16.mxu0 0
  %2670 = vmatpush1.bf16.msra.mxu0 %v2286
  %2671 = vmatprep.subr.bf16.mxu0 0
  %2672 = vmatpush1.bf16.msra.mxu0 %v2287
  %2673 = vmatprep.subr.bf16.mxu0 0
  %2674 = vmatpush1.bf16.msra.mxu0 %v2288
  %2675 = vmatprep.subr.bf16.mxu0 0
  %2676 = vmatpush1.bf16.msra.mxu0 %v2289
  %2677 = vmatprep.subr.bf16.mxu0 0
  %2678 = vmatpush1.bf16.msra.mxu0 %v2290
  %2679 = vmatprep.subr.bf16.mxu0 0
  %2680 = vmatpush1.bf16.msra.mxu0 %v2291
  %2681 = vmatprep.subr.bf16.mxu0 0
  %2682 = vmatpush1.bf16.msra.mxu0 %v2292
  %2683 = vmatprep.subr.bf16.mxu0 0
  %2684 = vmatpush1.bf16.msra.mxu0 %v2293
  %2685 = vmatprep.subr.bf16.mxu0 0
  %2686 = vmatpush1.bf16.msra.mxu0 %v2294
  %2687 = vmatprep.subr.bf16.mxu0 0
  %2688 = vmatpush1.bf16.msra.mxu0 %v2295
  %2689 = vmatprep.subr.bf16.mxu0 0
  %2690 = vmatpush1.bf16.msra.mxu0 %v2296
  %2691 = vmatprep.subr.bf16.mxu0 0
  %2692 = vmatpush1.bf16.msra.mxu0 %v2297
  %2693 = vmatprep.subr.bf16.mxu0 0
  %2694 = vmatpush1.bf16.msra.mxu0 %v2298
  %2695 = vmatprep.subr.bf16.mxu0 0
  %2696 = vmatpush1.bf16.msra.mxu0 %v2299
  %2697 = vmatprep.mubr.bf16.mxu0 %v1424
  %2698 = vmatmul.mubr.bf16.gmra.mrb[0].mxu0 %v1423
  %v2699 = vpop.f32.mrb[0].mxu0
  %v2700 = vadd.f32 %v2659, %v2699
  %v2701 = vpop.f32.mrb[0].mxu0
  %v2702 = vpop.f32.mrb[0].mxu0
  %v2703 = vadd.f32 %v2662, %v2702
  %v2704 = vpop.f32.mrb[0].mxu0
  %2705 = vdwg.mxu0
  %2706 = vmatprep.subr.bf16.mxu0 0
  %2707 = vmatpush1.bf16.msra.mxu0 %v2300
  %2708 = vmatprep.subr.bf16.mxu0 0
  %2709 = vmatpush1.bf16.msra.mxu0 %v2301
  %2710 = vmatprep.subr.bf16.mxu0 0
  %2711 = vmatpush1.bf16.msra.mxu0 %v2302
  %2712 = vmatprep.subr.bf16.mxu0 0
  %2713 = vmatpush1.bf16.msra.mxu0 %v2303
  %2714 = vmatprep.subr.bf16.mxu0 0
  %2715 = vmatpush1.bf16.msra.mxu0 %v2304
  %2716 = vmatprep.subr.bf16.mxu0 0
  %2717 = vmatpush1.bf16.msra.mxu0 %v2305
  %2718 = vmatprep.subr.bf16.mxu0 0
  %2719 = vmatpush1.bf16.msra.mxu0 %v2306
  %2720 = vmatprep.subr.bf16.mxu0 0
  %2721 = vmatpush1.bf16.msra.mxu0 %v2307
  %2722 = vmatprep.subr.bf16.mxu0 0
  %2723 = vmatpush1.bf16.msra.mxu0 %v2308
  %2724 = vmatprep.subr.bf16.mxu0 0
  %2725 = vmatpush1.bf16.msra.mxu0 %v2309
  %2726 = vmatprep.subr.bf16.mxu0 0
  %2727 = vmatpush1.bf16.msra.mxu0 %v2310
  %2728 = vmatprep.subr.bf16.mxu0 0
  %2729 = vmatpush1.bf16.msra.mxu0 %v2311
  %2730 = vmatprep.subr.bf16.mxu0 0
  %2731 = vmatpush1.bf16.msra.mxu0 %v2312
  %2732 = vmatprep.subr.bf16.mxu0 0
  %2733 = vmatpush1.bf16.msra.mxu0 %v2313
  %2734 = vmatprep.subr.bf16.mxu0 0
  %2735 = vmatpush1.bf16.msra.mxu0 %v2314
  %2736 = vmatprep.subr.bf16.mxu0 0
  %2737 = vmatpush1.bf16.msra.mxu0 %v2315
  %2738 = vmatprep.mubr.bf16.mxu0 %v1426
  %2739 = vmatmul.mubr.bf16.gmra.mrb[0].mxu0 %v1425
  %v2740 = vpop.f32.mrb[0].mxu0
  %v2741 = vadd.f32 %v2700, %v2740
  %v2742 = vpop.f32.mrb[0].mxu0
  %v2743 = vpop.f32.mrb[0].mxu0
  %v2744 = vadd.f32 %v2703, %v2743
  %v2745 = vpop.f32.mrb[0].mxu0
  %2746 = vdwg.mxu0
  %2747 = vmatprep.subr.bf16.mxu0 0
  %2748 = vmatpush1.bf16.msra.mxu0 %v2316
  %2749 = vmatprep.subr.bf16.mxu0 0
  %2750 = vmatpush1.bf16.msra.mxu0 %v2317
  %2751 = vmatprep.subr.bf16.mxu0 0
  %2752 = vmatpush1.bf16.msra.mxu0 %v2318
  %2753 = vmatprep.subr.bf16.mxu0 0
  %2754 = vmatpush1.bf16.msra.mxu0 %v2319
  %2755 = vmatprep.subr.bf16.mxu0 0
  %2756 = vmatpush1.bf16.msra.mxu0 %v2320
  %2757 = vmatprep.subr.bf16.mxu0 0
  %2758 = vmatpush1.bf16.msra.mxu0 %v2321
  %2759 = vmatprep.subr.bf16.mxu0 0
  %2760 = vmatpush1.bf16.msra.mxu0 %v2322
  %2761 = vmatprep.subr.bf16.mxu0 0
  %2762 = vmatpush1.bf16.msra.mxu0 %v2323
  %2763 = vmatprep.subr.bf16.mxu0 0
  %2764 = vmatpush1.bf16.msra.mxu0 %v2324
  %2765 = vmatprep.subr.bf16.mxu0 0
  %2766 = vmatpush1.bf16.msra.mxu0 %v2325
  %2767 = vmatprep.subr.bf16.mxu0 0
  %2768 = vmatpush1.bf16.msra.mxu0 %v2326
  %2769 = vmatprep.subr.bf16.mxu0 0
  %2770 = vmatpush1.bf16.msra.mxu0 %v2327
  %2771 = vmatprep.subr.bf16.mxu0 0
  %2772 = vmatpush1.bf16.msra.mxu0 %v2328
  %2773 = vmatprep.subr.bf16.mxu0 0
  %2774 = vmatpush1.bf16.msra.mxu0 %v2329
  %2775 = vmatprep.subr.bf16.mxu0 0
  %2776 = vmatpush1.bf16.msra.mxu0 %v2330
  %2777 = vmatprep.subr.bf16.mxu0 0
  %2778 = vmatpush1.bf16.msra.mxu0 %v2331
  %2779 = vmatprep.mubr.bf16.mxu0 %v1428
  %2780 = vmatmul.mubr.bf16.gmra.mrb[0].mxu0 %v1427
  %v2781 = vpop.f32.mrb[0].mxu0
  %v2782 = vadd.f32 %v2741, %v2781
  %v2783 = vpop.f32.mrb[0].mxu0
  %v2784 = vpop.f32.mrb[0].mxu0
  %v2785 = vadd.f32 %v2744, %v2784
  %v2786 = vpop.f32.mrb[0].mxu0
  %2787 = vdwg.mxu0
  %v2788 = vadd.f32 %v755, %v2782
  %v2789 = vadd.f32 %v756, %v2785
  %v2790 = vld [vmem:[%s13] sm:$0x1]
  %s2791 = scalar_lea.vmem %s13, 1
  %v2792 = vld [vmem:[%s2791] sm:$0x1]
  %v2793 = vsel %vm187, %v2788, 0.0
  %2794 = vadd.xlane.f32.xlu0 %v2793
  %v2795 = vpop.xlane.xlu0 %2794
  %v2796 = vsel %vm187, %v2789, 0.0
  %2797 = vadd.xlane.f32.xlu0 %v2796
  %v2798 = vpop.xlane.xlu0 %2797
  %v2799 = vmul.f32 %v2795, %v720
  %v2800 = vmul.f32 %v2798, %v720
  %v2801 = vsub.f32 %v2788, %v2799
  %v2802 = vsub.f32 %v2789, %v2800
  %v2803 = vmul.f32 %v2801, %v2801
  %v2804 = vmul.f32 %v2802, %v2802
  %v2805 = vsel %vm187, %v2803, 0.0
  %2806 = vadd.xlane.f32.xlu0 %v2805
  %v2807 = vpop.xlane.xlu0 %2806
  %v2808 = vsel %vm187, %v2804, 0.0
  %2809 = vadd.xlane.f32.xlu0 %v2808
  %v2810 = vpop.xlane.xlu0 %2809
  %v2811 = vmul.f32 %v2807, %v720
  %v2812 = vmul.f32 %v2810, %v720
  %v2813 = vadd.f32 %v2811, 1e-05
  %v2814 = vadd.f32 %v2812, 1e-05
  %v2815 = vrsqrt.pop %v2813
  %v2816 = vrsqrt.pop %v2814
  %v2817 = vmul.f32 %v2801, %v2815
  %v2818 = vmul.f32 %v2802, %v2816
  %v2820 = vlaneseq
  %v2821 = vshrl.u32 %v2820, 7
  %v2822 = vsub.s32 0, %v2821
  %v2823 = vrot.slane %v2790, %v2822
  %v2825 = vmul.f32 %v2817, %v2823
  %v2826 = vmul.f32 %v2818, %v2823
  %v2828 = vlaneseq
  %v2829 = vshrl.u32 %v2828, 7
  %v2830 = vsub.s32 0, %v2829
  %v2831 = vrot.slane %v2792, %v2830
  %v2833 = vadd.f32 %v2825, %v2831
  %v2834 = vadd.f32 %v2826, %v2831
  %v2835 = vpack.c.bf16 %v2834, %v2833
  %s2836 = scalar_lea.vmem %s4, 16
  %v2837 = vld [vmem:[%s2836] sm:$0xf]
  %v2838 = vld [vmem:[%s2836 + $0x4] sm:$0xf]
  %v2839 = vld [vmem:[%s2836 + $0x8] sm:$0xf]
  %v2840 = vld [vmem:[%s2836 + $0xc] sm:$0xf]
  %s2841 = scalar_lea.vmem %s5, 1
  %v2842 = vld [vmem:[%s2841] sm:$0x1]
  %v2844 = vlaneseq
  %v2845 = vshrl.u32 %v2844, 7
  %v2846 = vsub.s32 0, %v2845
  %v2847 = vrot.slane %v2842, %v2846
  %v2853 = vunpack.c.l.b16 %v2837
  %v2854 = vunpack.c.l.b16 %v2838
  %v2855 = vunpack.c.l.b16 %v2839
  %v2856 = vunpack.c.l.b16 %v2840
  %v2857 = vpack.c.b16 %v2854, %v2853
  %v2858 = vpack.c.b16 %v2856, %v2855
  %v2862 = vsel %vm187, %v2835, 0
  %2864 = vmatprep.subr.bf16.mxu0 0
  %2865 = vmatpush1.bf16.msra.mxu0 %v2857
  %2866 = vmatprep.subr.bf16.mxu0 0
  %2867 = vmatpush1.bf16.msra.mxu0 %v2858
  %2868 = vmatprep.subr.bf16.mxu0 0
  %2869 = vmatpush1.bf16.msra.mxu0 0
  %2870 = vmatprep.subr.bf16.mxu0 0
  %2871 = vmatpush1.bf16.msra.mxu0 0
  %2872 = vmatprep.subr.bf16.mxu0 0
  %2873 = vmatpush1.bf16.msra.mxu0 0
  %2874 = vmatprep.subr.bf16.mxu0 0
  %2875 = vmatpush1.bf16.msra.mxu0 0
  %2876 = vmatprep.subr.bf16.mxu0 0
  %2877 = vmatpush1.bf16.msra.mxu0 0
  %2878 = vmatprep.subr.bf16.mxu0 0
  %2879 = vmatpush1.bf16.msra.mxu0 0
  %2880 = vmatprep.subr.bf16.mxu0 0
  %2881 = vmatpush1.bf16.msra.mxu0 0
  %2882 = vmatprep.subr.bf16.mxu0 0
  %2883 = vmatpush1.bf16.msra.mxu0 0
  %2884 = vmatprep.subr.bf16.mxu0 0
  %2885 = vmatpush1.bf16.msra.mxu0 0
  %2886 = vmatprep.subr.bf16.mxu0 0
  %2887 = vmatpush1.bf16.msra.mxu0 0
  %2888 = vmatprep.subr.bf16.mxu0 0
  %2889 = vmatpush1.bf16.msra.mxu0 0
  %2890 = vmatprep.subr.bf16.mxu0 0
  %2891 = vmatpush1.bf16.msra.mxu0 0
  %2892 = vmatprep.subr.bf16.mxu0 0
  %2893 = vmatpush1.bf16.msra.mxu0 0
  %2894 = vmatprep.subr.bf16.mxu0 0
  %2895 = vmatpush1.bf16.msra.mxu0 0
  %2896 = vmatprep.mubr.bf16.mxu0 0
  %2897 = vmatmul.mubr.bf16.gmra.mrb[0].mxu0 %v2862
  %v2898 = vpop.f32.mrb[0].mxu0
  %v2899 = vadd.f32 %v2847, %v2898
  %v2900 = vpop.f32.mrb[0].mxu0
  %v2901 = vpop.f32.mrb[0].mxu0
  %v2902 = vadd.f32 %v2847, %v2901
  %v2903 = vpop.f32.mrb[0].mxu0
  %2904 = vdwg.mxu0
  %2907 = vrot.lane.b32.xlu0 %v2899, 96
  %v2908 = vpop.permute.xlu0 %2907
  %2909 = vrot.lane.b32.xlu0 %v2902, 96
  %v2910 = vpop.permute.xlu0 %2909
  %v2911 = vsel %vm238, %v2899, 0
  %v2913 = vsel %vm238, %v2902, 0
  %v2915 = vsel %vm238, %v2908, 0
  %v2917 = vsel %vm238, %v2910, 0
  %2919 = vmatprep.subr.mxu0 0.0
  %2920 = vmatpush1.xpose.msra.mxu0 %v2915
  %2921 = vmatprep.subr.mxu0 0.0
  %2922 = vmatpush1.xpose.msra.mxu0 %v2917
  %2923 = vmatprep.subr.mxu0 0.0
  %2924 = vmatpush1.xpose.msra.mxu0 0.0
  %2925 = vmatprep.subr.mxu0 0.0
  %2926 = vmatpush1.xpose.msra.mxu0 0.0
  %2927 = vmatprep.subr.mxu0 0.0
  %2928 = vmatpush1.xpose.msra.mxu0 0.0
  %2929 = vmatprep.subr.mxu0 0.0
  %2930 = vmatpush1.xpose.msra.mxu0 0.0
  %2931 = vmatprep.subr.mxu0 0.0
  %2932 = vmatpush1.xpose.msra.mxu0 0.0
  %2933 = vmatprep.subr.mxu0 0.0
  %2934 = vmatpush1.xpose.msra.mxu0 0.0
  %2935 = vmatprep.subr.mxu0 0.0
  %2936 = vmatpush1.xpose.msra.mxu0 0.0
  %2937 = vmatprep.subr.mxu0 0.0
  %2938 = vmatpush1.xpose.msra.mxu0 0.0
  %2939 = vmatprep.subr.mxu0 0.0
  %2940 = vmatpush1.xpose.msra.mxu0 0.0
  %2941 = vmatprep.subr.mxu0 0.0
  %2942 = vmatpush1.xpose.msra.mxu0 0.0
  %2943 = vmatprep.subr.mxu0 0.0
  %2944 = vmatpush1.xpose.msra.mxu0 0.0
  %2945 = vmatprep.subr.mxu0 0.0
  %2946 = vmatpush1.xpose.msra.mxu0 0.0
  %2947 = vmatprep.subr.mxu0 0.0
  %2948 = vmatpush1.xpose.msra.mxu0 0.0
  %2949 = vmatprep.subr.mxu0 0.0
  %2950 = vmatpush1.xpose.msra.mxu0 0.0
  %2951 = vmatprep.subr.mxu0 0.0
  %2952 = vmatpush1.xpose.msra.mxu0 0.0
  %2953 = vmatprep.subr.mxu0 0.0
  %2954 = vmatpush1.xpose.msra.mxu0 0.0
  %2955 = vmatprep.subr.mxu0 0.0
  %2956 = vmatpush1.xpose.msra.mxu0 0.0
  %2957 = vmatprep.subr.mxu0 0.0
  %2958 = vmatpush1.xpose.msra.mxu0 0.0
  %2959 = vmatprep.subr.mxu0 0.0
  %2960 = vmatpush1.xpose.msra.mxu0 0.0
  %2961 = vmatprep.subr.mxu0 0.0
  %2962 = vmatpush1.xpose.msra.mxu0 0.0
  %2963 = vmatprep.subr.mxu0 0.0
  %2964 = vmatpush1.xpose.msra.mxu0 0.0
  %2965 = vmatprep.subr.mxu0 0.0
  %2966 = vmatpush1.xpose.msra.mxu0 0.0
  %2967 = vmatprep.subr.mxu0 0.0
  %2968 = vmatpush1.xpose.msra.mxu0 0.0
  %2969 = vmatprep.subr.mxu0 0.0
  %2970 = vmatpush1.xpose.msra.mxu0 0.0
  %2971 = vmatprep.subr.mxu0 0.0
  %2972 = vmatpush1.xpose.msra.mxu0 0.0
  %2973 = vmatprep.subr.mxu0 0.0
  %2974 = vmatpush1.xpose.msra.mxu0 0.0
  %2975 = vmatprep.subr.mxu0 0.0
  %2976 = vmatpush1.xpose.msra.mxu0 0.0
  %2977 = vmatprep.subr.mxu0 0.0
  %2978 = vmatpush1.xpose.msra.mxu0 0.0
  %2979 = vmatprep.subr.mxu0 0.0
  %2980 = vmatpush1.xpose.msra.mxu0 0.0
  %2981 = vmatprep.subr.mxu0 0.0
  %2982 = vmatpush1.xpose.msra.mxu0 0.0
  %2983 = vmatprep.mubr.f32.mxu0 0.0
  %2984 = vmatmul.mubr.f32.gmra.mrb[0].mxu0 %v2911
  %v2985 = vpop.f32.mrb[0].mxu0
  %v2986 = vadd.f32 %v161, %v2985
  %v2987 = vpop.f32.mrb[0].mxu0
  %2988 = vmatprep.mubr.f32.mxu0 0.0
  %2989 = vmatmul.mubr.f32.gmra.mrb[0].mxu0 %v2913
  %v2990 = vpop.f32.mrb[0].mxu0
  %v2991 = vadd.f32 %v162, %v2990
  %v2992 = vpop.f32.mrb[0].mxu0
  %2993 = vdwg.mxu0
  %v2994 = vsel %vm238, %v2986, -inf
  %2995 = vmax.xlane.f32.xlu0 %v2994
  %v2996 = vpop.xlane.xlu0 %2995
  %v2997 = vsel %vm238, %v2991, -inf
  %2998 = vmax.xlane.f32.xlu0 %v2997
  %v2999 = vpop.xlane.xlu0 %2998
  %v3000 = vsub.f32 %v2986, %v2996
  %v3001 = vsub.f32 %v2991, %v2999
  %v3002 = vmul.f32 %v3000, 1.442695
  %v3003 = vpow.pop %v3002
  %v3004 = vmul.f32 %v3001, 1.442695
  %v3005 = vpow.pop %v3004
  %v3006 = vsel %vm238, %v3003, 0.0
  %3007 = vadd.xlane.f32.xlu0 %v3006
  %v3008 = vpop.xlane.xlu0 %3007
  %v3009 = vsel %vm238, %v3005, 0.0
  %3010 = vadd.xlane.f32.xlu0 %v3009
  %v3011 = vpop.xlane.xlu0 %3010
  %v3012 = vrcp.pop %v3008
  %v3013 = vrcp.pop %v3011
  %v3014 = vmul.f32 %v3003, %v3012
  %v3015 = vmul.f32 %v3005, %v3013
  %3016 = vrot.lane.b32.xlu0 %v2899, 64
  %v3017 = vpop.permute.xlu0 %3016
  %3018 = vrot.lane.b32.xlu0 %v2902, 64
  %v3019 = vpop.permute.xlu0 %3018
  %v3023 = vsel %vm238, %v3014, 0
  %v3026 = vsel %vm238, %v3015, 0
  %3028 = vmatprep.subr.mxu0 0.0
  %3029 = vmatpush1.msra.mxu0 %v3017
  %3030 = vmatprep.subr.mxu0 0.0
  %3031 = vmatpush1.msra.mxu0 %v3019
  %3032 = vmatprep.subr.mxu0 0.0
  %3033 = vmatpush1.msra.mxu0 0.0
  %3034 = vmatprep.subr.mxu0 0.0
  %3035 = vmatpush1.msra.mxu0 0.0
  %3036 = vmatprep.subr.mxu0 0.0
  %3037 = vmatpush1.msra.mxu0 0.0
  %3038 = vmatprep.subr.mxu0 0.0
  %3039 = vmatpush1.msra.mxu0 0.0
  %3040 = vmatprep.subr.mxu0 0.0
  %3041 = vmatpush1.msra.mxu0 0.0
  %3042 = vmatprep.subr.mxu0 0.0
  %3043 = vmatpush1.msra.mxu0 0.0
  %3044 = vmatprep.subr.mxu0 0.0
  %3045 = vmatpush1.msra.mxu0 0.0
  %3046 = vmatprep.subr.mxu0 0.0
  %3047 = vmatpush1.msra.mxu0 0.0
  %3048 = vmatprep.subr.mxu0 0.0
  %3049 = vmatpush1.msra.mxu0 0.0
  %3050 = vmatprep.subr.mxu0 0.0
  %3051 = vmatpush1.msra.mxu0 0.0
  %3052 = vmatprep.subr.mxu0 0.0
  %3053 = vmatpush1.msra.mxu0 0.0
  %3054 = vmatprep.subr.mxu0 0.0
  %3055 = vmatpush1.msra.mxu0 0.0
  %3056 = vmatprep.subr.mxu0 0.0
  %3057 = vmatpush1.msra.mxu0 0.0
  %3058 = vmatprep.subr.mxu0 0.0
  %3059 = vmatpush1.msra.mxu0 0.0
  %3060 = vmatprep.subr.mxu0 0.0
  %3061 = vmatpush1.msra.mxu0 0.0
  %3062 = vmatprep.subr.mxu0 0.0
  %3063 = vmatpush1.msra.mxu0 0.0
  %3064 = vmatprep.subr.mxu0 0.0
  %3065 = vmatpush1.msra.mxu0 0.0
  %3066 = vmatprep.subr.mxu0 0.0
  %3067 = vmatpush1.msra.mxu0 0.0
  %3068 = vmatprep.subr.mxu0 0.0
  %3069 = vmatpush1.msra.mxu0 0.0
  %3070 = vmatprep.subr.mxu0 0.0
  %3071 = vmatpush1.msra.mxu0 0.0
  %3072 = vmatprep.subr.mxu0 0.0
  %3073 = vmatpush1.msra.mxu0 0.0
  %3074 = vmatprep.subr.mxu0 0.0
  %3075 = vmatpush1.msra.mxu0 0.0
  %3076 = vmatprep.subr.mxu0 0.0
  %3077 = vmatpush1.msra.mxu0 0.0
  %3078 = vmatprep.subr.mxu0 0.0
  %3079 = vmatpush1.msra.mxu0 0.0
  %3080 = vmatprep.subr.mxu0 0.0
  %3081 = vmatpush1.msra.mxu0 0.0
  %3082 = vmatprep.subr.mxu0 0.0
  %3083 = vmatpush1.msra.mxu0 0.0
  %3084 = vmatprep.subr.mxu0 0.0
  %3085 = vmatpush1.msra.mxu0 0.0
  %3086 = vmatprep.subr.mxu0 0.0
  %3087 = vmatpush1.msra.mxu0 0.0
  %3088 = vmatprep.subr.mxu0 0.0
  %3089 = vmatpush1.msra.mxu0 0.0
  %3090 = vmatprep.subr.mxu0 0.0
  %3091 = vmatpush1.msra.mxu0 0.0
  %3092 = vmatprep.mubr.f32.mxu0 0.0
  %3093 = vmatmul.mubr.f32.gmra.mrb[0].mxu0 %v3023
  %v3094 = vpop.f32.mrb[0].mxu0
  %v3095 = vadd.f32 0.0, %v3094
  %v3096 = vpop.f32.mrb[0].mxu0
  %3097 = vmatprep.mubr.f32.mxu0 0.0
  %3098 = vmatmul.mubr.f32.gmra.mrb[0].mxu0 %v3026
  %v3099 = vpop.f32.mrb[0].mxu0
  %v3100 = vadd.f32 0.0, %v3099
  %v3101 = vpop.f32.mrb[0].mxu0
  %3102 = vdwg.mxu0
  %3103 = vrot.lane.b32.xlu0 %v2899, 112
  %v3104 = vpop.permute.xlu0 %3103
  %3105 = vrot.lane.b32.xlu0 %v2902, 112
  %v3106 = vpop.permute.xlu0 %3105
  %3107 = vrot.lane.b32.xlu0 %v2899, 80
  %v3108 = vpop.permute.xlu0 %3107
  %3109 = vrot.lane.b32.xlu0 %v2902, 80
  %v3110 = vpop.permute.xlu0 %3109
  %v3111 = vsel %vm238, %v3104, 0
  %v3113 = vsel %vm238, %v3106, 0
  %v3115 = vsel %vm238, %v3108, 0
  %v3117 = vsel %vm238, %v3110, 0
  %3119 = vmatprep.subr.mxu0 0.0
  %3120 = vmatpush1.xpose.msra.mxu0 %v3115
  %3121 = vmatprep.subr.mxu0 0.0
  %3122 = vmatpush1.xpose.msra.mxu0 %v3117
  %3123 = vmatprep.subr.mxu0 0.0
  %3124 = vmatpush1.xpose.msra.mxu0 0.0
  %3125 = vmatprep.subr.mxu0 0.0
  %3126 = vmatpush1.xpose.msra.mxu0 0.0
  %3127 = vmatprep.subr.mxu0 0.0
  %3128 = vmatpush1.xpose.msra.mxu0 0.0
  %3129 = vmatprep.subr.mxu0 0.0
  %3130 = vmatpush1.xpose.msra.mxu0 0.0
  %3131 = vmatprep.subr.mxu0 0.0
  %3132 = vmatpush1.xpose.msra.mxu0 0.0
  %3133 = vmatprep.subr.mxu0 0.0
  %3134 = vmatpush1.xpose.msra.mxu0 0.0
  %3135 = vmatprep.subr.mxu0 0.0
  %3136 = vmatpush1.xpose.msra.mxu0 0.0
  %3137 = vmatprep.subr.mxu0 0.0
  %3138 = vmatpush1.xpose.msra.mxu0 0.0
  %3139 = vmatprep.subr.mxu0 0.0
  %3140 = vmatpush1.xpose.msra.mxu0 0.0
  %3141 = vmatprep.subr.mxu0 0.0
  %3142 = vmatpush1.xpose.msra.mxu0 0.0
  %3143 = vmatprep.subr.mxu0 0.0
  %3144 = vmatpush1.xpose.msra.mxu0 0.0
  %3145 = vmatprep.subr.mxu0 0.0
  %3146 = vmatpush1.xpose.msra.mxu0 0.0
  %3147 = vmatprep.subr.mxu0 0.0
  %3148 = vmatpush1.xpose.msra.mxu0 0.0
  %3149 = vmatprep.subr.mxu0 0.0
  %3150 = vmatpush1.xpose.msra.mxu0 0.0
  %3151 = vmatprep.subr.mxu0 0.0
  %3152 = vmatpush1.xpose.msra.mxu0 0.0
  %3153 = vmatprep.subr.mxu0 0.0
  %3154 = vmatpush1.xpose.msra.mxu0 0.0
  %3155 = vmatprep.subr.mxu0 0.0
  %3156 = vmatpush1.xpose.msra.mxu0 0.0
  %3157 = vmatprep.subr.mxu0 0.0
  %3158 = vmatpush1.xpose.msra.mxu0 0.0
  %3159 = vmatprep.subr.mxu0 0.0
  %3160 = vmatpush1.xpose.msra.mxu0 0.0
  %3161 = vmatprep.subr.mxu0 0.0
  %3162 = vmatpush1.xpose.msra.mxu0 0.0
  %3163 = vmatprep.subr.mxu0 0.0
  %3164 = vmatpush1.xpose.msra.mxu0 0.0
  %3165 = vmatprep.subr.mxu0 0.0
  %3166 = vmatpush1.xpose.msra.mxu0 0.0
  %3167 = vmatprep.subr.mxu0 0.0
  %3168 = vmatpush1.xpose.msra.mxu0 0.0
  %3169 = vmatprep.subr.mxu0 0.0
  %3170 = vmatpush1.xpose.msra.mxu0 0.0
  %3171 = vmatprep.subr.mxu0 0.0
  %3172 = vmatpush1.xpose.msra.mxu0 0.0
  %3173 = vmatprep.subr.mxu0 0.0
  %3174 = vmatpush1.xpose.msra.mxu0 0.0
  %3175 = vmatprep.subr.mxu0 0.0
  %3176 = vmatpush1.xpose.msra.mxu0 0.0
  %3177 = vmatprep.subr.mxu0 0.0
  %3178 = vmatpush1.xpose.msra.mxu0 0.0
  %3179 = vmatprep.subr.mxu0 0.0
  %3180 = vmatpush1.xpose.msra.mxu0 0.0
  %3181 = vmatprep.subr.mxu0 0.0
  %3182 = vmatpush1.xpose.msra.mxu0 0.0
  %3183 = vmatprep.mubr.f32.mxu0 0.0
  %3184 = vmatmul.mubr.f32.gmra.mrb[0].mxu0 %v3111
  %v3185 = vpop.f32.mrb[0].mxu0
  %v3186 = vadd.f32 %v161, %v3185
  %v3187 = vpop.f32.mrb[0].mxu0
  %3188 = vmatprep.mubr.f32.mxu0 0.0
  %3189 = vmatmul.mubr.f32.gmra.mrb[0].mxu0 %v3113
  %v3190 = vpop.f32.mrb[0].mxu0
  %v3191 = vadd.f32 %v162, %v3190
  %v3192 = vpop.f32.mrb[0].mxu0
  %3193 = vdwg.mxu0
  %v3194 = vsel %vm238, %v3186, -inf
  %3195 = vmax.xlane.f32.xlu0 %v3194
  %v3196 = vpop.xlane.xlu0 %3195
  %v3197 = vsel %vm238, %v3191, -inf
  %3198 = vmax.xlane.f32.xlu0 %v3197
  %v3199 = vpop.xlane.xlu0 %3198
  %v3200 = vsub.f32 %v3186, %v3196
  %v3201 = vsub.f32 %v3191, %v3199
  %v3202 = vmul.f32 %v3200, 1.442695
  %v3203 = vpow.pop %v3202
  %v3204 = vmul.f32 %v3201, 1.442695
  %v3205 = vpow.pop %v3204
  %v3206 = vsel %vm238, %v3203, 0.0
  %3207 = vadd.xlane.f32.xlu0 %v3206
  %v3208 = vpop.xlane.xlu0 %3207
  %v3209 = vsel %vm238, %v3205, 0.0
  %3210 = vadd.xlane.f32.xlu0 %v3209
  %v3211 = vpop.xlane.xlu0 %3210
  %v3212 = vrcp.pop %v3208
  %v3213 = vrcp.pop %v3211
  %v3214 = vmul.f32 %v3203, %v3212
  %v3215 = vmul.f32 %v3205, %v3213
  %3216 = vrot.lane.b32.xlu0 %v2899, 48
  %v3217 = vpop.permute.xlu0 %3216
  %3218 = vrot.lane.b32.xlu0 %v2902, 48
  %v3219 = vpop.permute.xlu0 %3218
  %v3223 = vsel %vm238, %v3214, 0
  %v3226 = vsel %vm238, %v3215, 0
  %3228 = vmatprep.subr.mxu0 0.0
  %3229 = vmatpush1.msra.mxu0 %v3217
  %3230 = vmatprep.subr.mxu0 0.0
  %3231 = vmatpush1.msra.mxu0 %v3219
  %3232 = vmatprep.subr.mxu0 0.0
  %3233 = vmatpush1.msra.mxu0 0.0
  %3234 = vmatprep.subr.mxu0 0.0
  %3235 = vmatpush1.msra.mxu0 0.0
  %3236 = vmatprep.subr.mxu0 0.0
  %3237 = vmatpush1.msra.mxu0 0.0
  %3238 = vmatprep.subr.mxu0 0.0
  %3239 = vmatpush1.msra.mxu0 0.0
  %3240 = vmatprep.subr.mxu0 0.0
  %3241 = vmatpush1.msra.mxu0 0.0
  %3242 = vmatprep.subr.mxu0 0.0
  %3243 = vmatpush1.msra.mxu0 0.0
  %3244 = vmatprep.subr.mxu0 0.0
  %3245 = vmatpush1.msra.mxu0 0.0
  %3246 = vmatprep.subr.mxu0 0.0
  %3247 = vmatpush1.msra.mxu0 0.0
  %3248 = vmatprep.subr.mxu0 0.0
  %3249 = vmatpush1.msra.mxu0 0.0
  %3250 = vmatprep.subr.mxu0 0.0
  %3251 = vmatpush1.msra.mxu0 0.0
  %3252 = vmatprep.subr.mxu0 0.0
  %3253 = vmatpush1.msra.mxu0 0.0
  %3254 = vmatprep.subr.mxu0 0.0
  %3255 = vmatpush1.msra.mxu0 0.0
  %3256 = vmatprep.subr.mxu0 0.0
  %3257 = vmatpush1.msra.mxu0 0.0
  %3258 = vmatprep.subr.mxu0 0.0
  %3259 = vmatpush1.msra.mxu0 0.0
  %3260 = vmatprep.subr.mxu0 0.0
  %3261 = vmatpush1.msra.mxu0 0.0
  %3262 = vmatprep.subr.mxu0 0.0
  %3263 = vmatpush1.msra.mxu0 0.0
  %3264 = vmatprep.subr.mxu0 0.0
  %3265 = vmatpush1.msra.mxu0 0.0
  %3266 = vmatprep.subr.mxu0 0.0
  %3267 = vmatpush1.msra.mxu0 0.0
  %3268 = vmatprep.subr.mxu0 0.0
  %3269 = vmatpush1.msra.mxu0 0.0
  %3270 = vmatprep.subr.mxu0 0.0
  %3271 = vmatpush1.msra.mxu0 0.0
  %3272 = vmatprep.subr.mxu0 0.0
  %3273 = vmatpush1.msra.mxu0 0.0
  %3274 = vmatprep.subr.mxu0 0.0
  %3275 = vmatpush1.msra.mxu0 0.0
  %3276 = vmatprep.subr.mxu0 0.0
  %3277 = vmatpush1.msra.mxu0 0.0
  %3278 = vmatprep.subr.mxu0 0.0
  %3279 = vmatpush1.msra.mxu0 0.0
  %3280 = vmatprep.subr.mxu0 0.0
  %3281 = vmatpush1.msra.mxu0 0.0
  %3282 = vmatprep.subr.mxu0 0.0
  %3283 = vmatpush1.msra.mxu0 0.0
  %3284 = vmatprep.subr.mxu0 0.0
  %3285 = vmatpush1.msra.mxu0 0.0
  %3286 = vmatprep.subr.mxu0 0.0
  %3287 = vmatpush1.msra.mxu0 0.0
  %3288 = vmatprep.subr.mxu0 0.0
  %3289 = vmatpush1.msra.mxu0 0.0
  %3290 = vmatprep.subr.mxu0 0.0
  %3291 = vmatpush1.msra.mxu0 0.0
  %3292 = vmatprep.mubr.f32.mxu0 0.0
  %3293 = vmatmul.mubr.f32.gmra.mrb[0].mxu0 %v3223
  %v3294 = vpop.f32.mrb[0].mxu0
  %v3295 = vadd.f32 0.0, %v3294
  %v3296 = vpop.f32.mrb[0].mxu0
  %3297 = vmatprep.mubr.f32.mxu0 0.0
  %3298 = vmatmul.mubr.f32.gmra.mrb[0].mxu0 %v3226
  %v3299 = vpop.f32.mrb[0].mxu0
  %v3300 = vadd.f32 0.0, %v3299
  %v3301 = vpop.f32.mrb[0].mxu0
  %3302 = vdwg.mxu0
  %3305 = vrot.lane.b32.xlu0 %v3295, 16
  %v3306 = vpop.permute.xlu0 %3305
  %3307 = vrot.lane.b32.xlu0 %v3300, 16
  %v3308 = vpop.permute.xlu0 %3307
  %v3311 = vsel %vm238, %v3095, %v3306
  %v3312 = vsel %vm238, %v3100, %v3308
  %v3313 = vpack.c.bf16 %v3312, %v3311
  %s3314 = scalar_lea.vmem %s6, 16
  %v3315 = vld [vmem:[%s3314] sm:$0xf]
  %v3316 = vld [vmem:[%s3314 + $0x4] sm:$0xf]
  %v3317 = vld [vmem:[%s3314 + $0x8] sm:$0xf]
  %v3318 = vld [vmem:[%s3314 + $0xc] sm:$0xf]
  %s3319 = scalar_lea.vmem %s7, 1
  %v3320 = vld [vmem:[%s3319] sm:$0x1]
  %v3322 = vlaneseq
  %v3323 = vshrl.u32 %v3322, 7
  %v3324 = vsub.s32 0, %v3323
  %v3325 = vrot.slane %v3320, %v3324
  %v3331 = vunpack.c.l.b16 %v3315
  %v3332 = vunpack.c.l.b16 %v3316
  %v3333 = vunpack.c.l.b16 %v3317
  %v3334 = vunpack.c.l.b16 %v3318
  %v3335 = vpack.c.b16 %v3332, %v3331
  %v3336 = vpack.c.b16 %v3334, %v3333
  %v3340 = vsel %vm187, %v3313, 0
  %3342 = vmatprep.subr.bf16.mxu0 0
  %3343 = vmatpush1.bf16.msra.mxu0 %v3335
  %3344 = vmatprep.subr.bf16.mxu0 0
  %3345 = vmatpush1.bf16.msra.mxu0 %v3336
  %3346 = vmatprep.subr.bf16.mxu0 0
  %3347 = vmatpush1.bf16.msra.mxu0 0
  %3348 = vmatprep.subr.bf16.mxu0 0
  %3349 = vmatpush1.bf16.msra.mxu0 0
  %3350 = vmatprep.subr.bf16.mxu0 0
  %3351 = vmatpush1.bf16.msra.mxu0 0
  %3352 = vmatprep.subr.bf16.mxu0 0
  %3353 = vmatpush1.bf16.msra.mxu0 0
  %3354 = vmatprep.subr.bf16.mxu0 0
  %3355 = vmatpush1.bf16.msra.mxu0 0
  %3356 = vmatprep.subr.bf16.mxu0 0
  %3357 = vmatpush1.bf16.msra.mxu0 0
  %3358 = vmatprep.subr.bf16.mxu0 0
  %3359 = vmatpush1.bf16.msra.mxu0 0
  %3360 = vmatprep.subr.bf16.mxu0 0
  %3361 = vmatpush1.bf16.msra.mxu0 0
  %3362 = vmatprep.subr.bf16.mxu0 0
  %3363 = vmatpush1.bf16.msra.mxu0 0
  %3364 = vmatprep.subr.bf16.mxu0 0
  %3365 = vmatpush1.bf16.msra.mxu0 0
  %3366 = vmatprep.subr.bf16.mxu0 0
  %3367 = vmatpush1.bf16.msra.mxu0 0
  %3368 = vmatprep.subr.bf16.mxu0 0
  %3369 = vmatpush1.bf16.msra.mxu0 0
  %3370 = vmatprep.subr.bf16.mxu0 0
  %3371 = vmatpush1.bf16.msra.mxu0 0
  %3372 = vmatprep.subr.bf16.mxu0 0
  %3373 = vmatpush1.bf16.msra.mxu0 0
  %3374 = vmatprep.mubr.bf16.mxu0 0
  %3375 = vmatmul.mubr.bf16.gmra.mrb[0].mxu0 %v3340
  %v3376 = vpop.f32.mrb[0].mxu0
  %v3377 = vadd.f32 %v3325, %v3376
  %v3378 = vpop.f32.mrb[0].mxu0
  %v3379 = vpop.f32.mrb[0].mxu0
  %v3380 = vadd.f32 %v3325, %v3379
  %v3381 = vpop.f32.mrb[0].mxu0
  %3382 = vdwg.mxu0
  %v3383 = vadd.f32 %v2833, %v3377
  %v3384 = vadd.f32 %v2834, %v3380
  %s3385 = scalar_lea.vmem %s8, 2
  %v3386 = vld [vmem:[%s3385] sm:$0x1]
  %s3387 = scalar_lea.vmem %s8, 3
  %v3388 = vld [vmem:[%s3387] sm:$0x1]
  %v3389 = vsel %vm187, %v3383, 0.0
  %3390 = vadd.xlane.f32.xlu0 %v3389
  %v3391 = vpop.xlane.xlu0 %3390
  %v3392 = vsel %vm187, %v3384, 0.0
  %3393 = vadd.xlane.f32.xlu0 %v3392
  %v3394 = vpop.xlane.xlu0 %3393
  %v3395 = vmul.f32 %v3391, %v720
  %v3396 = vmul.f32 %v3394, %v720
  %v3397 = vsub.f32 %v3383, %v3395
  %v3398 = vsub.f32 %v3384, %v3396
  %v3399 = vmul.f32 %v3397, %v3397
  %v3400 = vmul.f32 %v3398, %v3398
  %v3401 = vsel %vm187, %v3399, 0.0
  %3402 = vadd.xlane.f32.xlu0 %v3401
  %v3403 = vpop.xlane.xlu0 %3402
  %v3404 = vsel %vm187, %v3400, 0.0
  %3405 = vadd.xlane.f32.xlu0 %v3404
  %v3406 = vpop.xlane.xlu0 %3405
  %v3407 = vmul.f32 %v3403, %v720
  %v3408 = vmul.f32 %v3406, %v720
  %v3409 = vadd.f32 %v3407, 1e-05
  %v3410 = vadd.f32 %v3408, 1e-05
  %v3411 = vrsqrt.pop %v3409
  %v3412 = vrsqrt.pop %v3410
  %v3413 = vmul.f32 %v3397, %v3411
  %v3414 = vmul.f32 %v3398, %v3412
  %v3416 = vlaneseq
  %v3417 = vshrl.u32 %v3416, 7
  %v3418 = vsub.s32 0, %v3417
  %v3419 = vrot.slane %v3386, %v3418
  %v3421 = vmul.f32 %v3413, %v3419
  %v3422 = vmul.f32 %v3414, %v3419
  %v3424 = vlaneseq
  %v3425 = vshrl.u32 %v3424, 7
  %v3426 = vsub.s32 0, %v3425
  %v3427 = vrot.slane %v3388, %v3426
  %v3429 = vadd.f32 %v3421, %v3427
  %v3430 = vadd.f32 %v3422, %v3427
  %v3431 = vpack.c.bf16 %v3430, %v3429
  %s3432 = scalar_lea.vmem %s9, 256
  %v3433 = vld [vmem:[%s3432] sm:$0xff]
  %v3434 = vld [vmem:[%s3432 + $0x8] sm:$0xff]
  %v3435 = vld [vmem:[%s3432 + $0x10] sm:$0xff]
  %v3436 = vld [vmem:[%s3432 + $0x18] sm:$0xff]
  %v3437 = vld [vmem:[%s3432 + $0x20] sm:$0xff]
  %v3438 = vld [vmem:[%s3432 + $0x28] sm:$0xff]
  %v3439 = vld [vmem:[%s3432 + $0x30] sm:$0xff]
  %v3440 = vld [vmem:[%s3432 + $0x38] sm:$0xff]
  %v3441 = vld [vmem:[%s3432 + $0x40] sm:$0xff]
  %v3442 = vld [vmem:[%s3432 + $0x48] sm:$0xff]
  %v3443 = vld [vmem:[%s3432 + $0x50] sm:$0xff]
  %v3444 = vld [vmem:[%s3432 + $0x58] sm:$0xff]
  %v3445 = vld [vmem:[%s3432 + $0x60] sm:$0xff]
  %v3446 = vld [vmem:[%s3432 + $0x68] sm:$0xff]
  %v3447 = vld [vmem:[%s3432 + $0x70] sm:$0xff]
  %v3448 = vld [vmem:[%s3432 + $0x78] sm:$0xff]
  %v3449 = vld [vmem:[%s3432 + $0x80] sm:$0xff]
  %v3450 = vld [vmem:[%s3432 + $0x88] sm:$0xff]
  %v3451 = vld [vmem:[%s3432 + $0x90] sm:$0xff]
  %v3452 = vld [vmem:[%s3432 + $0x98] sm:$0xff]
  %v3453 = vld [vmem:[%s3432 + $0xa0] sm:$0xff]
  %v3454 = vld [vmem:[%s3432 + $0xa8] sm:$0xff]
  %v3455 = vld [vmem:[%s3432 + $0xb0] sm:$0xff]
  %v3456 = vld [vmem:[%s3432 + $0xb8] sm:$0xff]
  %v3457 = vld [vmem:[%s3432 + $0xc0] sm:$0xff]
  %v3458 = vld [vmem:[%s3432 + $0xc8] sm:$0xff]
  %v3459 = vld [vmem:[%s3432 + $0xd0] sm:$0xff]
  %v3460 = vld [vmem:[%s3432 + $0xd8] sm:$0xff]
  %v3461 = vld [vmem:[%s3432 + $0xe0] sm:$0xff]
  %v3462 = vld [vmem:[%s3432 + $0xe8] sm:$0xff]
  %v3463 = vld [vmem:[%s3432 + $0xf0] sm:$0xff]
  %v3464 = vld [vmem:[%s3432 + $0xf8] sm:$0xff]
  %s3465 = scalar_lea.vmem %s10, 16
  %v3466 = vld [vmem:[%s3465] sm:$0xff]
  %v3467 = vld [vmem:[%s3465 + $0x8] sm:$0xff]
  %v3470 = vlaneseq
  %v3471 = vshrl.u32 %v3470, 7
  %v3472 = vsub.s32 0, %v3471
  %v3473 = vrot.slane %v3466, %v3472
  %v3474 = vlaneseq
  %v3475 = vshrl.u32 %v3474, 7
  %v3476 = vsub.s32 1, %v3475
  %v3477 = vrot.slane %v3466, %v3476
  %v3478 = vlaneseq
  %v3479 = vshrl.u32 %v3478, 7
  %v3480 = vsub.s32 2, %v3479
  %v3481 = vrot.slane %v3466, %v3480
  %v3482 = vlaneseq
  %v3483 = vshrl.u32 %v3482, 7
  %v3484 = vsub.s32 3, %v3483
  %v3485 = vrot.slane %v3466, %v3484
  %v3486 = vlaneseq
  %v3487 = vshrl.u32 %v3486, 7
  %v3488 = vsub.s32 4, %v3487
  %v3489 = vrot.slane %v3466, %v3488
  %v3490 = vlaneseq
  %v3491 = vshrl.u32 %v3490, 7
  %v3492 = vsub.s32 5, %v3491
  %v3493 = vrot.slane %v3466, %v3492
  %v3494 = vlaneseq
  %v3495 = vshrl.u32 %v3494, 7
  %v3496 = vsub.s32 6, %v3495
  %v3497 = vrot.slane %v3466, %v3496
  %v3498 = vlaneseq
  %v3499 = vshrl.u32 %v3498, 7
  %v3500 = vsub.s32 7, %v3499
  %v3501 = vrot.slane %v3466, %v3500
  %v3502 = vlaneseq
  %v3503 = vshrl.u32 %v3502, 7
  %v3504 = vsub.s32 0, %v3503
  %v3505 = vrot.slane %v3467, %v3504
  %v3506 = vlaneseq
  %v3507 = vshrl.u32 %v3506, 7
  %v3508 = vsub.s32 1, %v3507
  %v3509 = vrot.slane %v3467, %v3508
  %v3510 = vlaneseq
  %v3511 = vshrl.u32 %v3510, 7
  %v3512 = vsub.s32 2, %v3511
  %v3513 = vrot.slane %v3467, %v3512
  %v3514 = vlaneseq
  %v3515 = vshrl.u32 %v3514, 7
  %v3516 = vsub.s32 3, %v3515
  %v3517 = vrot.slane %v3467, %v3516
  %v3518 = vlaneseq
  %v3519 = vshrl.u32 %v3518, 7
  %v3520 = vsub.s32 4, %v3519
  %v3521 = vrot.slane %v3467, %v3520
  %v3522 = vlaneseq
  %v3523 = vshrl.u32 %v3522, 7
  %v3524 = vsub.s32 5, %v3523
  %v3525 = vrot.slane %v3467, %v3524
  %v3526 = vlaneseq
  %v3527 = vshrl.u32 %v3526, 7
  %v3528 = vsub.s32 6, %v3527
  %v3529 = vrot.slane %v3467, %v3528
  %v3530 = vlaneseq
  %v3531 = vshrl.u32 %v3530, 7
  %v3532 = vsub.s32 7, %v3531
  %v3533 = vrot.slane %v3467, %v3532
  %v3582 = vunpack.c.l.b16 %v3433
  %v3583 = vunpack.c.h.b16 %v3433
  %v3584 = vunpack.c.l.b16 %v3434
  %v3585 = vunpack.c.h.b16 %v3434
  %v3586 = vunpack.c.l.b16 %v3435
  %v3587 = vunpack.c.h.b16 %v3435
  %v3588 = vunpack.c.l.b16 %v3436
  %v3589 = vunpack.c.h.b16 %v3436
  %v3590 = vunpack.c.l.b16 %v3437
  %v3591 = vunpack.c.h.b16 %v3437
  %v3592 = vunpack.c.l.b16 %v3438
  %v3593 = vunpack.c.h.b16 %v3438
  %v3594 = vunpack.c.l.b16 %v3439
  %v3595 = vunpack.c.h.b16 %v3439
  %v3596 = vunpack.c.l.b16 %v3440
  %v3597 = vunpack.c.h.b16 %v3440
  %v3598 = vunpack.c.l.b16 %v3441
  %v3599 = vunpack.c.h.b16 %v3441
  %v3600 = vunpack.c.l.b16 %v3442
  %v3601 = vunpack.c.h.b16 %v3442
  %v3602 = vunpack.c.l.b16 %v3443
  %v3603 = vunpack.c.h.b16 %v3443
  %v3604 = vunpack.c.l.b16 %v3444
  %v3605 = vunpack.c.h.b16 %v3444
  %v3606 = vunpack.c.l.b16 %v3445
  %v3607 = vunpack.c.h.b16 %v3445
  %v3608 = vunpack.c.l.b16 %v3446
  %v3609 = vunpack.c.h.b16 %v3446
  %v3610 = vunpack.c.l.b16 %v3447
  %v3611 = vunpack.c.h.b16 %v3447
  %v3612 = vunpack.c.l.b16 %v3448
  %v3613 = vunpack.c.h.b16 %v3448
  %v3614 = vunpack.c.l.b16 %v3449
  %v3615 = vunpack.c.h.b16 %v3449
  %v3616 = vunpack.c.l.b16 %v3450
  %v3617 = vunpack.c.h.b16 %v3450
  %v3618 = vunpack.c.l.b16 %v3451
  %v3619 = vunpack.c.h.b16 %v3451
  %v3620 = vunpack.c.l.b16 %v3452
  %v3621 = vunpack.c.h.b16 %v3452
  %v3622 = vunpack.c.l.b16 %v3453
  %v3623 = vunpack.c.h.b16 %v3453
  %v3624 = vunpack.c.l.b16 %v3454
  %v3625 = vunpack.c.h.b16 %v3454
  %v3626 = vunpack.c.l.b16 %v3455
  %v3627 = vunpack.c.h.b16 %v3455
  %v3628 = vunpack.c.l.b16 %v3456
  %v3629 = vunpack.c.h.b16 %v3456
  %v3630 = vunpack.c.l.b16 %v3457
  %v3631 = vunpack.c.h.b16 %v3457
  %v3632 = vunpack.c.l.b16 %v3458
  %v3633 = vunpack.c.h.b16 %v3458
  %v3634 = vunpack.c.l.b16 %v3459
  %v3635 = vunpack.c.h.b16 %v3459
  %v3636 = vunpack.c.l.b16 %v3460
  %v3637 = vunpack.c.h.b16 %v3460
  %v3638 = vunpack.c.l.b16 %v3461
  %v3639 = vunpack.c.h.b16 %v3461
  %v3640 = vunpack.c.l.b16 %v3462
  %v3641 = vunpack.c.h.b16 %v3462
  %v3642 = vunpack.c.l.b16 %v3463
  %v3643 = vunpack.c.h.b16 %v3463
  %v3644 = vunpack.c.l.b16 %v3464
  %v3645 = vunpack.c.h.b16 %v3464
  %v3646 = vpack.c.b16 %v3598, %v3582
  %v3647 = vpack.c.b16 %v3599, %v3583
  %v3648 = vpack.c.b16 %v3600, %v3584
  %v3649 = vpack.c.b16 %v3601, %v3585
  %v3650 = vpack.c.b16 %v3602, %v3586
  %v3651 = vpack.c.b16 %v3603, %v3587
  %v3652 = vpack.c.b16 %v3604, %v3588
  %v3653 = vpack.c.b16 %v3605, %v3589
  %v3654 = vpack.c.b16 %v3606, %v3590
  %v3655 = vpack.c.b16 %v3607, %v3591
  %v3656 = vpack.c.b16 %v3608, %v3592
  %v3657 = vpack.c.b16 %v3609, %v3593
  %v3658 = vpack.c.b16 %v3610, %v3594
  %v3659 = vpack.c.b16 %v3611, %v3595
  %v3660 = vpack.c.b16 %v3612, %v3596
  %v3661 = vpack.c.b16 %v3613, %v3597
  %v3662 = vpack.c.b16 %v3630, %v3614
  %v3663 = vpack.c.b16 %v3631, %v3615
  %v3664 = vpack.c.b16 %v3632, %v3616
  %v3665 = vpack.c.b16 %v3633, %v3617
  %v3666 = vpack.c.b16 %v3634, %v3618
  %v3667 = vpack.c.b16 %v3635, %v3619
  %v3668 = vpack.c.b16 %v3636, %v3620
  %v3669 = vpack.c.b16 %v3637, %v3621
  %v3670 = vpack.c.b16 %v3638, %v3622
  %v3671 = vpack.c.b16 %v3639, %v3623
  %v3672 = vpack.c.b16 %v3640, %v3624
  %v3673 = vpack.c.b16 %v3641, %v3625
  %v3674 = vpack.c.b16 %v3642, %v3626
  %v3675 = vpack.c.b16 %v3643, %v3627
  %v3676 = vpack.c.b16 %v3644, %v3628
  %v3677 = vpack.c.b16 %v3645, %v3629
  %v3711 = vsel %vm187, %v3431, 0
  %3713 = vmatprep.subr.bf16.mxu0 %v3647
  %3714 = vmatpush1.bf16.msra.mxu0 %v3646
  %3715 = vmatprep.subr.bf16.mxu0 %v3663
  %3716 = vmatpush1.bf16.msra.mxu0 %v3662
  %3717 = vmatprep.subr.bf16.mxu0 0
  %3718 = vmatpush1.bf16.msra.mxu0 0
  %3719 = vmatprep.subr.bf16.mxu0 0
  %3720 = vmatpush1.bf16.msra.mxu0 0
  %3721 = vmatprep.subr.bf16.mxu0 0
  %3722 = vmatpush1.bf16.msra.mxu0 0
  %3723 = vmatprep.subr.bf16.mxu0 0
  %3724 = vmatpush1.bf16.msra.mxu0 0
  %3725 = vmatprep.subr.bf16.mxu0 0
  %3726 = vmatpush1.bf16.msra.mxu0 0
  %3727 = vmatprep.subr.bf16.mxu0 0
  %3728 = vmatpush1.bf16.msra.mxu0 0
  %3729 = vmatprep.subr.bf16.mxu0 0
  %3730 = vmatpush1.bf16.msra.mxu0 0
  %3731 = vmatprep.subr.bf16.mxu0 0
  %3732 = vmatpush1.bf16.msra.mxu0 0
  %3733 = vmatprep.subr.bf16.mxu0 0
  %3734 = vmatpush1.bf16.msra.mxu0 0
  %3735 = vmatprep.subr.bf16.mxu0 0
  %3736 = vmatpush1.bf16.msra.mxu0 0
  %3737 = vmatprep.subr.bf16.mxu0 0
  %3738 = vmatpush1.bf16.msra.mxu0 0
  %3739 = vmatprep.subr.bf16.mxu0 0
  %3740 = vmatpush1.bf16.msra.mxu0 0
  %3741 = vmatprep.subr.bf16.mxu0 0
  %3742 = vmatpush1.bf16.msra.mxu0 0
  %3743 = vmatprep.subr.bf16.mxu0 0
  %3744 = vmatpush1.bf16.msra.mxu0 0
  %3745 = vmatprep.mubr.bf16.mxu0 0
  %3746 = vmatmul.mubr.bf16.gmra.mrb[0].mxu0 %v3711
  %v3747 = vpop.f32.mrb[0].mxu0
  %v3748 = vadd.f32 %v3473, %v3747
  %v3749 = vpop.f32.mrb[0].mxu0
  %v3750 = vadd.f32 %v3477, %v3749
  %v3751 = vpop.f32.mrb[0].mxu0
  %v3752 = vadd.f32 %v3473, %v3751
  %v3753 = vpop.f32.mrb[0].mxu0
  %v3754 = vadd.f32 %v3477, %v3753
  %3755 = vdwg.mxu0
  %3756 = vmatprep.subr.bf16.mxu0 %v3649
  %3757 = vmatpush1.bf16.msra.mxu0 %v3648
  %3758 = vmatprep.subr.bf16.mxu0 %v3665
  %3759 = vmatpush1.bf16.msra.mxu0 %v3664
  %3760 = vmatprep.subr.bf16.mxu0 0
  %3761 = vmatpush1.bf16.msra.mxu0 0
  %3762 = vmatprep.subr.bf16.mxu0 0
  %3763 = vmatpush1.bf16.msra.mxu0 0
  %3764 = vmatprep.subr.bf16.mxu0 0
  %3765 = vmatpush1.bf16.msra.mxu0 0
  %3766 = vmatprep.subr.bf16.mxu0 0
  %3767 = vmatpush1.bf16.msra.mxu0 0
  %3768 = vmatprep.subr.bf16.mxu0 0
  %3769 = vmatpush1.bf16.msra.mxu0 0
  %3770 = vmatprep.subr.bf16.mxu0 0
  %3771 = vmatpush1.bf16.msra.mxu0 0
  %3772 = vmatprep.subr.bf16.mxu0 0
  %3773 = vmatpush1.bf16.msra.mxu0 0
  %3774 = vmatprep.subr.bf16.mxu0 0
  %3775 = vmatpush1.bf16.msra.mxu0 0
  %3776 = vmatprep.subr.bf16.mxu0 0
  %3777 = vmatpush1.bf16.msra.mxu0 0
  %3778 = vmatprep.subr.bf16.mxu0 0
  %3779 = vmatpush1.bf16.msra.mxu0 0
  %3780 = vmatprep.subr.bf16.mxu0 0
  %3781 = vmatpush1.bf16.msra.mxu0 0
  %3782 = vmatprep.subr.bf16.mxu0 0
  %3783 = vmatpush1.bf16.msra.mxu0 0
  %3784 = vmatprep.subr.bf16.mxu0 0
  %3785 = vmatpush1.bf16.msra.mxu0 0
  %3786 = vmatprep.subr.bf16.mxu0 0
  %3787 = vmatpush1.bf16.msra.mxu0 0
  %3788 = vmatprep.mubr.bf16.mxu0 0
  %3789 = vmatmul.mubr.bf16.gmra.mrb[0].mxu0 %v3711
  %v3790 = vpop.f32.mrb[0].mxu0
  %v3791 = vadd.f32 %v3481, %v3790
  %v3792 = vpop.f32.mrb[0].mxu0
  %v3793 = vadd.f32 %v3485, %v3792
  %v3794 = vpop.f32.mrb[0].mxu0
  %v3795 = vadd.f32 %v3481, %v3794
  %v3796 = vpop.f32.mrb[0].mxu0
  %v3797 = vadd.f32 %v3485, %v3796
  %3798 = vdwg.mxu0
  %3799 = vmatprep.subr.bf16.mxu0 %v3651
  %3800 = vmatpush1.bf16.msra.mxu0 %v3650
  %3801 = vmatprep.subr.bf16.mxu0 %v3667
  %3802 = vmatpush1.bf16.msra.mxu0 %v3666
  %3803 = vmatprep.subr.bf16.mxu0 0
  %3804 = vmatpush1.bf16.msra.mxu0 0
  %3805 = vmatprep.subr.bf16.mxu0 0
  %3806 = vmatpush1.bf16.msra.mxu0 0
  %3807 = vmatprep.subr.bf16.mxu0 0
  %3808 = vmatpush1.bf16.msra.mxu0 0
  %3809 = vmatprep.subr.bf16.mxu0 0
  %3810 = vmatpush1.bf16.msra.mxu0 0
  %3811 = vmatprep.subr.bf16.mxu0 0
  %3812 = vmatpush1.bf16.msra.mxu0 0
  %3813 = vmatprep.subr.bf16.mxu0 0
  %3814 = vmatpush1.bf16.msra.mxu0 0
  %3815 = vmatprep.subr.bf16.mxu0 0
  %3816 = vmatpush1.bf16.msra.mxu0 0
  %3817 = vmatprep.subr.bf16.mxu0 0
  %3818 = vmatpush1.bf16.msra.mxu0 0
  %3819 = vmatprep.subr.bf16.mxu0 0
  %3820 = vmatpush1.bf16.msra.mxu0 0
  %3821 = vmatprep.subr.bf16.mxu0 0
  %3822 = vmatpush1.bf16.msra.mxu0 0
  %3823 = vmatprep.subr.bf16.mxu0 0
  %3824 = vmatpush1.bf16.msra.mxu0 0
  %3825 = vmatprep.subr.bf16.mxu0 0
  %3826 = vmatpush1.bf16.msra.mxu0 0
  %3827 = vmatprep.subr.bf16.mxu0 0
  %3828 = vmatpush1.bf16.msra.mxu0 0
  %3829 = vmatprep.subr.bf16.mxu0 0
  %3830 = vmatpush1.bf16.msra.mxu0 0
  %3831 = vmatprep.mubr.bf16.mxu0 0
  %3832 = vmatmul.mubr.bf16.gmra.mrb[0].mxu0 %v3711
  %v3833 = vpop.f32.mrb[0].mxu0
  %v3834 = vadd.f32 %v3489, %v3833
  %v3835 = vpop.f32.mrb[0].mxu0
  %v3836 = vadd.f32 %v3493, %v3835
  %v3837 = vpop.f32.mrb[0].mxu0
  %v3838 = vadd.f32 %v3489, %v3837
  %v3839 = vpop.f32.mrb[0].mxu0
  %v3840 = vadd.f32 %v3493, %v3839
  %3841 = vdwg.mxu0
  %3842 = vmatprep.subr.bf16.mxu0 %v3653
  %3843 = vmatpush1.bf16.msra.mxu0 %v3652
  %3844 = vmatprep.subr.bf16.mxu0 %v3669
  %3845 = vmatpush1.bf16.msra.mxu0 %v3668
  %3846 = vmatprep.subr.bf16.mxu0 0
  %3847 = vmatpush1.bf16.msra.mxu0 0
  %3848 = vmatprep.subr.bf16.mxu0 0
  %3849 = vmatpush1.bf16.msra.mxu0 0
  %3850 = vmatprep.subr.bf16.mxu0 0
  %3851 = vmatpush1.bf16.msra.mxu0 0
  %3852 = vmatprep.subr.bf16.mxu0 0
  %3853 = vmatpush1.bf16.msra.mxu0 0
  %3854 = vmatprep.subr.bf16.mxu0 0
  %3855 = vmatpush1.bf16.msra.mxu0 0
  %3856 = vmatprep.subr.bf16.mxu0 0
  %3857 = vmatpush1.bf16.msra.mxu0 0
  %3858 = vmatprep.subr.bf16.mxu0 0
  %3859 = vmatpush1.bf16.msra.mxu0 0
  %3860 = vmatprep.subr.bf16.mxu0 0
  %3861 = vmatpush1.bf16.msra.mxu0 0
  %3862 = vmatprep.subr.bf16.mxu0 0
  %3863 = vmatpush1.bf16.msra.mxu0 0
  %3864 = vmatprep.subr.bf16.mxu0 0
  %3865 = vmatpush1.bf16.msra.mxu0 0
  %3866 = vmatprep.subr.bf16.mxu0 0
  %3867 = vmatpush1.bf16.msra.mxu0 0
  %3868 = vmatprep.subr.bf16.mxu0 0
  %3869 = vmatpush1.bf16.msra.mxu0 0
  %3870 = vmatprep.subr.bf16.mxu0 0
  %3871 = vmatpush1.bf16.msra.mxu0 0
  %3872 = vmatprep.subr.bf16.mxu0 0
  %3873 = vmatpush1.bf16.msra.mxu0 0
  %3874 = vmatprep.mubr.bf16.mxu0 0
  %3875 = vmatmul.mubr.bf16.gmra.mrb[0].mxu0 %v3711
  %v3876 = vpop.f32.mrb[0].mxu0
  %v3877 = vadd.f32 %v3497, %v3876
  %v3878 = vpop.f32.mrb[0].mxu0
  %v3879 = vadd.f32 %v3501, %v3878
  %v3880 = vpop.f32.mrb[0].mxu0
  %v3881 = vadd.f32 %v3497, %v3880
  %v3882 = vpop.f32.mrb[0].mxu0
  %v3883 = vadd.f32 %v3501, %v3882
  %3884 = vdwg.mxu0
  %3885 = vmatprep.subr.bf16.mxu0 %v3655
  %3886 = vmatpush1.bf16.msra.mxu0 %v3654
  %3887 = vmatprep.subr.bf16.mxu0 %v3671
  %3888 = vmatpush1.bf16.msra.mxu0 %v3670
  %3889 = vmatprep.subr.bf16.mxu0 0
  %3890 = vmatpush1.bf16.msra.mxu0 0
  %3891 = vmatprep.subr.bf16.mxu0 0
  %3892 = vmatpush1.bf16.msra.mxu0 0
  %3893 = vmatprep.subr.bf16.mxu0 0
  %3894 = vmatpush1.bf16.msra.mxu0 0
  %3895 = vmatprep.subr.bf16.mxu0 0
  %3896 = vmatpush1.bf16.msra.mxu0 0
  %3897 = vmatprep.subr.bf16.mxu0 0
  %3898 = vmatpush1.bf16.msra.mxu0 0
  %3899 = vmatprep.subr.bf16.mxu0 0
  %3900 = vmatpush1.bf16.msra.mxu0 0
  %3901 = vmatprep.subr.bf16.mxu0 0
  %3902 = vmatpush1.bf16.msra.mxu0 0
  %3903 = vmatprep.subr.bf16.mxu0 0
  %3904 = vmatpush1.bf16.msra.mxu0 0
  %3905 = vmatprep.subr.bf16.mxu0 0
  %3906 = vmatpush1.bf16.msra.mxu0 0
  %3907 = vmatprep.subr.bf16.mxu0 0
  %3908 = vmatpush1.bf16.msra.mxu0 0
  %3909 = vmatprep.subr.bf16.mxu0 0
  %3910 = vmatpush1.bf16.msra.mxu0 0
  %3911 = vmatprep.subr.bf16.mxu0 0
  %3912 = vmatpush1.bf16.msra.mxu0 0
  %3913 = vmatprep.subr.bf16.mxu0 0
  %3914 = vmatpush1.bf16.msra.mxu0 0
  %3915 = vmatprep.subr.bf16.mxu0 0
  %3916 = vmatpush1.bf16.msra.mxu0 0
  %3917 = vmatprep.mubr.bf16.mxu0 0
  %3918 = vmatmul.mubr.bf16.gmra.mrb[0].mxu0 %v3711
  %v3919 = vpop.f32.mrb[0].mxu0
  %v3920 = vadd.f32 %v3505, %v3919
  %v3921 = vpop.f32.mrb[0].mxu0
  %v3922 = vadd.f32 %v3509, %v3921
  %v3923 = vpop.f32.mrb[0].mxu0
  %v3924 = vadd.f32 %v3505, %v3923
  %v3925 = vpop.f32.mrb[0].mxu0
  %v3926 = vadd.f32 %v3509, %v3925
  %3927 = vdwg.mxu0
  %3928 = vmatprep.subr.bf16.mxu0 %v3657
  %3929 = vmatpush1.bf16.msra.mxu0 %v3656
  %3930 = vmatprep.subr.bf16.mxu0 %v3673
  %3931 = vmatpush1.bf16.msra.mxu0 %v3672
  %3932 = vmatprep.subr.bf16.mxu0 0
  %3933 = vmatpush1.bf16.msra.mxu0 0
  %3934 = vmatprep.subr.bf16.mxu0 0
  %3935 = vmatpush1.bf16.msra.mxu0 0
  %3936 = vmatprep.subr.bf16.mxu0 0
  %3937 = vmatpush1.bf16.msra.mxu0 0
  %3938 = vmatprep.subr.bf16.mxu0 0
  %3939 = vmatpush1.bf16.msra.mxu0 0
  %3940 = vmatprep.subr.bf16.mxu0 0
  %3941 = vmatpush1.bf16.msra.mxu0 0
  %3942 = vmatprep.subr.bf16.mxu0 0
  %3943 = vmatpush1.bf16.msra.mxu0 0
  %3944 = vmatprep.subr.bf16.mxu0 0
  %3945 = vmatpush1.bf16.msra.mxu0 0
  %3946 = vmatprep.subr.bf16.mxu0 0
  %3947 = vmatpush1.bf16.msra.mxu0 0
  %3948 = vmatprep.subr.bf16.mxu0 0
  %3949 = vmatpush1.bf16.msra.mxu0 0
  %3950 = vmatprep.subr.bf16.mxu0 0
  %3951 = vmatpush1.bf16.msra.mxu0 0
  %3952 = vmatprep.subr.bf16.mxu0 0
  %3953 = vmatpush1.bf16.msra.mxu0 0
  %3954 = vmatprep.subr.bf16.mxu0 0
  %3955 = vmatpush1.bf16.msra.mxu0 0
  %3956 = vmatprep.subr.bf16.mxu0 0
  %3957 = vmatpush1.bf16.msra.mxu0 0
  %3958 = vmatprep.subr.bf16.mxu0 0
  %3959 = vmatpush1.bf16.msra.mxu0 0
  %3960 = vmatprep.mubr.bf16.mxu0 0
  %3961 = vmatmul.mubr.bf16.gmra.mrb[0].mxu0 %v3711
  %v3962 = vpop.f32.mrb[0].mxu0
  %v3963 = vadd.f32 %v3513, %v3962
  %v3964 = vpop.f32.mrb[0].mxu0
  %v3965 = vadd.f32 %v3517, %v3964
  %v3966 = vpop.f32.mrb[0].mxu0
  %v3967 = vadd.f32 %v3513, %v3966
  %v3968 = vpop.f32.mrb[0].mxu0
  %v3969 = vadd.f32 %v3517, %v3968
  %3970 = vdwg.mxu0
  %3971 = vmatprep.subr.bf16.mxu0 %v3659
  %3972 = vmatpush1.bf16.msra.mxu0 %v3658
  %3973 = vmatprep.subr.bf16.mxu0 %v3675
  %3974 = vmatpush1.bf16.msra.mxu0 %v3674
  %3975 = vmatprep.subr.bf16.mxu0 0
  %3976 = vmatpush1.bf16.msra.mxu0 0
  %3977 = vmatprep.subr.bf16.mxu0 0
  %3978 = vmatpush1.bf16.msra.mxu0 0
  %3979 = vmatprep.subr.bf16.mxu0 0
  %3980 = vmatpush1.bf16.msra.mxu0 0
  %3981 = vmatprep.subr.bf16.mxu0 0
  %3982 = vmatpush1.bf16.msra.mxu0 0
  %3983 = vmatprep.subr.bf16.mxu0 0
  %3984 = vmatpush1.bf16.msra.mxu0 0
  %3985 = vmatprep.subr.bf16.mxu0 0
  %3986 = vmatpush1.bf16.msra.mxu0 0
  %3987 = vmatprep.subr.bf16.mxu0 0
  %3988 = vmatpush1.bf16.msra.mxu0 0
  %3989 = vmatprep.subr.bf16.mxu0 0
  %3990 = vmatpush1.bf16.msra.mxu0 0
  %3991 = vmatprep.subr.bf16.mxu0 0
  %3992 = vmatpush1.bf16.msra.mxu0 0
  %3993 = vmatprep.subr.bf16.mxu0 0
  %3994 = vmatpush1.bf16.msra.mxu0 0
  %3995 = vmatprep.subr.bf16.mxu0 0
  %3996 = vmatpush1.bf16.msra.mxu0 0
  %3997 = vmatprep.subr.bf16.mxu0 0
  %3998 = vmatpush1.bf16.msra.mxu0 0
  %3999 = vmatprep.subr.bf16.mxu0 0
  %4000 = vmatpush1.bf16.msra.mxu0 0
  %4001 = vmatprep.subr.bf16.mxu0 0
  %4002 = vmatpush1.bf16.msra.mxu0 0
  %4003 = vmatprep.mubr.bf16.mxu0 0
  %4004 = vmatmul.mubr.bf16.gmra.mrb[0].mxu0 %v3711
  %v4005 = vpop.f32.mrb[0].mxu0
  %v4006 = vadd.f32 %v3521, %v4005
  %v4007 = vpop.f32.mrb[0].mxu0
  %v4008 = vadd.f32 %v3525, %v4007
  %v4009 = vpop.f32.mrb[0].mxu0
  %v4010 = vadd.f32 %v3521, %v4009
  %v4011 = vpop.f32.mrb[0].mxu0
  %v4012 = vadd.f32 %v3525, %v4011
  %4013 = vdwg.mxu0
  %4014 = vmatprep.subr.bf16.mxu0 %v3661
  %4015 = vmatpush1.bf16.msra.mxu0 %v3660
  %4016 = vmatprep.subr.bf16.mxu0 %v3677
  %4017 = vmatpush1.bf16.msra.mxu0 %v3676
  %4018 = vmatprep.subr.bf16.mxu0 0
  %4019 = vmatpush1.bf16.msra.mxu0 0
  %4020 = vmatprep.subr.bf16.mxu0 0
  %4021 = vmatpush1.bf16.msra.mxu0 0
  %4022 = vmatprep.subr.bf16.mxu0 0
  %4023 = vmatpush1.bf16.msra.mxu0 0
  %4024 = vmatprep.subr.bf16.mxu0 0
  %4025 = vmatpush1.bf16.msra.mxu0 0
  %4026 = vmatprep.subr.bf16.mxu0 0
  %4027 = vmatpush1.bf16.msra.mxu0 0
  %4028 = vmatprep.subr.bf16.mxu0 0
  %4029 = vmatpush1.bf16.msra.mxu0 0
  %4030 = vmatprep.subr.bf16.mxu0 0
  %4031 = vmatpush1.bf16.msra.mxu0 0
  %4032 = vmatprep.subr.bf16.mxu0 0
  %4033 = vmatpush1.bf16.msra.mxu0 0
  %4034 = vmatprep.subr.bf16.mxu0 0
  %4035 = vmatpush1.bf16.msra.mxu0 0
  %4036 = vmatprep.subr.bf16.mxu0 0
  %4037 = vmatpush1.bf16.msra.mxu0 0
  %4038 = vmatprep.subr.bf16.mxu0 0
  %4039 = vmatpush1.bf16.msra.mxu0 0
  %4040 = vmatprep.subr.bf16.mxu0 0
  %4041 = vmatpush1.bf16.msra.mxu0 0
  %4042 = vmatprep.subr.bf16.mxu0 0
  %4043 = vmatpush1.bf16.msra.mxu0 0
  %4044 = vmatprep.subr.bf16.mxu0 0
  %4045 = vmatpush1.bf16.msra.mxu0 0
  %4046 = vmatprep.mubr.bf16.mxu0 0
  %4047 = vmatmul.mubr.bf16.gmra.mrb[0].mxu0 %v3711
  %v4048 = vpop.f32.mrb[0].mxu0
  %v4049 = vadd.f32 %v3529, %v4048
  %v4050 = vpop.f32.mrb[0].mxu0
  %v4051 = vadd.f32 %v3533, %v4050
  %v4052 = vpop.f32.mrb[0].mxu0
  %v4053 = vadd.f32 %v3529, %v4052
  %v4054 = vpop.f32.mrb[0].mxu0
  %v4055 = vadd.f32 %v3533, %v4054
  %4056 = vdwg.mxu0
  %v4057 = vmax.f32 %v3748, 0.0
  %v4058 = vmax.f32 %v3750, 0.0
  %v4059 = vmax.f32 %v3791, 0.0
  %v4060 = vmax.f32 %v3793, 0.0
  %v4061 = vmax.f32 %v3834, 0.0
  %v4062 = vmax.f32 %v3836, 0.0
  %v4063 = vmax.f32 %v3877, 0.0
  %v4064 = vmax.f32 %v3879, 0.0
  %v4065 = vmax.f32 %v3920, 0.0
  %v4066 = vmax.f32 %v3922, 0.0
  %v4067 = vmax.f32 %v3963, 0.0
  %v4068 = vmax.f32 %v3965, 0.0
  %v4069 = vmax.f32 %v4006, 0.0
  %v4070 = vmax.f32 %v4008, 0.0
  %v4071 = vmax.f32 %v4049, 0.0
  %v4072 = vmax.f32 %v4051, 0.0
  %v4073 = vmax.f32 %v3752, 0.0
  %v4074 = vmax.f32 %v3754, 0.0
  %v4075 = vmax.f32 %v3795, 0.0
  %v4076 = vmax.f32 %v3797, 0.0
  %v4077 = vmax.f32 %v3838, 0.0
  %v4078 = vmax.f32 %v3840, 0.0
  %v4079 = vmax.f32 %v3881, 0.0
  %v4080 = vmax.f32 %v3883, 0.0
  %v4081 = vmax.f32 %v3924, 0.0
  %v4082 = vmax.f32 %v3926, 0.0
  %v4083 = vmax.f32 %v3967, 0.0
  %v4084 = vmax.f32 %v3969, 0.0
  %v4085 = vmax.f32 %v4010, 0.0
  %v4086 = vmax.f32 %v4012, 0.0
  %v4087 = vmax.f32 %v4053, 0.0
  %v4088 = vmax.f32 %v4055, 0.0
  %v4089 = vpack.c.bf16 %v4073, %v4057
  %v4090 = vpack.c.bf16 %v4074, %v4058
  %v4091 = vpack.c.bf16 %v4075, %v4059
  %v4092 = vpack.c.bf16 %v4076, %v4060
  %v4093 = vpack.c.bf16 %v4077, %v4061
  %v4094 = vpack.c.bf16 %v4078, %v4062
  %v4095 = vpack.c.bf16 %v4079, %v4063
  %v4096 = vpack.c.bf16 %v4080, %v4064
  %v4097 = vpack.c.bf16 %v4081, %v4065
  %v4098 = vpack.c.bf16 %v4082, %v4066
  %v4099 = vpack.c.bf16 %v4083, %v4067
  %v4100 = vpack.c.bf16 %v4084, %v4068
  %v4101 = vpack.c.bf16 %v4085, %v4069
  %v4102 = vpack.c.bf16 %v4086, %v4070
  %v4103 = vpack.c.bf16 %v4087, %v4071
  %v4104 = vpack.c.bf16 %v4088, %v4072
  %s4105 = scalar_lea.vmem %s11, 1024
  %v4106 = vld [vmem:[%s4105] sm:$0xf]
  %v4107 = vld [vmem:[%s4105 + $0x4] sm:$0xf]
  %v4108 = vld [vmem:[%s4105 + $0x8] sm:$0xf]
  %v4109 = vld [vmem:[%s4105 + $0xc] sm:$0xf]
  %v4110 = vld [vmem:[%s4105 + $0x10] sm:$0xf]
  %v4111 = vld [vmem:[%s4105 + $0x14] sm:$0xf]
  %v4112 = vld [vmem:[%s4105 + $0x18] sm:$0xf]
  %v4113 = vld [vmem:[%s4105 + $0x1c] sm:$0xf]
  %v4114 = vld [vmem:[%s4105 + $0x20] sm:$0xf]
  %v4115 = vld [vmem:[%s4105 + $0x24] sm:$0xf]
  %v4116 = vld [vmem:[%s4105 + $0x28] sm:$0xf]
  %v4117 = vld [vmem:[%s4105 + $0x2c] sm:$0xf]
  %v4118 = vld [vmem:[%s4105 + $0x30] sm:$0xf]
  %v4119 = vld [vmem:[%s4105 + $0x34] sm:$0xf]
  %v4120 = vld [vmem:[%s4105 + $0x38] sm:$0xf]
  %v4121 = vld [vmem:[%s4105 + $0x3c] sm:$0xf]
  %v4122 = vld [vmem:[%s4105 + $0x40] sm:$0xf]
  %v4123 = vld [vmem:[%s4105 + $0x44] sm:$0xf]
  %v4124 = vld [vmem:[%s4105 + $0x48] sm:$0xf]
  %v4125 = vld [vmem:[%s4105 + $0x4c] sm:$0xf]
  %v4126 = vld [vmem:[%s4105 + $0x50] sm:$0xf]
  %v4127 = vld [vmem:[%s4105 + $0x54] sm:$0xf]
  %v4128 = vld [vmem:[%s4105 + $0x58] sm:$0xf]
  %v4129 = vld [vmem:[%s4105 + $0x5c] sm:$0xf]
  %v4130 = vld [vmem:[%s4105 + $0x60] sm:$0xf]
  %v4131 = vld [vmem:[%s4105 + $0x64] sm:$0xf]
  %v4132 = vld [vmem:[%s4105 + $0x68] sm:$0xf]
  %v4133 = vld [vmem:[%s4105 + $0x6c] sm:$0xf]
  %v4134 = vld [vmem:[%s4105 + $0x70] sm:$0xf]
  %v4135 = vld [vmem:[%s4105 + $0x74] sm:$0xf]
  %v4136 = vld [vmem:[%s4105 + $0x78] sm:$0xf]
  %v4137 = vld [vmem:[%s4105 + $0x7c] sm:$0xf]
  %v4138 = vld [vmem:[%s4105 + $0x80] sm:$0xf]
  %v4139 = vld [vmem:[%s4105 + $0x84] sm:$0xf]
  %v4140 = vld [vmem:[%s4105 + $0x88] sm:$0xf]
  %v4141 = vld [vmem:[%s4105 + $0x8c] sm:$0xf]
  %v4142 = vld [vmem:[%s4105 + $0x90] sm:$0xf]
  %v4143 = vld [vmem:[%s4105 + $0x94] sm:$0xf]
  %v4144 = vld [vmem:[%s4105 + $0x98] sm:$0xf]
  %v4145 = vld [vmem:[%s4105 + $0x9c] sm:$0xf]
  %v4146 = vld [vmem:[%s4105 + $0xa0] sm:$0xf]
  %v4147 = vld [vmem:[%s4105 + $0xa4] sm:$0xf]
  %v4148 = vld [vmem:[%s4105 + $0xa8] sm:$0xf]
  %v4149 = vld [vmem:[%s4105 + $0xac] sm:$0xf]
  %v4150 = vld [vmem:[%s4105 + $0xb0] sm:$0xf]
  %v4151 = vld [vmem:[%s4105 + $0xb4] sm:$0xf]
  %v4152 = vld [vmem:[%s4105 + $0xb8] sm:$0xf]
  %v4153 = vld [vmem:[%s4105 + $0xbc] sm:$0xf]
  %v4154 = vld [vmem:[%s4105 + $0xc0] sm:$0xf]
  %v4155 = vld [vmem:[%s4105 + $0xc4] sm:$0xf]
  %v4156 = vld [vmem:[%s4105 + $0xc8] sm:$0xf]
  %v4157 = vld [vmem:[%s4105 + $0xcc] sm:$0xf]
  %v4158 = vld [vmem:[%s4105 + $0xd0] sm:$0xf]
  %v4159 = vld [vmem:[%s4105 + $0xd4] sm:$0xf]
  %v4160 = vld [vmem:[%s4105 + $0xd8] sm:$0xf]
  %v4161 = vld [vmem:[%s4105 + $0xdc] sm:$0xf]
  %v4162 = vld [vmem:[%s4105 + $0xe0] sm:$0xf]
  %v4163 = vld [vmem:[%s4105 + $0xe4] sm:$0xf]
  %v4164 = vld [vmem:[%s4105 + $0xe8] sm:$0xf]
  %v4165 = vld [vmem:[%s4105 + $0xec] sm:$0xf]
  %v4166 = vld [vmem:[%s4105 + $0xf0] sm:$0xf]
  %v4167 = vld [vmem:[%s4105 + $0xf4] sm:$0xf]
  %v4168 = vld [vmem:[%s4105 + $0xf8] sm:$0xf]
  %v4169 = vld [vmem:[%s4105 + $0xfc] sm:$0xf]
  %v4170 = vld [vmem:[%s4105 + $0x100] sm:$0xf]
  %v4171 = vld [vmem:[%s4105 + $0x104] sm:$0xf]
  %v4172 = vld [vmem:[%s4105 + $0x108] sm:$0xf]
  %v4173 = vld [vmem:[%s4105 + $0x10c] sm:$0xf]
  %v4174 = vld [vmem:[%s4105 + $0x110] sm:$0xf]
  %v4175 = vld [vmem:[%s4105 + $0x114] sm:$0xf]
  %v4176 = vld [vmem:[%s4105 + $0x118] sm:$0xf]
  %v4177 = vld [vmem:[%s4105 + $0x11c] sm:$0xf]
  %v4178 = vld [vmem:[%s4105 + $0x120] sm:$0xf]
  %v4179 = vld [vmem:[%s4105 + $0x124] sm:$0xf]
  %v4180 = vld [vmem:[%s4105 + $0x128] sm:$0xf]
  %v4181 = vld [vmem:[%s4105 + $0x12c] sm:$0xf]
  %v4182 = vld [vmem:[%s4105 + $0x130] sm:$0xf]
  %v4183 = vld [vmem:[%s4105 + $0x134] sm:$0xf]
  %v4184 = vld [vmem:[%s4105 + $0x138] sm:$0xf]
  %v4185 = vld [vmem:[%s4105 + $0x13c] sm:$0xf]
  %v4186 = vld [vmem:[%s4105 + $0x140] sm:$0xf]
  %v4187 = vld [vmem:[%s4105 + $0x144] sm:$0xf]
  %v4188 = vld [vmem:[%s4105 + $0x148] sm:$0xf]
  %v4189 = vld [vmem:[%s4105 + $0x14c] sm:$0xf]
  %v4190 = vld [vmem:[%s4105 + $0x150] sm:$0xf]
  %v4191 = vld [vmem:[%s4105 + $0x154] sm:$0xf]
  %v4192 = vld [vmem:[%s4105 + $0x158] sm:$0xf]
  %v4193 = vld [vmem:[%s4105 + $0x15c] sm:$0xf]
  %v4194 = vld [vmem:[%s4105 + $0x160] sm:$0xf]
  %v4195 = vld [vmem:[%s4105 + $0x164] sm:$0xf]
  %v4196 = vld [vmem:[%s4105 + $0x168] sm:$0xf]
  %v4197 = vld [vmem:[%s4105 + $0x16c] sm:$0xf]
  %v4198 = vld [vmem:[%s4105 + $0x170] sm:$0xf]
  %v4199 = vld [vmem:[%s4105 + $0x174] sm:$0xf]
  %v4200 = vld [vmem:[%s4105 + $0x178] sm:$0xf]
  %v4201 = vld [vmem:[%s4105 + $0x17c] sm:$0xf]
  %v4202 = vld [vmem:[%s4105 + $0x180] sm:$0xf]
  %v4203 = vld [vmem:[%s4105 + $0x184] sm:$0xf]
  %v4204 = vld [vmem:[%s4105 + $0x188] sm:$0xf]
  %v4205 = vld [vmem:[%s4105 + $0x18c] sm:$0xf]
  %v4206 = vld [vmem:[%s4105 + $0x190] sm:$0xf]
  %v4207 = vld [vmem:[%s4105 + $0x194] sm:$0xf]
  %v4208 = vld [vmem:[%s4105 + $0x198] sm:$0xf]
  %v4209 = vld [vmem:[%s4105 + $0x19c] sm:$0xf]
  %v4210 = vld [vmem:[%s4105 + $0x1a0] sm:$0xf]
  %v4211 = vld [vmem:[%s4105 + $0x1a4] sm:$0xf]
  %v4212 = vld [vmem:[%s4105 + $0x1a8] sm:$0xf]
  %v4213 = vld [vmem:[%s4105 + $0x1ac] sm:$0xf]
  %v4214 = vld [vmem:[%s4105 + $0x1b0] sm:$0xf]
  %v4215 = vld [vmem:[%s4105 + $0x1b4] sm:$0xf]
  %v4216 = vld [vmem:[%s4105 + $0x1b8] sm:$0xf]
  %v4217 = vld [vmem:[%s4105 + $0x1bc] sm:$0xf]
  %v4218 = vld [vmem:[%s4105 + $0x1c0] sm:$0xf]
  %v4219 = vld [vmem:[%s4105 + $0x1c4] sm:$0xf]
  %v4220 = vld [vmem:[%s4105 + $0x1c8] sm:$0xf]
  %v4221 = vld [vmem:[%s4105 + $0x1cc] sm:$0xf]
  %v4222 = vld [vmem:[%s4105 + $0x1d0] sm:$0xf]
  %v4223 = vld [vmem:[%s4105 + $0x1d4] sm:$0xf]
  %v4224 = vld [vmem:[%s4105 + $0x1d8] sm:$0xf]
  %v4225 = vld [vmem:[%s4105 + $0x1dc] sm:$0xf]
  %v4226 = vld [vmem:[%s4105 + $0x1e0] sm:$0xf]
  %v4227 = vld [vmem:[%s4105 + $0x1e4] sm:$0xf]
  %v4228 = vld [vmem:[%s4105 + $0x1e8] sm:$0xf]
  %v4229 = vld [vmem:[%s4105 + $0x1ec] sm:$0xf]
  %v4230 = vld [vmem:[%s4105 + $0x1f0] sm:$0xf]
  %v4231 = vld [vmem:[%s4105 + $0x1f4] sm:$0xf]
  %v4232 = vld [vmem:[%s4105 + $0x1f8] sm:$0xf]
  %v4233 = vld [vmem:[%s4105 + $0x1fc] sm:$0xf]
  %v4234 = vld [vmem:[%s4105 + $0x200] sm:$0xf]
  %v4235 = vld [vmem:[%s4105 + $0x204] sm:$0xf]
  %v4236 = vld [vmem:[%s4105 + $0x208] sm:$0xf]
  %v4237 = vld [vmem:[%s4105 + $0x20c] sm:$0xf]
  %v4238 = vld [vmem:[%s4105 + $0x210] sm:$0xf]
  %v4239 = vld [vmem:[%s4105 + $0x214] sm:$0xf]
  %v4240 = vld [vmem:[%s4105 + $0x218] sm:$0xf]
  %v4241 = vld [vmem:[%s4105 + $0x21c] sm:$0xf]
  %v4242 = vld [vmem:[%s4105 + $0x220] sm:$0xf]
  %v4243 = vld [vmem:[%s4105 + $0x224] sm:$0xf]
  %v4244 = vld [vmem:[%s4105 + $0x228] sm:$0xf]
  %v4245 = vld [vmem:[%s4105 + $0x22c] sm:$0xf]
  %v4246 = vld [vmem:[%s4105 + $0x230] sm:$0xf]
  %v4247 = vld [vmem:[%s4105 + $0x234] sm:$0xf]
  %v4248 = vld [vmem:[%s4105 + $0x238] sm:$0xf]
  %v4249 = vld [vmem:[%s4105 + $0x23c] sm:$0xf]
  %v4250 = vld [vmem:[%s4105 + $0x240] sm:$0xf]
  %v4251 = vld [vmem:[%s4105 + $0x244] sm:$0xf]
  %v4252 = vld [vmem:[%s4105 + $0x248] sm:$0xf]
  %v4253 = vld [vmem:[%s4105 + $0x24c] sm:$0xf]
  %v4254 = vld [vmem:[%s4105 + $0x250] sm:$0xf]
  %v4255 = vld [vmem:[%s4105 + $0x254] sm:$0xf]
  %v4256 = vld [vmem:[%s4105 + $0x258] sm:$0xf]
  %v4257 = vld [vmem:[%s4105 + $0x25c] sm:$0xf]
  %v4258 = vld [vmem:[%s4105 + $0x260] sm:$0xf]
  %v4259 = vld [vmem:[%s4105 + $0x264] sm:$0xf]
  %v4260 = vld [vmem:[%s4105 + $0x268] sm:$0xf]
  %v4261 = vld [vmem:[%s4105 + $0x26c] sm:$0xf]
  %v4262 = vld [vmem:[%s4105 + $0x270] sm:$0xf]
  %v4263 = vld [vmem:[%s4105 + $0x274] sm:$0xf]
  %v4264 = vld [vmem:[%s4105 + $0x278] sm:$0xf]
  %v4265 = vld [vmem:[%s4105 + $0x27c] sm:$0xf]
  %v4266 = vld [vmem:[%s4105 + $0x280] sm:$0xf]
  %v4267 = vld [vmem:[%s4105 + $0x284] sm:$0xf]
  %v4268 = vld [vmem:[%s4105 + $0x288] sm:$0xf]
  %v4269 = vld [vmem:[%s4105 + $0x28c] sm:$0xf]
  %v4270 = vld [vmem:[%s4105 + $0x290] sm:$0xf]
  %v4271 = vld [vmem:[%s4105 + $0x294] sm:$0xf]
  %v4272 = vld [vmem:[%s4105 + $0x298] sm:$0xf]
  %v4273 = vld [vmem:[%s4105 + $0x29c] sm:$0xf]
  %v4274 = vld [vmem:[%s4105 + $0x2a0] sm:$0xf]
  %v4275 = vld [vmem:[%s4105 + $0x2a4] sm:$0xf]
  %v4276 = vld [vmem:[%s4105 + $0x2a8] sm:$0xf]
  %v4277 = vld [vmem:[%s4105 + $0x2ac] sm:$0xf]
  %v4278 = vld [vmem:[%s4105 + $0x2b0] sm:$0xf]
  %v4279 = vld [vmem:[%s4105 + $0x2b4] sm:$0xf]
  %v4280 = vld [vmem:[%s4105 + $0x2b8] sm:$0xf]
  %v4281 = vld [vmem:[%s4105 + $0x2bc] sm:$0xf]
  %v4282 = vld [vmem:[%s4105 + $0x2c0] sm:$0xf]
  %v4283 = vld [vmem:[%s4105 + $0x2c4] sm:$0xf]
  %v4284 = vld [vmem:[%s4105 + $0x2c8] sm:$0xf]
  %v4285 = vld [vmem:[%s4105 + $0x2cc] sm:$0xf]
  %v4286 = vld [vmem:[%s4105 + $0x2d0] sm:$0xf]
  %v4287 = vld [vmem:[%s4105 + $0x2d4] sm:$0xf]
  %v4288 = vld [vmem:[%s4105 + $0x2d8] sm:$0xf]
  %v4289 = vld [vmem:[%s4105 + $0x2dc] sm:$0xf]
  %v4290 = vld [vmem:[%s4105 + $0x2e0] sm:$0xf]
  %v4291 = vld [vmem:[%s4105 + $0x2e4] sm:$0xf]
  %v4292 = vld [vmem:[%s4105 + $0x2e8] sm:$0xf]
  %v4293 = vld [vmem:[%s4105 + $0x2ec] sm:$0xf]
  %v4294 = vld [vmem:[%s4105 + $0x2f0] sm:$0xf]
  %v4295 = vld [vmem:[%s4105 + $0x2f4] sm:$0xf]
  %v4296 = vld [vmem:[%s4105 + $0x2f8] sm:$0xf]
  %v4297 = vld [vmem:[%s4105 + $0x2fc] sm:$0xf]
  %v4298 = vld [vmem:[%s4105 + $0x300] sm:$0xf]
  %v4299 = vld [vmem:[%s4105 + $0x304] sm:$0xf]
  %v4300 = vld [vmem:[%s4105 + $0x308] sm:$0xf]
  %v4301 = vld [vmem:[%s4105 + $0x30c] sm:$0xf]
  %v4302 = vld [vmem:[%s4105 + $0x310] sm:$0xf]
  %v4303 = vld [vmem:[%s4105 + $0x314] sm:$0xf]
  %v4304 = vld [vmem:[%s4105 + $0x318] sm:$0xf]
  %v4305 = vld [vmem:[%s4105 + $0x31c] sm:$0xf]
  %v4306 = vld [vmem:[%s4105 + $0x320] sm:$0xf]
  %v4307 = vld [vmem:[%s4105 + $0x324] sm:$0xf]
  %v4308 = vld [vmem:[%s4105 + $0x328] sm:$0xf]
  %v4309 = vld [vmem:[%s4105 + $0x32c] sm:$0xf]
  %v4310 = vld [vmem:[%s4105 + $0x330] sm:$0xf]
  %v4311 = vld [vmem:[%s4105 + $0x334] sm:$0xf]
  %v4312 = vld [vmem:[%s4105 + $0x338] sm:$0xf]
  %v4313 = vld [vmem:[%s4105 + $0x33c] sm:$0xf]
  %v4314 = vld [vmem:[%s4105 + $0x340] sm:$0xf]
  %v4315 = vld [vmem:[%s4105 + $0x344] sm:$0xf]
  %v4316 = vld [vmem:[%s4105 + $0x348] sm:$0xf]
  %v4317 = vld [vmem:[%s4105 + $0x34c] sm:$0xf]
  %v4318 = vld [vmem:[%s4105 + $0x350] sm:$0xf]
  %v4319 = vld [vmem:[%s4105 + $0x354] sm:$0xf]
  %v4320 = vld [vmem:[%s4105 + $0x358] sm:$0xf]
  %v4321 = vld [vmem:[%s4105 + $0x35c] sm:$0xf]
  %v4322 = vld [vmem:[%s4105 + $0x360] sm:$0xf]
  %v4323 = vld [vmem:[%s4105 + $0x364] sm:$0xf]
  %v4324 = vld [vmem:[%s4105 + $0x368] sm:$0xf]
  %v4325 = vld [vmem:[%s4105 + $0x36c] sm:$0xf]
  %v4326 = vld [vmem:[%s4105 + $0x370] sm:$0xf]
  %v4327 = vld [vmem:[%s4105 + $0x374] sm:$0xf]
  %v4328 = vld [vmem:[%s4105 + $0x378] sm:$0xf]
  %v4329 = vld [vmem:[%s4105 + $0x37c] sm:$0xf]
  %v4330 = vld [vmem:[%s4105 + $0x380] sm:$0xf]
  %v4331 = vld [vmem:[%s4105 + $0x384] sm:$0xf]
  %v4332 = vld [vmem:[%s4105 + $0x388] sm:$0xf]
  %v4333 = vld [vmem:[%s4105 + $0x38c] sm:$0xf]
  %v4334 = vld [vmem:[%s4105 + $0x390] sm:$0xf]
  %v4335 = vld [vmem:[%s4105 + $0x394] sm:$0xf]
  %v4336 = vld [vmem:[%s4105 + $0x398] sm:$0xf]
  %v4337 = vld [vmem:[%s4105 + $0x39c] sm:$0xf]
  %v4338 = vld [vmem:[%s4105 + $0x3a0] sm:$0xf]
  %v4339 = vld [vmem:[%s4105 + $0x3a4] sm:$0xf]
  %v4340 = vld [vmem:[%s4105 + $0x3a8] sm:$0xf]
  %v4341 = vld [vmem:[%s4105 + $0x3ac] sm:$0xf]
  %v4342 = vld [vmem:[%s4105 + $0x3b0] sm:$0xf]
  %v4343 = vld [vmem:[%s4105 + $0x3b4] sm:$0xf]
  %v4344 = vld [vmem:[%s4105 + $0x3b8] sm:$0xf]
  %v4345 = vld [vmem:[%s4105 + $0x3bc] sm:$0xf]
  %v4346 = vld [vmem:[%s4105 + $0x3c0] sm:$0xf]
  %v4347 = vld [vmem:[%s4105 + $0x3c4] sm:$0xf]
  %v4348 = vld [vmem:[%s4105 + $0x3c8] sm:$0xf]
  %v4349 = vld [vmem:[%s4105 + $0x3cc] sm:$0xf]
  %v4350 = vld [vmem:[%s4105 + $0x3d0] sm:$0xf]
  %v4351 = vld [vmem:[%s4105 + $0x3d4] sm:$0xf]
  %v4352 = vld [vmem:[%s4105 + $0x3d8] sm:$0xf]
  %v4353 = vld [vmem:[%s4105 + $0x3dc] sm:$0xf]
  %v4354 = vld [vmem:[%s4105 + $0x3e0] sm:$0xf]
  %v4355 = vld [vmem:[%s4105 + $0x3e4] sm:$0xf]
  %v4356 = vld [vmem:[%s4105 + $0x3e8] sm:$0xf]
  %v4357 = vld [vmem:[%s4105 + $0x3ec] sm:$0xf]
  %v4358 = vld [vmem:[%s4105 + $0x3f0] sm:$0xf]
  %v4359 = vld [vmem:[%s4105 + $0x3f4] sm:$0xf]
  %v4360 = vld [vmem:[%s4105 + $0x3f8] sm:$0xf]
  %v4361 = vld [vmem:[%s4105 + $0x3fc] sm:$0xf]
  %s4362 = scalar_lea.vmem %s12, 1
  %v4363 = vld [vmem:[%s4362] sm:$0x1]
  %v4365 = vlaneseq
  %v4366 = vshrl.u32 %v4365, 7
  %v4367 = vsub.s32 0, %v4366
  %v4368 = vrot.slane %v4363, %v4367
  %v4626 = vunpack.c.l.b16 %v4106
  %v4627 = vunpack.c.l.b16 %v4107
  %v4628 = vunpack.c.l.b16 %v4108
  %v4629 = vunpack.c.l.b16 %v4109
  %v4630 = vunpack.c.l.b16 %v4110
  %v4631 = vunpack.c.l.b16 %v4111
  %v4632 = vunpack.c.l.b16 %v4112
  %v4633 = vunpack.c.l.b16 %v4113
  %v4634 = vunpack.c.l.b16 %v4114
  %v4635 = vunpack.c.l.b16 %v4115
  %v4636 = vunpack.c.l.b16 %v4116
  %v4637 = vunpack.c.l.b16 %v4117
  %v4638 = vunpack.c.l.b16 %v4118
  %v4639 = vunpack.c.l.b16 %v4119
  %v4640 = vunpack.c.l.b16 %v4120
  %v4641 = vunpack.c.l.b16 %v4121
  %v4642 = vunpack.c.l.b16 %v4122
  %v4643 = vunpack.c.l.b16 %v4123
  %v4644 = vunpack.c.l.b16 %v4124
  %v4645 = vunpack.c.l.b16 %v4125
  %v4646 = vunpack.c.l.b16 %v4126
  %v4647 = vunpack.c.l.b16 %v4127
  %v4648 = vunpack.c.l.b16 %v4128
  %v4649 = vunpack.c.l.b16 %v4129
  %v4650 = vunpack.c.l.b16 %v4130
  %v4651 = vunpack.c.l.b16 %v4131
  %v4652 = vunpack.c.l.b16 %v4132
  %v4653 = vunpack.c.l.b16 %v4133
  %v4654 = vunpack.c.l.b16 %v4134
  %v4655 = vunpack.c.l.b16 %v4135
  %v4656 = vunpack.c.l.b16 %v4136
  %v4657 = vunpack.c.l.b16 %v4137
  %v4658 = vunpack.c.l.b16 %v4138
  %v4659 = vunpack.c.l.b16 %v4139
  %v4660 = vunpack.c.l.b16 %v4140
  %v4661 = vunpack.c.l.b16 %v4141
  %v4662 = vunpack.c.l.b16 %v4142
  %v4663 = vunpack.c.l.b16 %v4143
  %v4664 = vunpack.c.l.b16 %v4144
  %v4665 = vunpack.c.l.b16 %v4145
  %v4666 = vunpack.c.l.b16 %v4146
  %v4667 = vunpack.c.l.b16 %v4147
  %v4668 = vunpack.c.l.b16 %v4148
  %v4669 = vunpack.c.l.b16 %v4149
  %v4670 = vunpack.c.l.b16 %v4150
  %v4671 = vunpack.c.l.b16 %v4151
  %v4672 = vunpack.c.l.b16 %v4152
  %v4673 = vunpack.c.l.b16 %v4153
  %v4674 = vunpack.c.l.b16 %v4154
  %v4675 = vunpack.c.l.b16 %v4155
  %v4676 = vunpack.c.l.b16 %v4156
  %v4677 = vunpack.c.l.b16 %v4157
  %v4678 = vunpack.c.l.b16 %v4158
  %v4679 = vunpack.c.l.b16 %v4159
  %v4680 = vunpack.c.l.b16 %v4160
  %v4681 = vunpack.c.l.b16 %v4161
  %v4682 = vunpack.c.l.b16 %v4162
  %v4683 = vunpack.c.l.b16 %v4163
  %v4684 = vunpack.c.l.b16 %v4164
  %v4685 = vunpack.c.l.b16 %v4165
  %v4686 = vunpack.c.l.b16 %v4166
  %v4687 = vunpack.c.l.b16 %v4167
  %v4688 = vunpack.c.l.b16 %v4168
  %v4689 = vunpack.c.l.b16 %v4169
  %v4690 = vunpack.c.l.b16 %v4170
  %v4691 = vunpack.c.l.b16 %v4171
  %v4692 = vunpack.c.l.b16 %v4172
  %v4693 = vunpack.c.l.b16 %v4173
  %v4694 = vunpack.c.l.b16 %v4174
  %v4695 = vunpack.c.l.b16 %v4175
  %v4696 = vunpack.c.l.b16 %v4176
  %v4697 = vunpack.c.l.b16 %v4177
  %v4698 = vunpack.c.l.b16 %v4178
  %v4699 = vunpack.c.l.b16 %v4179
  %v4700 = vunpack.c.l.b16 %v4180
  %v4701 = vunpack.c.l.b16 %v4181
  %v4702 = vunpack.c.l.b16 %v4182
  %v4703 = vunpack.c.l.b16 %v4183
  %v4704 = vunpack.c.l.b16 %v4184
  %v4705 = vunpack.c.l.b16 %v4185
  %v4706 = vunpack.c.l.b16 %v4186
  %v4707 = vunpack.c.l.b16 %v4187
  %v4708 = vunpack.c.l.b16 %v4188
  %v4709 = vunpack.c.l.b16 %v4189
  %v4710 = vunpack.c.l.b16 %v4190
  %v4711 = vunpack.c.l.b16 %v4191
  %v4712 = vunpack.c.l.b16 %v4192
  %v4713 = vunpack.c.l.b16 %v4193
  %v4714 = vunpack.c.l.b16 %v4194
  %v4715 = vunpack.c.l.b16 %v4195
  %v4716 = vunpack.c.l.b16 %v4196
  %v4717 = vunpack.c.l.b16 %v4197
  %v4718 = vunpack.c.l.b16 %v4198
  %v4719 = vunpack.c.l.b16 %v4199
  %v4720 = vunpack.c.l.b16 %v4200
  %v4721 = vunpack.c.l.b16 %v4201
  %v4722 = vunpack.c.l.b16 %v4202
  %v4723 = vunpack.c.l.b16 %v4203
  %v4724 = vunpack.c.l.b16 %v4204
  %v4725 = vunpack.c.l.b16 %v4205
  %v4726 = vunpack.c.l.b16 %v4206
  %v4727 = vunpack.c.l.b16 %v4207
  %v4728 = vunpack.c.l.b16 %v4208
  %v4729 = vunpack.c.l.b16 %v4209
  %v4730 = vunpack.c.l.b16 %v4210
  %v4731 = vunpack.c.l.b16 %v4211
  %v4732 = vunpack.c.l.b16 %v4212
  %v4733 = vunpack.c.l.b16 %v4213
  %v4734 = vunpack.c.l.b16 %v4214
  %v4735 = vunpack.c.l.b16 %v4215
  %v4736 = vunpack.c.l.b16 %v4216
  %v4737 = vunpack.c.l.b16 %v4217
  %v4738 = vunpack.c.l.b16 %v4218
  %v4739 = vunpack.c.l.b16 %v4219
  %v4740 = vunpack.c.l.b16 %v4220
  %v4741 = vunpack.c.l.b16 %v4221
  %v4742 = vunpack.c.l.b16 %v4222
  %v4743 = vunpack.c.l.b16 %v4223
  %v4744 = vunpack.c.l.b16 %v4224
  %v4745 = vunpack.c.l.b16 %v4225
  %v4746 = vunpack.c.l.b16 %v4226
  %v4747 = vunpack.c.l.b16 %v4227
  %v4748 = vunpack.c.l.b16 %v4228
  %v4749 = vunpack.c.l.b16 %v4229
  %v4750 = vunpack.c.l.b16 %v4230
  %v4751 = vunpack.c.l.b16 %v4231
  %v4752 = vunpack.c.l.b16 %v4232
  %v4753 = vunpack.c.l.b16 %v4233
  %v4754 = vunpack.c.l.b16 %v4234
  %v4755 = vunpack.c.l.b16 %v4235
  %v4756 = vunpack.c.l.b16 %v4236
  %v4757 = vunpack.c.l.b16 %v4237
  %v4758 = vunpack.c.l.b16 %v4238
  %v4759 = vunpack.c.l.b16 %v4239
  %v4760 = vunpack.c.l.b16 %v4240
  %v4761 = vunpack.c.l.b16 %v4241
  %v4762 = vunpack.c.l.b16 %v4242
  %v4763 = vunpack.c.l.b16 %v4243
  %v4764 = vunpack.c.l.b16 %v4244
  %v4765 = vunpack.c.l.b16 %v4245
  %v4766 = vunpack.c.l.b16 %v4246
  %v4767 = vunpack.c.l.b16 %v4247
  %v4768 = vunpack.c.l.b16 %v4248
  %v4769 = vunpack.c.l.b16 %v4249
  %v4770 = vunpack.c.l.b16 %v4250
  %v4771 = vunpack.c.l.b16 %v4251
  %v4772 = vunpack.c.l.b16 %v4252
  %v4773 = vunpack.c.l.b16 %v4253
  %v4774 = vunpack.c.l.b16 %v4254
  %v4775 = vunpack.c.l.b16 %v4255
  %v4776 = vunpack.c.l.b16 %v4256
  %v4777 = vunpack.c.l.b16 %v4257
  %v4778 = vunpack.c.l.b16 %v4258
  %v4779 = vunpack.c.l.b16 %v4259
  %v4780 = vunpack.c.l.b16 %v4260
  %v4781 = vunpack.c.l.b16 %v4261
  %v4782 = vunpack.c.l.b16 %v4262
  %v4783 = vunpack.c.l.b16 %v4263
  %v4784 = vunpack.c.l.b16 %v4264
  %v4785 = vunpack.c.l.b16 %v4265
  %v4786 = vunpack.c.l.b16 %v4266
  %v4787 = vunpack.c.l.b16 %v4267
  %v4788 = vunpack.c.l.b16 %v4268
  %v4789 = vunpack.c.l.b16 %v4269
  %v4790 = vunpack.c.l.b16 %v4270
  %v4791 = vunpack.c.l.b16 %v4271
  %v4792 = vunpack.c.l.b16 %v4272
  %v4793 = vunpack.c.l.b16 %v4273
  %v4794 = vunpack.c.l.b16 %v4274
  %v4795 = vunpack.c.l.b16 %v4275
  %v4796 = vunpack.c.l.b16 %v4276
  %v4797 = vunpack.c.l.b16 %v4277
  %v4798 = vunpack.c.l.b16 %v4278
  %v4799 = vunpack.c.l.b16 %v4279
  %v4800 = vunpack.c.l.b16 %v4280
  %v4801 = vunpack.c.l.b16 %v4281
  %v4802 = vunpack.c.l.b16 %v4282
  %v4803 = vunpack.c.l.b16 %v4283
  %v4804 = vunpack.c.l.b16 %v4284
  %v4805 = vunpack.c.l.b16 %v4285
  %v4806 = vunpack.c.l.b16 %v4286
  %v4807 = vunpack.c.l.b16 %v4287
  %v4808 = vunpack.c.l.b16 %v4288
  %v4809 = vunpack.c.l.b16 %v4289
  %v4810 = vunpack.c.l.b16 %v4290
  %v4811 = vunpack.c.l.b16 %v4291
  %v4812 = vunpack.c.l.b16 %v4292
  %v4813 = vunpack.c.l.b16 %v4293
  %v4814 = vunpack.c.l.b16 %v4294
  %v4815 = vunpack.c.l.b16 %v4295
  %v4816 = vunpack.c.l.b16 %v4296
  %v4817 = vunpack.c.l.b16 %v4297
  %v4818 = vunpack.c.l.b16 %v4298
  %v4819 = vunpack.c.l.b16 %v4299
  %v4820 = vunpack.c.l.b16 %v4300
  %v4821 = vunpack.c.l.b16 %v4301
  %v4822 = vunpack.c.l.b16 %v4302
  %v4823 = vunpack.c.l.b16 %v4303
  %v4824 = vunpack.c.l.b16 %v4304
  %v4825 = vunpack.c.l.b16 %v4305
  %v4826 = vunpack.c.l.b16 %v4306
  %v4827 = vunpack.c.l.b16 %v4307
  %v4828 = vunpack.c.l.b16 %v4308
  %v4829 = vunpack.c.l.b16 %v4309
  %v4830 = vunpack.c.l.b16 %v4310
  %v4831 = vunpack.c.l.b16 %v4311
  %v4832 = vunpack.c.l.b16 %v4312
  %v4833 = vunpack.c.l.b16 %v4313
  %v4834 = vunpack.c.l.b16 %v4314
  %v4835 = vunpack.c.l.b16 %v4315
  %v4836 = vunpack.c.l.b16 %v4316
  %v4837 = vunpack.c.l.b16 %v4317
  %v4838 = vunpack.c.l.b16 %v4318
  %v4839 = vunpack.c.l.b16 %v4319
  %v4840 = vunpack.c.l.b16 %v4320
  %v4841 = vunpack.c.l.b16 %v4321
  %v4842 = vunpack.c.l.b16 %v4322
  %v4843 = vunpack.c.l.b16 %v4323
  %v4844 = vunpack.c.l.b16 %v4324
  %v4845 = vunpack.c.l.b16 %v4325
  %v4846 = vunpack.c.l.b16 %v4326
  %v4847 = vunpack.c.l.b16 %v4327
  %v4848 = vunpack.c.l.b16 %v4328
  %v4849 = vunpack.c.l.b16 %v4329
  %v4850 = vunpack.c.l.b16 %v4330
  %v4851 = vunpack.c.l.b16 %v4331
  %v4852 = vunpack.c.l.b16 %v4332
  %v4853 = vunpack.c.l.b16 %v4333
  %v4854 = vunpack.c.l.b16 %v4334
  %v4855 = vunpack.c.l.b16 %v4335
  %v4856 = vunpack.c.l.b16 %v4336
  %v4857 = vunpack.c.l.b16 %v4337
  %v4858 = vunpack.c.l.b16 %v4338
  %v4859 = vunpack.c.l.b16 %v4339
  %v4860 = vunpack.c.l.b16 %v4340
  %v4861 = vunpack.c.l.b16 %v4341
  %v4862 = vunpack.c.l.b16 %v4342
  %v4863 = vunpack.c.l.b16 %v4343
  %v4864 = vunpack.c.l.b16 %v4344
  %v4865 = vunpack.c.l.b16 %v4345
  %v4866 = vunpack.c.l.b16 %v4346
  %v4867 = vunpack.c.l.b16 %v4347
  %v4868 = vunpack.c.l.b16 %v4348
  %v4869 = vunpack.c.l.b16 %v4349
  %v4870 = vunpack.c.l.b16 %v4350
  %v4871 = vunpack.c.l.b16 %v4351
  %v4872 = vunpack.c.l.b16 %v4352
  %v4873 = vunpack.c.l.b16 %v4353
  %v4874 = vunpack.c.l.b16 %v4354
  %v4875 = vunpack.c.l.b16 %v4355
  %v4876 = vunpack.c.l.b16 %v4356
  %v4877 = vunpack.c.l.b16 %v4357
  %v4878 = vunpack.c.l.b16 %v4358
  %v4879 = vunpack.c.l.b16 %v4359
  %v4880 = vunpack.c.l.b16 %v4360
  %v4881 = vunpack.c.l.b16 %v4361
  %v4882 = vpack.c.b16 %v4627, %v4626
  %v4883 = vpack.c.b16 %v4629, %v4628
  %v4884 = vpack.c.b16 %v4631, %v4630
  %v4885 = vpack.c.b16 %v4633, %v4632
  %v4886 = vpack.c.b16 %v4635, %v4634
  %v4887 = vpack.c.b16 %v4637, %v4636
  %v4888 = vpack.c.b16 %v4639, %v4638
  %v4889 = vpack.c.b16 %v4641, %v4640
  %v4890 = vpack.c.b16 %v4643, %v4642
  %v4891 = vpack.c.b16 %v4645, %v4644
  %v4892 = vpack.c.b16 %v4647, %v4646
  %v4893 = vpack.c.b16 %v4649, %v4648
  %v4894 = vpack.c.b16 %v4651, %v4650
  %v4895 = vpack.c.b16 %v4653, %v4652
  %v4896 = vpack.c.b16 %v4655, %v4654
  %v4897 = vpack.c.b16 %v4657, %v4656
  %v4898 = vpack.c.b16 %v4659, %v4658
  %v4899 = vpack.c.b16 %v4661, %v4660
  %v4900 = vpack.c.b16 %v4663, %v4662
  %v4901 = vpack.c.b16 %v4665, %v4664
  %v4902 = vpack.c.b16 %v4667, %v4666
  %v4903 = vpack.c.b16 %v4669, %v4668
  %v4904 = vpack.c.b16 %v4671, %v4670
  %v4905 = vpack.c.b16 %v4673, %v4672
  %v4906 = vpack.c.b16 %v4675, %v4674
  %v4907 = vpack.c.b16 %v4677, %v4676
  %v4908 = vpack.c.b16 %v4679, %v4678
  %v4909 = vpack.c.b16 %v4681, %v4680
  %v4910 = vpack.c.b16 %v4683, %v4682
  %v4911 = vpack.c.b16 %v4685, %v4684
  %v4912 = vpack.c.b16 %v4687, %v4686
  %v4913 = vpack.c.b16 %v4689, %v4688
  %v4914 = vpack.c.b16 %v4691, %v4690
  %v4915 = vpack.c.b16 %v4693, %v4692
  %v4916 = vpack.c.b16 %v4695, %v4694
  %v4917 = vpack.c.b16 %v4697, %v4696
  %v4918 = vpack.c.b16 %v4699, %v4698
  %v4919 = vpack.c.b16 %v4701, %v4700
  %v4920 = vpack.c.b16 %v4703, %v4702
  %v4921 = vpack.c.b16 %v4705, %v4704
  %v4922 = vpack.c.b16 %v4707, %v4706
  %v4923 = vpack.c.b16 %v4709, %v4708
  %v4924 = vpack.c.b16 %v4711, %v4710
  %v4925 = vpack.c.b16 %v4713, %v4712
  %v4926 = vpack.c.b16 %v4715, %v4714
  %v4927 = vpack.c.b16 %v4717, %v4716
  %v4928 = vpack.c.b16 %v4719, %v4718
  %v4929 = vpack.c.b16 %v4721, %v4720
  %v4930 = vpack.c.b16 %v4723, %v4722
  %v4931 = vpack.c.b16 %v4725, %v4724
  %v4932 = vpack.c.b16 %v4727, %v4726
  %v4933 = vpack.c.b16 %v4729, %v4728
  %v4934 = vpack.c.b16 %v4731, %v4730
  %v4935 = vpack.c.b16 %v4733, %v4732
  %v4936 = vpack.c.b16 %v4735, %v4734
  %v4937 = vpack.c.b16 %v4737, %v4736
  %v4938 = vpack.c.b16 %v4739, %v4738
  %v4939 = vpack.c.b16 %v4741, %v4740
  %v4940 = vpack.c.b16 %v4743, %v4742
  %v4941 = vpack.c.b16 %v4745, %v4744
  %v4942 = vpack.c.b16 %v4747, %v4746
  %v4943 = vpack.c.b16 %v4749, %v4748
  %v4944 = vpack.c.b16 %v4751, %v4750
  %v4945 = vpack.c.b16 %v4753, %v4752
  %v4946 = vpack.c.b16 %v4755, %v4754
  %v4947 = vpack.c.b16 %v4757, %v4756
  %v4948 = vpack.c.b16 %v4759, %v4758
  %v4949 = vpack.c.b16 %v4761, %v4760
  %v4950 = vpack.c.b16 %v4763, %v4762
  %v4951 = vpack.c.b16 %v4765, %v4764
  %v4952 = vpack.c.b16 %v4767, %v4766
  %v4953 = vpack.c.b16 %v4769, %v4768
  %v4954 = vpack.c.b16 %v4771, %v4770
  %v4955 = vpack.c.b16 %v4773, %v4772
  %v4956 = vpack.c.b16 %v4775, %v4774
  %v4957 = vpack.c.b16 %v4777, %v4776
  %v4958 = vpack.c.b16 %v4779, %v4778
  %v4959 = vpack.c.b16 %v4781, %v4780
  %v4960 = vpack.c.b16 %v4783, %v4782
  %v4961 = vpack.c.b16 %v4785, %v4784
  %v4962 = vpack.c.b16 %v4787, %v4786
  %v4963 = vpack.c.b16 %v4789, %v4788
  %v4964 = vpack.c.b16 %v4791, %v4790
  %v4965 = vpack.c.b16 %v4793, %v4792
  %v4966 = vpack.c.b16 %v4795, %v4794
  %v4967 = vpack.c.b16 %v4797, %v4796
  %v4968 = vpack.c.b16 %v4799, %v4798
  %v4969 = vpack.c.b16 %v4801, %v4800
  %v4970 = vpack.c.b16 %v4803, %v4802
  %v4971 = vpack.c.b16 %v4805, %v4804
  %v4972 = vpack.c.b16 %v4807, %v4806
  %v4973 = vpack.c.b16 %v4809, %v4808
  %v4974 = vpack.c.b16 %v4811, %v4810
  %v4975 = vpack.c.b16 %v4813, %v4812
  %v4976 = vpack.c.b16 %v4815, %v4814
  %v4977 = vpack.c.b16 %v4817, %v4816
  %v4978 = vpack.c.b16 %v4819, %v4818
  %v4979 = vpack.c.b16 %v4821, %v4820
  %v4980 = vpack.c.b16 %v4823, %v4822
  %v4981 = vpack.c.b16 %v4825, %v4824
  %v4982 = vpack.c.b16 %v4827, %v4826
  %v4983 = vpack.c.b16 %v4829, %v4828
  %v4984 = vpack.c.b16 %v4831, %v4830
  %v4985 = vpack.c.b16 %v4833, %v4832
  %v4986 = vpack.c.b16 %v4835, %v4834
  %v4987 = vpack.c.b16 %v4837, %v4836
  %v4988 = vpack.c.b16 %v4839, %v4838
  %v4989 = vpack.c.b16 %v4841, %v4840
  %v4990 = vpack.c.b16 %v4843, %v4842
  %v4991 = vpack.c.b16 %v4845, %v4844
  %v4992 = vpack.c.b16 %v4847, %v4846
  %v4993 = vpack.c.b16 %v4849, %v4848
  %v4994 = vpack.c.b16 %v4851, %v4850
  %v4995 = vpack.c.b16 %v4853, %v4852
  %v4996 = vpack.c.b16 %v4855, %v4854
  %v4997 = vpack.c.b16 %v4857, %v4856
  %v4998 = vpack.c.b16 %v4859, %v4858
  %v4999 = vpack.c.b16 %v4861, %v4860
  %v5000 = vpack.c.b16 %v4863, %v4862
  %v5001 = vpack.c.b16 %v4865, %v4864
  %v5002 = vpack.c.b16 %v4867, %v4866
  %v5003 = vpack.c.b16 %v4869, %v4868
  %v5004 = vpack.c.b16 %v4871, %v4870
  %v5005 = vpack.c.b16 %v4873, %v4872
  %v5006 = vpack.c.b16 %v4875, %v4874
  %v5007 = vpack.c.b16 %v4877, %v4876
  %v5008 = vpack.c.b16 %v4879, %v4878
  %v5009 = vpack.c.b16 %v4881, %v4880
  %5138 = vmatprep.subr.bf16.mxu0 0
  %5139 = vmatpush1.bf16.msra.mxu0 %v4882
  %5140 = vmatprep.subr.bf16.mxu0 0
  %5141 = vmatpush1.bf16.msra.mxu0 %v4883
  %5142 = vmatprep.subr.bf16.mxu0 0
  %5143 = vmatpush1.bf16.msra.mxu0 %v4884
  %5144 = vmatprep.subr.bf16.mxu0 0
  %5145 = vmatpush1.bf16.msra.mxu0 %v4885
  %5146 = vmatprep.subr.bf16.mxu0 0
  %5147 = vmatpush1.bf16.msra.mxu0 %v4886
  %5148 = vmatprep.subr.bf16.mxu0 0
  %5149 = vmatpush1.bf16.msra.mxu0 %v4887
  %5150 = vmatprep.subr.bf16.mxu0 0
  %5151 = vmatpush1.bf16.msra.mxu0 %v4888
  %5152 = vmatprep.subr.bf16.mxu0 0
  %5153 = vmatpush1.bf16.msra.mxu0 %v4889
  %5154 = vmatprep.subr.bf16.mxu0 0
  %5155 = vmatpush1.bf16.msra.mxu0 %v4890
  %5156 = vmatprep.subr.bf16.mxu0 0
  %5157 = vmatpush1.bf16.msra.mxu0 %v4891
  %5158 = vmatprep.subr.bf16.mxu0 0
  %5159 = vmatpush1.bf16.msra.mxu0 %v4892
  %5160 = vmatprep.subr.bf16.mxu0 0
  %5161 = vmatpush1.bf16.msra.mxu0 %v4893
  %5162 = vmatprep.subr.bf16.mxu0 0
  %5163 = vmatpush1.bf16.msra.mxu0 %v4894
  %5164 = vmatprep.subr.bf16.mxu0 0
  %5165 = vmatpush1.bf16.msra.mxu0 %v4895
  %5166 = vmatprep.subr.bf16.mxu0 0
  %5167 = vmatpush1.bf16.msra.mxu0 %v4896
  %5168 = vmatprep.subr.bf16.mxu0 0
  %5169 = vmatpush1.bf16.msra.mxu0 %v4897
  %5170 = vmatprep.mubr.bf16.mxu0 %v4090
  %5171 = vmatmul.mubr.bf16.gmra.mrb[0].mxu0 %v4089
  %v5172 = vpop.f32.mrb[0].mxu0
  %v5173 = vadd.f32 %v4368, %v5172
  %v5174 = vpop.f32.mrb[0].mxu0
  %v5175 = vpop.f32.mrb[0].mxu0
  %v5176 = vadd.f32 %v4368, %v5175
  %v5177 = vpop.f32.mrb[0].mxu0
  %5178 = vdwg.mxu0
  %5179 = vmatprep.subr.bf16.mxu0 0
  %5180 = vmatpush1.bf16.msra.mxu0 %v4898
  %5181 = vmatprep.subr.bf16.mxu0 0
  %5182 = vmatpush1.bf16.msra.mxu0 %v4899
  %5183 = vmatprep.subr.bf16.mxu0 0
  %5184 = vmatpush1.bf16.msra.mxu0 %v4900
  %5185 = vmatprep.subr.bf16.mxu0 0
  %5186 = vmatpush1.bf16.msra.mxu0 %v4901
  %5187 = vmatprep.subr.bf16.mxu0 0
  %5188 = vmatpush1.bf16.msra.mxu0 %v4902
  %5189 = vmatprep.subr.bf16.mxu0 0
  %5190 = vmatpush1.bf16.msra.mxu0 %v4903
  %5191 = vmatprep.subr.bf16.mxu0 0
  %5192 = vmatpush1.bf16.msra.mxu0 %v4904
  %5193 = vmatprep.subr.bf16.mxu0 0
  %5194 = vmatpush1.bf16.msra.mxu0 %v4905
  %5195 = vmatprep.subr.bf16.mxu0 0
  %5196 = vmatpush1.bf16.msra.mxu0 %v4906
  %5197 = vmatprep.subr.bf16.mxu0 0
  %5198 = vmatpush1.bf16.msra.mxu0 %v4907
  %5199 = vmatprep.subr.bf16.mxu0 0
  %5200 = vmatpush1.bf16.msra.mxu0 %v4908
  %5201 = vmatprep.subr.bf16.mxu0 0
  %5202 = vmatpush1.bf16.msra.mxu0 %v4909
  %5203 = vmatprep.subr.bf16.mxu0 0
  %5204 = vmatpush1.bf16.msra.mxu0 %v4910
  %5205 = vmatprep.subr.bf16.mxu0 0
  %5206 = vmatpush1.bf16.msra.mxu0 %v4911
  %5207 = vmatprep.subr.bf16.mxu0 0
  %5208 = vmatpush1.bf16.msra.mxu0 %v4912
  %5209 = vmatprep.subr.bf16.mxu0 0
  %5210 = vmatpush1.bf16.msra.mxu0 %v4913
  %5211 = vmatprep.mubr.bf16.mxu0 %v4092
  %5212 = vmatmul.mubr.bf16.gmra.mrb[0].mxu0 %v4091
  %v5213 = vpop.f32.mrb[0].mxu0
  %v5214 = vadd.f32 %v5173, %v5213
  %v5215 = vpop.f32.mrb[0].mxu0
  %v5216 = vpop.f32.mrb[0].mxu0
  %v5217 = vadd.f32 %v5176, %v5216
  %v5218 = vpop.f32.mrb[0].mxu0
  %5219 = vdwg.mxu0
  %5220 = vmatprep.subr.bf16.mxu0 0
  %5221 = vmatpush1.bf16.msra.mxu0 %v4914
  %5222 = vmatprep.subr.bf16.mxu0 0
  %5223 = vmatpush1.bf16.msra.mxu0 %v4915
  %5224 = vmatprep.subr.bf16.mxu0 0
  %5225 = vmatpush1.bf16.msra.mxu0 %v4916
  %5226 = vmatprep.subr.bf16.mxu0 0
  %5227 = vmatpush1.bf16.msra.mxu0 %v4917
  %5228 = vmatprep.subr.bf16.mxu0 0
  %5229 = vmatpush1.bf16.msra.mxu0 %v4918
  %5230 = vmatprep.subr.bf16.mxu0 0
  %5231 = vmatpush1.bf16.msra.mxu0 %v4919
  %5232 = vmatprep.subr.bf16.mxu0 0
  %5233 = vmatpush1.bf16.msra.mxu0 %v4920
  %5234 = vmatprep.subr.bf16.mxu0 0
  %5235 = vmatpush1.bf16.msra.mxu0 %v4921
  %5236 = vmatprep.subr.bf16.mxu0 0
  %5237 = vmatpush1.bf16.msra.mxu0 %v4922
  %5238 = vmatprep.subr.bf16.mxu0 0
  %5239 = vmatpush1.bf16.msra.mxu0 %v4923
  %5240 = vmatprep.subr.bf16.mxu0 0
  %5241 = vmatpush1.bf16.msra.mxu0 %v4924
  %5242 = vmatprep.subr.bf16.mxu0 0
  %5243 = vmatpush1.bf16.msra.mxu0 %v4925
  %5244 = vmatprep.subr.bf16.mxu0 0
  %5245 = vmatpush1.bf16.msra.mxu0 %v4926
  %5246 = vmatprep.subr.bf16.mxu0 0
  %5247 = vmatpush1.bf16.msra.mxu0 %v4927
  %5248 = vmatprep.subr.bf16.mxu0 0
  %5249 = vmatpush1.bf16.msra.mxu0 %v4928
  %5250 = vmatprep.subr.bf16.mxu0 0
  %5251 = vmatpush1.bf16.msra.mxu0 %v4929
  %5252 = vmatprep.mubr.bf16.mxu0 %v4094
  %5253 = vmatmul.mubr.bf16.gmra.mrb[0].mxu0 %v4093
  %v5254 = vpop.f32.mrb[0].mxu0
  %v5255 = vadd.f32 %v5214, %v5254
  %v5256 = vpop.f32.mrb[0].mxu0
  %v5257 = vpop.f32.mrb[0].mxu0
  %v5258 = vadd.f32 %v5217, %v5257
  %v5259 = vpop.f32.mrb[0].mxu0
  %5260 = vdwg.mxu0
  %5261 = vmatprep.subr.bf16.mxu0 0
  %5262 = vmatpush1.bf16.msra.mxu0 %v4930
  %5263 = vmatprep.subr.bf16.mxu0 0
  %5264 = vmatpush1.bf16.msra.mxu0 %v4931
  %5265 = vmatprep.subr.bf16.mxu0 0
  %5266 = vmatpush1.bf16.msra.mxu0 %v4932
  %5267 = vmatprep.subr.bf16.mxu0 0
  %5268 = vmatpush1.bf16.msra.mxu0 %v4933
  %5269 = vmatprep.subr.bf16.mxu0 0
  %5270 = vmatpush1.bf16.msra.mxu0 %v4934
  %5271 = vmatprep.subr.bf16.mxu0 0
  %5272 = vmatpush1.bf16.msra.mxu0 %v4935
  %5273 = vmatprep.subr.bf16.mxu0 0
  %5274 = vmatpush1.bf16.msra.mxu0 %v4936
  %5275 = vmatprep.subr.bf16.mxu0 0
  %5276 = vmatpush1.bf16.msra.mxu0 %v4937
  %5277 = vmatprep.subr.bf16.mxu0 0
  %5278 = vmatpush1.bf16.msra.mxu0 %v4938
  %5279 = vmatprep.subr.bf16.mxu0 0
  %5280 = vmatpush1.bf16.msra.mxu0 %v4939
  %5281 = vmatprep.subr.bf16.mxu0 0
  %5282 = vmatpush1.bf16.msra.mxu0 %v4940
  %5283 = vmatprep.subr.bf16.mxu0 0
  %5284 = vmatpush1.bf16.msra.mxu0 %v4941
  %5285 = vmatprep.subr.bf16.mxu0 0
  %5286 = vmatpush1.bf16.msra.mxu0 %v4942
  %5287 = vmatprep.subr.bf16.mxu0 0
  %5288 = vmatpush1.bf16.msra.mxu0 %v4943
  %5289 = vmatprep.subr.bf16.mxu0 0
  %5290 = vmatpush1.bf16.msra.mxu0 %v4944
  %5291 = vmatprep.subr.bf16.mxu0 0
  %5292 = vmatpush1.bf16.msra.mxu0 %v4945
  %5293 = vmatprep.mubr.bf16.mxu0 %v4096
  %5294 = vmatmul.mubr.bf16.gmra.mrb[0].mxu0 %v4095
  %v5295 = vpop.f32.mrb[0].mxu0
  %v5296 = vadd.f32 %v5255, %v5295
  %v5297 = vpop.f32.mrb[0].mxu0
  %v5298 = vpop.f32.mrb[0].mxu0
  %v5299 = vadd.f32 %v5258, %v5298
  %v5300 = vpop.f32.mrb[0].mxu0
  %5301 = vdwg.mxu0
  %5302 = vmatprep.subr.bf16.mxu0 0
  %5303 = vmatpush1.bf16.msra.mxu0 %v4946
  %5304 = vmatprep.subr.bf16.mxu0 0
  %5305 = vmatpush1.bf16.msra.mxu0 %v4947
  %5306 = vmatprep.subr.bf16.mxu0 0
  %5307 = vmatpush1.bf16.msra.mxu0 %v4948
  %5308 = vmatprep.subr.bf16.mxu0 0
  %5309 = vmatpush1.bf16.msra.mxu0 %v4949
  %5310 = vmatprep.subr.bf16.mxu0 0
  %5311 = vmatpush1.bf16.msra.mxu0 %v4950
  %5312 = vmatprep.subr.bf16.mxu0 0
  %5313 = vmatpush1.bf16.msra.mxu0 %v4951
  %5314 = vmatprep.subr.bf16.mxu0 0
  %5315 = vmatpush1.bf16.msra.mxu0 %v4952
  %5316 = vmatprep.subr.bf16.mxu0 0
  %5317 = vmatpush1.bf16.msra.mxu0 %v4953
  %5318 = vmatprep.subr.bf16.mxu0 0
  %5319 = vmatpush1.bf16.msra.mxu0 %v4954
  %5320 = vmatprep.subr.bf16.mxu0 0
  %5321 = vmatpush1.bf16.msra.mxu0 %v4955
  %5322 = vmatprep.subr.bf16.mxu0 0
  %5323 = vmatpush1.bf16.msra.mxu0 %v4956
  %5324 = vmatprep.subr.bf16.mxu0 0
  %5325 = vmatpush1.bf16.msra.mxu0 %v4957
  %5326 = vmatprep.subr.bf16.mxu0 0
  %5327 = vmatpush1.bf16.msra.mxu0 %v4958
  %5328 = vmatprep.subr.bf16.mxu0 0
  %5329 = vmatpush1.bf16.msra.mxu0 %v4959
  %5330 = vmatprep.subr.bf16.mxu0 0
  %5331 = vmatpush1.bf16.msra.mxu0 %v4960
  %5332 = vmatprep.subr.bf16.mxu0 0
  %5333 = vmatpush1.bf16.msra.mxu0 %v4961
  %5334 = vmatprep.mubr.bf16.mxu0 %v4098
  %5335 = vmatmul.mubr.bf16.gmra.mrb[0].mxu0 %v4097
  %v5336 = vpop.f32.mrb[0].mxu0
  %v5337 = vadd.f32 %v5296, %v5336
  %v5338 = vpop.f32.mrb[0].mxu0
  %v5339 = vpop.f32.mrb[0].mxu0
  %v5340 = vadd.f32 %v5299, %v5339
  %v5341 = vpop.f32.mrb[0].mxu0
  %5342 = vdwg.mxu0
  %5343 = vmatprep.subr.bf16.mxu0 0
  %5344 = vmatpush1.bf16.msra.mxu0 %v4962
  %5345 = vmatprep.subr.bf16.mxu0 0
  %5346 = vmatpush1.bf16.msra.mxu0 %v4963
  %5347 = vmatprep.subr.bf16.mxu0 0
  %5348 = vmatpush1.bf16.msra.mxu0 %v4964
  %5349 = vmatprep.subr.bf16.mxu0 0
  %5350 = vmatpush1.bf16.msra.mxu0 %v4965
  %5351 = vmatprep.subr.bf16.mxu0 0
  %5352 = vmatpush1.bf16.msra.mxu0 %v4966
  %5353 = vmatprep.subr.bf16.mxu0 0
  %5354 = vmatpush1.bf16.msra.mxu0 %v4967
  %5355 = vmatprep.subr.bf16.mxu0 0
  %5356 = vmatpush1.bf16.msra.mxu0 %v4968
  %5357 = vmatprep.subr.bf16.mxu0 0
  %5358 = vmatpush1.bf16.msra.mxu0 %v4969
  %5359 = vmatprep.subr.bf16.mxu0 0
  %5360 = vmatpush1.bf16.msra.mxu0 %v4970
  %5361 = vmatprep.subr.bf16.mxu0 0
  %5362 = vmatpush1.bf16.msra.mxu0 %v4971
  %5363 = vmatprep.subr.bf16.mxu0 0
  %5364 = vmatpush1.bf16.msra.mxu0 %v4972
  %5365 = vmatprep.subr.bf16.mxu0 0
  %5366 = vmatpush1.bf16.msra.mxu0 %v4973
  %5367 = vmatprep.subr.bf16.mxu0 0
  %5368 = vmatpush1.bf16.msra.mxu0 %v4974
  %5369 = vmatprep.subr.bf16.mxu0 0
  %5370 = vmatpush1.bf16.msra.mxu0 %v4975
  %5371 = vmatprep.subr.bf16.mxu0 0
  %5372 = vmatpush1.bf16.msra.mxu0 %v4976
  %5373 = vmatprep.subr.bf16.mxu0 0
  %5374 = vmatpush1.bf16.msra.mxu0 %v4977
  %5375 = vmatprep.mubr.bf16.mxu0 %v4100
  %5376 = vmatmul.mubr.bf16.gmra.mrb[0].mxu0 %v4099
  %v5377 = vpop.f32.mrb[0].mxu0
  %v5378 = vadd.f32 %v5337, %v5377
  %v5379 = vpop.f32.mrb[0].mxu0
  %v5380 = vpop.f32.mrb[0].mxu0
  %v5381 = vadd.f32 %v5340, %v5380
  %v5382 = vpop.f32.mrb[0].mxu0
  %5383 = vdwg.mxu0
  %5384 = vmatprep.subr.bf16.mxu0 0
  %5385 = vmatpush1.bf16.msra.mxu0 %v4978
  %5386 = vmatprep.subr.bf16.mxu0 0
  %5387 = vmatpush1.bf16.msra.mxu0 %v4979
  %5388 = vmatprep.subr.bf16.mxu0 0
  %5389 = vmatpush1.bf16.msra.mxu0 %v4980
  %5390 = vmatprep.subr.bf16.mxu0 0
  %5391 = vmatpush1.bf16.msra.mxu0 %v4981
  %5392 = vmatprep.subr.bf16.mxu0 0
  %5393 = vmatpush1.bf16.msra.mxu0 %v4982
  %5394 = vmatprep.subr.bf16.mxu0 0
  %5395 = vmatpush1.bf16.msra.mxu0 %v4983
  %5396 = vmatprep.subr.bf16.mxu0 0
  %5397 = vmatpush1.bf16.msra.mxu0 %v4984
  %5398 = vmatprep.subr.bf16.mxu0 0
  %5399 = vmatpush1.bf16.msra.mxu0 %v4985
  %5400 = vmatprep.subr.bf16.mxu0 0
  %5401 = vmatpush1.bf16.msra.mxu0 %v4986
  %5402 = vmatprep.subr.bf16.mxu0 0
  %5403 = vmatpush1.bf16.msra.mxu0 %v4987
  %5404 = vmatprep.subr.bf16.mxu0 0
  %5405 = vmatpush1.bf16.msra.mxu0 %v4988
  %5406 = vmatprep.subr.bf16.mxu0 0
  %5407 = vmatpush1.bf16.msra.mxu0 %v4989
  %5408 = vmatprep.subr.bf16.mxu0 0
  %5409 = vmatpush1.bf16.msra.mxu0 %v4990
  %5410 = vmatprep.subr.bf16.mxu0 0
  %5411 = vmatpush1.bf16.msra.mxu0 %v4991
  %5412 = vmatprep.subr.bf16.mxu0 0
  %5413 = vmatpush1.bf16.msra.mxu0 %v4992
  %5414 = vmatprep.subr.bf16.mxu0 0
  %5415 = vmatpush1.bf16.msra.mxu0 %v4993
  %5416 = vmatprep.mubr.bf16.mxu0 %v4102
  %5417 = vmatmul.mubr.bf16.gmra.mrb[0].mxu0 %v4101
  %v5418 = vpop.f32.mrb[0].mxu0
  %v5419 = vadd.f32 %v5378, %v5418
  %v5420 = vpop.f32.mrb[0].mxu0
  %v5421 = vpop.f32.mrb[0].mxu0
  %v5422 = vadd.f32 %v5381, %v5421
  %v5423 = vpop.f32.mrb[0].mxu0
  %5424 = vdwg.mxu0
  %5425 = vmatprep.subr.bf16.mxu0 0
  %5426 = vmatpush1.bf16.msra.mxu0 %v4994
  %5427 = vmatprep.subr.bf16.mxu0 0
  %5428 = vmatpush1.bf16.msra.mxu0 %v4995
  %5429 = vmatprep.subr.bf16.mxu0 0
  %5430 = vmatpush1.bf16.msra.mxu0 %v4996
  %5431 = vmatprep.subr.bf16.mxu0 0
  %5432 = vmatpush1.bf16.msra.mxu0 %v4997
  %5433 = vmatprep.subr.bf16.mxu0 0
  %5434 = vmatpush1.bf16.msra.mxu0 %v4998
  %5435 = vmatprep.subr.bf16.mxu0 0
  %5436 = vmatpush1.bf16.msra.mxu0 %v4999
  %5437 = vmatprep.subr.bf16.mxu0 0
  %5438 = vmatpush1.bf16.msra.mxu0 %v5000
  %5439 = vmatprep.subr.bf16.mxu0 0
  %5440 = vmatpush1.bf16.msra.mxu0 %v5001
  %5441 = vmatprep.subr.bf16.mxu0 0
  %5442 = vmatpush1.bf16.msra.mxu0 %v5002
  %5443 = vmatprep.subr.bf16.mxu0 0
  %5444 = vmatpush1.bf16.msra.mxu0 %v5003
  %5445 = vmatprep.subr.bf16.mxu0 0
  %5446 = vmatpush1.bf16.msra.mxu0 %v5004
  %5447 = vmatprep.subr.bf16.mxu0 0
  %5448 = vmatpush1.bf16.msra.mxu0 %v5005
  %5449 = vmatprep.subr.bf16.mxu0 0
  %5450 = vmatpush1.bf16.msra.mxu0 %v5006
  %5451 = vmatprep.subr.bf16.mxu0 0
  %5452 = vmatpush1.bf16.msra.mxu0 %v5007
  %5453 = vmatprep.subr.bf16.mxu0 0
  %5454 = vmatpush1.bf16.msra.mxu0 %v5008
  %5455 = vmatprep.subr.bf16.mxu0 0
  %5456 = vmatpush1.bf16.msra.mxu0 %v5009
  %5457 = vmatprep.mubr.bf16.mxu0 %v4104
  %5458 = vmatmul.mubr.bf16.gmra.mrb[0].mxu0 %v4103
  %v5459 = vpop.f32.mrb[0].mxu0
  %v5460 = vadd.f32 %v5419, %v5459
  %v5461 = vpop.f32.mrb[0].mxu0
  %v5462 = vpop.f32.mrb[0].mxu0
  %v5463 = vadd.f32 %v5422, %v5462
  %v5464 = vpop.f32.mrb[0].mxu0
  %5465 = vdwg.mxu0
  %v5466 = vadd.f32 %v3429, %v5460
  %v5467 = vadd.f32 %v3430, %v5463
  %s5468 = scalar_lea.vmem %s13, 2
  %v5469 = vld [vmem:[%s5468] sm:$0x1]
  %s5470 = scalar_lea.vmem %s13, 3
  %v5471 = vld [vmem:[%s5470] sm:$0x1]
  %v5472 = vsel %vm187, %v5466, 0.0
  %5473 = vadd.xlane.f32.xlu0 %v5472
  %v5474 = vpop.xlane.xlu0 %5473
  %v5475 = vsel %vm187, %v5467, 0.0
  %5476 = vadd.xlane.f32.xlu0 %v5475
  %v5477 = vpop.xlane.xlu0 %5476
  %v5478 = vmul.f32 %v5474, %v720
  %v5479 = vmul.f32 %v5477, %v720
  %v5480 = vsub.f32 %v5466, %v5478
  %v5481 = vsub.f32 %v5467, %v5479
  %v5482 = vmul.f32 %v5480, %v5480
  %v5483 = vmul.f32 %v5481, %v5481
  %v5484 = vsel %vm187, %v5482, 0.0
  %5485 = vadd.xlane.f32.xlu0 %v5484
  %v5486 = vpop.xlane.xlu0 %5485
  %v5487 = vsel %vm187, %v5483, 0.0
  %5488 = vadd.xlane.f32.xlu0 %v5487
  %v5489 = vpop.xlane.xlu0 %5488
  %v5490 = vmul.f32 %v5486, %v720
  %v5491 = vmul.f32 %v5489, %v720
  %v5492 = vadd.f32 %v5490, 1e-05
  %v5493 = vadd.f32 %v5491, 1e-05
  %v5494 = vrsqrt.pop %v5492
  %v5495 = vrsqrt.pop %v5493
  %v5496 = vmul.f32 %v5480, %v5494
  %v5497 = vmul.f32 %v5481, %v5495
  %v5499 = vlaneseq
  %v5500 = vshrl.u32 %v5499, 7
  %v5501 = vsub.s32 0, %v5500
  %v5502 = vrot.slane %v5469, %v5501
  %v5504 = vmul.f32 %v5496, %v5502
  %v5505 = vmul.f32 %v5497, %v5502
  %v5507 = vlaneseq
  %v5508 = vshrl.u32 %v5507, 7
  %v5509 = vsub.s32 0, %v5508
  %v5510 = vrot.slane %v5471, %v5509
  %v5512 = vadd.f32 %v5504, %v5510
  %v5513 = vadd.f32 %v5505, %v5510
  %v5514 = vpack.c.bf16 %v5513, %v5512
  %v5515 = vld [vmem:[%s14] sm:$0xf]
  %v5516 = vld [vmem:[%s14 + $0x4] sm:$0xf]
  %v5517 = vld [vmem:[%s14 + $0x8] sm:$0xf]
  %v5518 = vld [vmem:[%s14 + $0xc] sm:$0xf]
  %v5519 = vld [vmem:[%s15] sm:$0x1]
  %v5521 = vlaneseq
  %v5522 = vshrl.u32 %v5521, 7
  %v5523 = vsub.s32 0, %v5522
  %v5524 = vrot.slane %v5519, %v5523
  %v5530 = vunpack.c.l.b16 %v5515
  %v5531 = vunpack.c.l.b16 %v5516
  %v5532 = vunpack.c.l.b16 %v5517
  %v5533 = vunpack.c.l.b16 %v5518
  %v5534 = vpack.c.b16 %v5531, %v5530
  %v5535 = vpack.c.b16 %v5533, %v5532
  %v5539 = vsel %vm187, %v5514, 0
  %5541 = vmatprep.subr.bf16.mxu0 0
  %5542 = vmatpush1.bf16.msra.mxu0 %v5534
  %5543 = vmatprep.subr.bf16.mxu0 0
  %5544 = vmatpush1.bf16.msra.mxu0 %v5535
  %5545 = vmatprep.subr.bf16.mxu0 0
  %5546 = vmatpush1.bf16.msra.mxu0 0
  %5547 = vmatprep.subr.bf16.mxu0 0
  %5548 = vmatpush1.bf16.msra.mxu0 0
  %5549 = vmatprep.subr.bf16.mxu0 0
  %5550 = vmatpush1.bf16.msra.mxu0 0
  %5551 = vmatprep.subr.bf16.mxu0 0
  %5552 = vmatpush1.bf16.msra.mxu0 0
  %5553 = vmatprep.subr.bf16.mxu0 0
  %5554 = vmatpush1.bf16.msra.mxu0 0
  %5555 = vmatprep.subr.bf16.mxu0 0
  %5556 = vmatpush1.bf16.msra.mxu0 0
  %5557 = vmatprep.subr.bf16.mxu0 0
  %5558 = vmatpush1.bf16.msra.mxu0 0
  %5559 = vmatprep.subr.bf16.mxu0 0
  %5560 = vmatpush1.bf16.msra.mxu0 0
  %5561 = vmatprep.subr.bf16.mxu0 0
  %5562 = vmatpush1.bf16.msra.mxu0 0
  %5563 = vmatprep.subr.bf16.mxu0 0
  %5564 = vmatpush1.bf16.msra.mxu0 0
  %5565 = vmatprep.subr.bf16.mxu0 0
  %5566 = vmatpush1.bf16.msra.mxu0 0
  %5567 = vmatprep.subr.bf16.mxu0 0
  %5568 = vmatpush1.bf16.msra.mxu0 0
  %5569 = vmatprep.subr.bf16.mxu0 0
  %5570 = vmatpush1.bf16.msra.mxu0 0
  %5571 = vmatprep.subr.bf16.mxu0 0
  %5572 = vmatpush1.bf16.msra.mxu0 0
  %5573 = vmatprep.mubr.bf16.mxu0 0
  %5574 = vmatmul.mubr.bf16.gmra.mrb[0].mxu0 %v5539
  %v5575 = vpop.f32.mrb[0].mxu0
  %v5576 = vadd.f32 %v5524, %v5575
  %v5577 = vpop.f32.mrb[0].mxu0
  %v5578 = vpop.f32.mrb[0].mxu0
  %v5579 = vadd.f32 %v5524, %v5578
  %v5580 = vpop.f32.mrb[0].mxu0
  %5581 = vdwg.mxu0
  %5582 = vst [vmem:[%s16] sm:$0xff] %v5576
  %5583 = vst [vmem:[%s16 + $0x8] sm:$0xff] %v5579
  // Predicated region
  $region66: #{ptum_forward.1} parent=0 // pred_check
    _
  $region67: #{ptum_forward.1} parent=0 // pred_check_branch
    %5585 = sbr.rel (0) target = $region69
  $region68: #{ptum_forward.1} parent=0 // pred_region
    _
  $region69: #{ptum_forward.1} parent=0 // pred_fallthru
    _
  // Predicated region
  $region70: #{ptum_forward.1} parent=0 // pred_check
    _
  $region71: #{ptum_forward.1} parent=0 // pred_check_branch
    %5587 = sbr.rel (0) target = $region73
  $region72: #{ptum_forward.1} parent=0 // pred_region
    _
  $region73: #{ptum_forward.1} parent=0 // pred_fallthru
    _

</llo_original>
